<compile_context>
chip_gen: v7x
topology: tpu7x:2x2x1
jax: 0.10.0
libtpu: 0.0.40
codegen_flags: <defaults>
</compile_context>

<pallas_src>
import functools
import math

import jax
import jax.numpy as jnp
from jax.experimental import pallas as pl
from jax.experimental.pallas import tpu as pltpu

_NEG_INF = -1e30  # finite "masked" value -> no -inf - -inf NaNs in online softmax


def _mha_kernel(xq_ref, xkv_ref, wq_ref, wkv_ref, bq_ref, bkv_ref, wp_ref, bp_ref,
                o_ref, q_sc, m_sc, l_sc, acc_sc,
                *, num_heads, head_size, block_q):
    kv = pl.program_id(1)
    n_kv = pl.num_programs(1)

    T = q_sc.shape[0]               # full query length (resident per batch element)
    E = num_heads * head_size
    tk = xkv_ref.shape[1]           # KV block length
    n_qb = T // block_q
    scale = 1.0 / math.sqrt(head_size)   # torch SDPA default scale
    kv_start = kv * tk

    @pl.when(kv == 0)
    def _init():
        # Q projection (all heads fused into one wide matmul), computed once per
        # batch element and kept in VMEM scratch across the KV loop.
        x_q = xq_ref[0]  # (T, E)
        q_sc[...] = (jnp.dot(x_q, wq_ref[...], preferred_element_type=jnp.float32)
                     + bq_ref[...])
        m_sc[...] = jnp.full(m_sc.shape, _NEG_INF, dtype=m_sc.dtype)
        l_sc[...] = jnp.zeros(l_sc.shape, dtype=l_sc.dtype)
        acc_sc[...] = jnp.zeros(acc_sc.shape, dtype=acc_sc.dtype)

    # Fused K/V projection for this KV block (one wide matmul, all heads):
    # columns [0, E) are K, columns [E, 2E) are V.
    x_kv = xkv_ref[0]  # (tk, E)
    kvp = (jnp.dot(x_kv, wkv_ref[...], preferred_element_type=jnp.float32)
           + bkv_ref[...])                                            # (tk, 2E)

    # Static loop over query sub-blocks; skip blocks entirely above the diagonal.
    for qi in range(n_qb):
        q_lo = qi * block_q

        @pl.when(kv_start < q_lo + block_q)
        def _process(q_lo=q_lo):
            row = q_lo + jax.lax.broadcasted_iota(jnp.int32, (block_q, tk), 0)
            col = kv_start + jax.lax.broadcasted_iota(jnp.int32, (block_q, tk), 1)
            causal = col <= row

            q_blk = q_sc[q_lo:q_lo + block_q, :]                      # (bq, E)

            # Static unrolled loop over heads (heads live in lane slices).
            for h in range(num_heads):
                lo = h * head_size
                hi = lo + head_size
                q_h = q_blk[:, lo:hi]                                 # (bq, hs)
                k_h = kvp[:, lo:hi]                                   # (tk, hs)
                v_h = kvp[:, E + lo:E + hi]                           # (tk, hs)

                s = jnp.dot(q_h, k_h.T,
                            preferred_element_type=jnp.float32) * scale  # (bq, tk)
                s = jnp.where(causal, s, _NEG_INF)

                m_prev = m_sc[h, q_lo:q_lo + block_q, :]              # (bq, 1)
                m_new = jnp.maximum(m_prev, jnp.max(s, axis=-1, keepdims=True))
                alpha = jnp.exp(m_prev - m_new)
                p = jnp.exp(s - m_new)                                # (bq, tk)

                # TODO(synk): attention dropout omitted (module in eval mode).
                l_sc[h, q_lo:q_lo + block_q, :] = (
                    alpha * l_sc[h, q_lo:q_lo + block_q, :]
                    + jnp.sum(p, axis=-1, keepdims=True))
                acc_sc[h, q_lo:q_lo + block_q, :] = (
                    alpha * acc_sc[h, q_lo:q_lo + block_q, :]
                    + jnp.dot(p, v_h, preferred_element_type=jnp.float32))
                m_sc[h, q_lo:q_lo + block_q, :] = m_new

    @pl.when(kv == n_kv - 1)
    def _finalize():
        # Deferred softmax normalization: scale the (T, hs) head outputs once
        # instead of dividing the (T, T) prob matrix; heads concatenated along
        # lanes, then the output projection is fused into the same grid step.
        att = jnp.concatenate(
            [acc_sc[h] * pl.reciprocal(l_sc[h], approx=False)
             for h in range(num_heads)],
            axis=-1)                                                  # (T, E)
        out = (jnp.dot(att, wp_ref[...], preferred_element_type=jnp.float32)
               + bp_ref[...])
        # TODO(synk): residual dropout omitted (module in eval mode).
        o_ref[0] = out.astype(o_ref.dtype)


def multihead_attention(x, wq, wk, wv, bq, bk, bv, wp, bp, *,
                        block_q=128, block_kv=128):
    """x: (B, T, E); wq/wk/wv: (H, E, hs); bq/bk/bv: (H, hs);
    wp: (E, E); bp: (1, E). Returns (B, T, E)."""
    B, T, E = x.shape
    H, _, hs = wq.shape
    assert H * hs == E

    # Fuse per-head projection params: head h occupies output columns
    # [h*hs, (h+1)*hs), matching torch.cat([head(x) for head in heads], dim=-1).
    wq_f = jnp.transpose(wq, (1, 0, 2)).reshape(E, E)
    wk_f = jnp.transpose(wk, (1, 0, 2)).reshape(E, E)
    wv_f = jnp.transpose(wv, (1, 0, 2)).reshape(E, E)
    wkv_f = jnp.concatenate([wk_f, wv_f], axis=1)             # (E, 2E): K | V
    bq_f = bq.reshape(1, E)
    bkv_f = jnp.concatenate([bk.reshape(1, E), bv.reshape(1, E)], axis=1)  # (1, 2E)

    block_kv = min(block_kv, T)
    block_q = min(block_q, T)
    assert T % block_kv == 0, "seq length must be a multiple of the KV block"
    assert T % block_q == 0, "seq length must be a multiple of the Q block"
    n_kv = T // block_kv

    kernel = functools.partial(_mha_kernel, num_heads=H, head_size=hs,
                               block_q=block_q)

    return pl.pallas_call(
        kernel,
        out_shape=jax.ShapeDtypeStruct((B, T, E), x.dtype),
        grid_spec=pltpu.PrefetchScalarGridSpec(
            num_scalar_prefetch=0,
            grid=(B, n_kv),
            in_specs=[
                pl.BlockSpec((1, T, E), lambda b, k: (b, 0, 0)),         # x (queries)
                pl.BlockSpec((1, block_kv, E), lambda b, k: (b, k, 0)),  # x (K/V rows)
                pl.BlockSpec((E, E), lambda b, k: (0, 0)),               # Wq (fused)
                pl.BlockSpec((E, 2 * E), lambda b, k: (0, 0)),           # Wkv (fused)
                pl.BlockSpec((1, E), lambda b, k: (0, 0)),               # bq
                pl.BlockSpec((1, 2 * E), lambda b, k: (0, 0)),           # bkv
                pl.BlockSpec((E, E), lambda b, k: (0, 0)),               # Wp
                pl.BlockSpec((1, E), lambda b, k: (0, 0)),               # bp
            ],
            out_specs=pl.BlockSpec((1, T, E), lambda b, k: (b, 0, 0)),
            scratch_shapes=[
                pltpu.VMEM((T, E), jnp.float32),      # Q (all heads, resident)
                pltpu.VMEM((H, T, 1), jnp.float32),   # online-softmax max
                pltpu.VMEM((H, T, 1), jnp.float32),   # online-softmax denom
                pltpu.VMEM((H, T, hs), jnp.float32),  # unnormalized output acc
            ],
        ),
        compiler_params=pltpu.CompilerParams(
            dimension_semantics=("parallel", "arbitrary"),
            vmem_limit_bytes=48 * 1024 * 1024,   # leaves headroom on v7x (64 MiB)
        ),
    )(x, x, wq_f, wkv_f, bq_f, bkv_f, wp, bp)


# ----------------------------------------------------------------------------
# Pure-JAX reference (for correctness check)
# ----------------------------------------------------------------------------
def reference(x, wq, wk, wv, bq, bk, bv, wp, bp):
    B, T, E = x.shape
    H, _, hs = wq.shape
    mask = jnp.tril(jnp.ones((T, T), dtype=bool))
    outs = []
    for h in range(H):
        q = x @ wq[h] + bq[h]
        k = x @ wk[h] + bk[h]
        v = x @ wv[h] + bv[h]
        s = (q @ jnp.swapaxes(k, -1, -2)) / math.sqrt(hs)
        s = jnp.where(mask, s, -jnp.inf)
        p = jax.nn.softmax(s, axis=-1)
        outs.append(p @ v)
    cat = jnp.concatenate(outs, axis=-1)
    return cat @ wp + bp


if __name__ == "__main__":
    # config: n_embed=32, n_head=4, head_size=8, seq=16 (two KV/Q blocks of 8)
    B, T, E, H = 2, 16, 32, 4
    hs = E // H

    key = jax.random.PRNGKey(0)
    ks = jax.random.split(key, 10)
    scale_in = 1.0 / math.sqrt(E)
    x = jax.random.normal(ks[0], (B, T, E), jnp.float32)
    wq = jax.random.uniform(ks[1], (H, E, hs), jnp.float32, -scale_in, scale_in)
    wk = jax.random.uniform(ks[2], (H, E, hs), jnp.float32, -scale_in, scale_in)
    wv = jax.random.uniform(ks[3], (H, E, hs), jnp.float32, -scale_in, scale_in)
    bq = jax.random.uniform(ks[4], (H, hs), jnp.float32, -scale_in, scale_in)
    bk = jax.random.uniform(ks[5], (H, hs), jnp.float32, -scale_in, scale_in)
    bv = jax.random.uniform(ks[6], (H, hs), jnp.float32, -scale_in, scale_in)
    wp = jax.random.uniform(ks[7], (E, E), jnp.float32, -scale_in, scale_in)
    bp = jax.random.uniform(ks[8], (1, E), jnp.float32, -scale_in, scale_in)

    out = multihead_attention(x, wq, wk, wv, bq, bk, bv, wp, bp,
                              block_q=8, block_kv=8)
    out = jax.block_until_ready(out)

    ref = reference(x, wq, wk, wv, bq, bk, bv, wp, bp)
    assert out.shape == (B, T, E)
    assert jnp.allclose(out, ref, atol=1e-4, rtol=1e-4), "mismatch vs reference"
    print("KERNEL_OK")
</pallas_src>

<mosaic_0001>
module attributes {stable_mosaic.version = 11 : i64} {
  func.func @_mha_kernel(%arg0: i32, %arg1: i32, %arg2: memref<1x16x32xf32, #tpu.memory_space<vmem>>, %arg3: memref<1x8x32xf32, #tpu.memory_space<vmem>>, %arg4: memref<32x32xf32, #tpu.memory_space<vmem>>, %arg5: memref<32x64xf32, #tpu.memory_space<vmem>>, %arg6: memref<1x32xf32, #tpu.memory_space<vmem>>, %arg7: memref<1x64xf32, #tpu.memory_space<vmem>>, %arg8: memref<32x32xf32, #tpu.memory_space<vmem>>, %arg9: memref<1x32xf32, #tpu.memory_space<vmem>>, %arg10: memref<1x16x32xf32, #tpu.memory_space<vmem>>, %arg11: memref<16x32xf32, #tpu.memory_space<vmem>>, %arg12: memref<4x16x1xf32, #tpu.memory_space<vmem>>, %arg13: memref<4x16x1xf32, #tpu.memory_space<vmem>>, %arg14: memref<4x16x8xf32, #tpu.memory_space<vmem>>) attributes {dimension_semantics = [#tpu.dimension_semantics<parallel>, #tpu.dimension_semantics<arbitrary>], iteration_bounds = array<i64: 2, 2>, scalar_prefetch = 0 : i64, scratch_operands = 4 : i64, tpu.core_type = #tpu.core_type<tc>, window_params = [{transform_indices = @transform_0, window_bounds = array<i64: 1, 16, 32>}, {transform_indices = @transform_1, window_bounds = array<i64: 1, 8, 32>}, {pipeline_mode = #tpu.pipeline_mode<synchronous>, transform_indices = @transform_2, window_bounds = array<i64: 32, 32>}, {pipeline_mode = #tpu.pipeline_mode<synchronous>, transform_indices = @transform_3, window_bounds = array<i64: 32, 64>}, {pipeline_mode = #tpu.pipeline_mode<synchronous>, transform_indices = @transform_4, window_bounds = array<i64: 1, 32>}, {pipeline_mode = #tpu.pipeline_mode<synchronous>, transform_indices = @transform_5, window_bounds = array<i64: 1, 64>}, {pipeline_mode = #tpu.pipeline_mode<synchronous>, transform_indices = @transform_6, window_bounds = array<i64: 32, 32>}, {pipeline_mode = #tpu.pipeline_mode<synchronous>, transform_indices = @transform_7, window_bounds = array<i64: 1, 32>}, {transform_indices = @transform_8, window_bounds = array<i64: 1, 16, 32>}]} {
    %c8_i32 = arith.constant 8 : i32
    %0 = arith.muli %arg1, %c8_i32 : i32
    %c0_i32 = arith.constant 0 : i32
    %1 = arith.cmpi eq, %arg1, %c0_i32 : i32
    %2 = arith.extui %1 : i1 to i32
    %c0_i32_0 = arith.constant 0 : i32
    %3 = arith.cmpi ne, %2, %c0_i32_0 : i32
    scf.if %3 {
      %c0_11 = arith.constant 0 : index
      %c0_12 = arith.constant 0 : index
      %c0_13 = arith.constant 0 : index
      %20 = vector.load %arg2[%c0_11, %c0_12, %c0_13] : memref<1x16x32xf32, #tpu.memory_space<vmem>>, vector<1x16x32xf32>
      %21 = vector.shape_cast %20 : vector<1x16x32xf32> to vector<16x32xf32>
      %c0_14 = arith.constant 0 : index
      %c0_15 = arith.constant 0 : index
      %22 = vector.load %arg4[%c0_14, %c0_15] : memref<32x32xf32, #tpu.memory_space<vmem>>, vector<32x32xf32>
      %cst_16 = arith.constant dense<0.000000e+00> : vector<16x32xf32>
      %23 = tpu.matmul %21, %22, %cst_16 {dimension_numbers = #tpu.dot_dimension_numbers<[1], [0], [0], [1], [0, 0, 1, 1], [], []>} : vector<16x32xf32>, vector<32x32xf32>, vector<16x32xf32> -> vector<16x32xf32>
      %c0_17 = arith.constant 0 : index
      %c0_18 = arith.constant 0 : index
      %24 = vector.load %arg6[%c0_17, %c0_18] : memref<1x32xf32, #tpu.memory_space<vmem>>, vector<1x32xf32>
      %25 = vector.broadcast %24 : vector<1x32xf32> to vector<16x32xf32>
      %26 = arith.addf %23, %25 : vector<16x32xf32>
      %c0_19 = arith.constant 0 : index
      %c0_20 = arith.constant 0 : index
      %27 = vector.load %arg11[%c0_19, %c0_20] : memref<16x32xf32, #tpu.memory_space<vmem>>, vector<16x32xf32>
      tpu.vector_store %arg11[%c0_19, %c0_20], %26 {strides = array<i32>} : memref<16x32xf32, #tpu.memory_space<vmem>>, vector<16x32xf32>,
      %cst_21 = arith.constant -1.000000e+30 : f32
      %28 = vector.broadcast %cst_21 : f32 to vector<4x16x1xf32>
      %c0_22 = arith.constant 0 : index
      %c0_23 = arith.constant 0 : index
      %c0_24 = arith.constant 0 : index
      %29 = vector.load %arg12[%c0_22, %c0_23, %c0_24] : memref<4x16x1xf32, #tpu.memory_space<vmem>>, vector<4x16x1xf32>
      tpu.vector_store %arg12[%c0_22, %c0_23, %c0_24], %28 {strides = array<i32>} : memref<4x16x1xf32, #tpu.memory_space<vmem>>, vector<4x16x1xf32>,
      %cst_25 = arith.constant 0.000000e+00 : f32
      %30 = vector.broadcast %cst_25 : f32 to vector<4x16x1xf32>
      %c0_26 = arith.constant 0 : index
      %c0_27 = arith.constant 0 : index
      %c0_28 = arith.constant 0 : index
      %31 = vector.load %arg13[%c0_26, %c0_27, %c0_28] : memref<4x16x1xf32, #tpu.memory_space<vmem>>, vector<4x16x1xf32>
      tpu.vector_store %arg13[%c0_26, %c0_27, %c0_28], %30 {strides = array<i32>} : memref<4x16x1xf32, #tpu.memory_space<vmem>>, vector<4x16x1xf32>,
      %cst_29 = arith.constant 0.000000e+00 : f32
      %32 = vector.broadcast %cst_29 : f32 to vector<4x16x8xf32>
      %c0_30 = arith.constant 0 : index
      %c0_31 = arith.constant 0 : index
      %c0_32 = arith.constant 0 : index
      %33 = vector.load %arg14[%c0_30, %c0_31, %c0_32] : memref<4x16x8xf32, #tpu.memory_space<vmem>>, vector<4x16x8xf32>
      tpu.vector_store %arg14[%c0_30, %c0_31, %c0_32], %32 {strides = array<i32>} : memref<4x16x8xf32, #tpu.memory_space<vmem>>, vector<4x16x8xf32>,
    } else {
    }
    %c0 = arith.constant 0 : index
    %c0_1 = arith.constant 0 : index
    %c0_2 = arith.constant 0 : index
    %4 = vector.load %arg3[%c0, %c0_1, %c0_2] : memref<1x8x32xf32, #tpu.memory_space<vmem>>, vector<1x8x32xf32>
    %5 = vector.shape_cast %4 : vector<1x8x32xf32> to vector<8x32xf32>
    %c0_3 = arith.constant 0 : index
    %c0_4 = arith.constant 0 : index
    %6 = vector.load %arg5[%c0_3, %c0_4] : memref<32x64xf32, #tpu.memory_space<vmem>>, vector<32x64xf32>
    %cst = arith.constant dense<0.000000e+00> : vector<8x64xf32>
    %7 = tpu.matmul %5, %6, %cst {dimension_numbers = #tpu.dot_dimension_numbers<[1], [0], [0], [1], [0, 0, 1, 1], [], []>} : vector<8x32xf32>, vector<32x64xf32>, vector<8x64xf32> -> vector<8x64xf32>
    %c0_5 = arith.constant 0 : index
    %c0_6 = arith.constant 0 : index
    %8 = vector.load %arg7[%c0_5, %c0_6] : memref<1x64xf32, #tpu.memory_space<vmem>>, vector<1x64xf32>
    %9 = vector.broadcast %8 : vector<1x64xf32> to vector<8x64xf32>
    %10 = arith.addf %7, %9 : vector<8x64xf32>
    %c8_i32_7 = arith.constant 8 : i32
    %11 = arith.cmpi slt, %0, %c8_i32_7 : i32
    %12 = arith.extui %11 : i1 to i32
    %c0_i32_8 = arith.constant 0 : i32
    %13 = arith.cmpi ne, %12, %c0_i32_8 : i32
    scf.if %13 {
      %20 = tpu.iota {dimensions = array<i32: 0>} : vector<8x8xi32>
      %c0_i32_11 = arith.constant 0 : i32
      %21 = vector.broadcast %c0_i32_11 : i32 to vector<8x8xi32>
      %22 = arith.addi %21, %20 : vector<8x8xi32>
      %23 = tpu.iota {dimensions = array<i32: 1>} : vector<8x8xi32>
      %24 = vector.broadcast %0 : i32 to vector<8x8xi32>
      %25 = arith.addi %24, %23 : vector<8x8xi32>
      %26 = arith.cmpi sle, %25, %22 : vector<8x8xi32>
      %c0_12 = arith.constant 0 : index
      %c0_13 = arith.constant 0 : index
      %27 = vector.load %arg11[%c0_12, %c0_13] : memref<16x32xf32, #tpu.memory_space<vmem>>, vector<8x32xf32>
      %28 = vector.extract_strided_slice %27 {offsets = [0, 0], sizes = [8, 8], strides = [1, 1]} : vector<8x32xf32> to vector<8x8xf32>
      %29 = vector.extract_strided_slice %10 {offsets = [0, 0], sizes = [8, 8], strides = [1, 1]} : vector<8x64xf32> to vector<8x8xf32>
      %30 = vector.extract_strided_slice %10 {offsets = [0, 32], sizes = [8, 8], strides = [1, 1]} : vector<8x64xf32> to vector<8x8xf32>
      %31 = tpu.transpose %29, [1, 0] : vector<8x8xf32> -> vector<8x8xf32>
      %cst_14 = arith.constant dense<0.000000e+00> : vector<8x8xf32>
      %32 = tpu.matmul %28, %31, %cst_14 {dimension_numbers = #tpu.dot_dimension_numbers<[1], [0], [0], [1], [0, 0, 1, 1], [], []>} : vector<8x8xf32>, vector<8x8xf32>, vector<8x8xf32> -> vector<8x8xf32>
      %cst_15 = arith.constant 0.353553385 : f32
      %33 = vector.broadcast %cst_15 : f32 to vector<8x8xf32>
      %34 = arith.mulf %32, %33 : vector<8x8xf32>
      %cst_16 = arith.constant -1.000000e+30 : f32
      %35 = vector.broadcast %cst_16 : f32 to vector<8x8xf32>
      %36 = arith.select %26, %34, %35 : vector<8x8xi1>, vector<8x8xf32>
      %c0_17 = arith.constant 0 : index
      %c0_18 = arith.constant 0 : index
      %c0_19 = arith.constant 0 : index
      %37 = vector.load %arg12[%c0_17, %c0_18, %c0_19] : memref<4x16x1xf32, #tpu.memory_space<vmem>>, vector<1x8x1xf32>
      %38 = vector.shape_cast %37 : vector<1x8x1xf32> to vector<8x1xf32>
      %cst_20 = arith.constant dense<0xFF800000> : vector<8xf32>
      %39 = vector.multi_reduction <maximumf>, %36, %cst_20 [1] : vector<8x8xf32> to vector<8xf32>
      %40 = vector.shape_cast %39 : vector<8xf32> to vector<8x1xf32>
      %41 = arith.maximumf %38, %40 : vector<8x1xf32>
      %42 = arith.subf %38, %41 : vector<8x1xf32>
      %43 = math.exp %42 : vector<8x1xf32>
      %44 = vector.broadcast %41 : vector<8x1xf32> to vector<8x8xf32>
      %45 = arith.subf %36, %44 : vector<8x8xf32>
      %46 = math.exp %45 : vector<8x8xf32>
      %c0_21 = arith.constant 0 : index
      %c0_22 = arith.constant 0 : index
      %c0_23 = arith.constant 0 : index
      %47 = vector.load %arg13[%c0_21, %c0_22, %c0_23] : memref<4x16x1xf32, #tpu.memory_space<vmem>>, vector<1x8x1xf32>
      %48 = vector.shape_cast %47 : vector<1x8x1xf32> to vector<8x1xf32>
      %49 = arith.mulf %43, %48 : vector<8x1xf32>
      %cst_24 = arith.constant dense<0.000000e+00> : vector<8xf32>
      %50 = vector.multi_reduction <add>, %46, %cst_24 [1] : vector<8x8xf32> to vector<8xf32>
      %51 = vector.shape_cast %50 : vector<8xf32> to vector<8x1xf32>
      %52 = arith.addf %49, %51 : vector<8x1xf32>
      %c0_25 = arith.constant 0 : index
      %c0_26 = arith.constant 0 : index
      %c0_27 = arith.constant 0 : index
      %53 = vector.load %arg13[%c0_25, %c0_26, %c0_27] : memref<4x16x1xf32, #tpu.memory_space<vmem>>, vector<1x8x1xf32>
      %54 = vector.shape_cast %53 : vector<1x8x1xf32> to vector<8x1xf32>
      %55 = vector.shape_cast %52 : vector<8x1xf32> to vector<1x8x1xf32>
      tpu.vector_store %arg13[%c0_25, %c0_26, %c0_27], %55 {strides = array<i32>} : memref<4x16x1xf32, #tpu.memory_space<vmem>>, vector<1x8x1xf32>,
      %c0_28 = arith.constant 0 : index
      %c0_29 = arith.constant 0 : index
      %c0_30 = arith.constant 0 : index
      %56 = vector.load %arg14[%c0_28, %c0_29, %c0_30] : memref<4x16x8xf32, #tpu.memory_space<vmem>>, vector<1x8x8xf32>
      %57 = vector.shape_cast %56 : vector<1x8x8xf32> to vector<8x8xf32>
      %58 = vector.broadcast %43 : vector<8x1xf32> to vector<8x8xf32>
      %59 = arith.mulf %58, %57 : vector<8x8xf32>
      %cst_31 = arith.constant dense<0.000000e+00> : vector<8x8xf32>
      %60 = tpu.matmul %46, %30, %cst_31 {dimension_numbers = #tpu.dot_dimension_numbers<[1], [0], [0], [1], [0, 0, 1, 1], [], []>} : vector<8x8xf32>, vector<8x8xf32>, vector<8x8xf32> -> vector<8x8xf32>
      %61 = arith.addf %59, %60 : vector<8x8xf32>
      %c0_32 = arith.constant 0 : index
      %c0_33 = arith.constant 0 : index
      %c0_34 = arith.constant 0 : index
      %62 = vector.load %arg14[%c0_32, %c0_33, %c0_34] : memref<4x16x8xf32, #tpu.memory_space<vmem>>, vector<1x8x8xf32>
      %63 = vector.shape_cast %62 : vector<1x8x8xf32> to vector<8x8xf32>
      %64 = vector.shape_cast %61 : vector<8x8xf32> to vector<1x8x8xf32>
      tpu.vector_store %arg14[%c0_32, %c0_33, %c0_34], %64 {strides = array<i32>} : memref<4x16x8xf32, #tpu.memory_space<vmem>>, vector<1x8x8xf32>,
      %c0_35 = arith.constant 0 : index
      %c0_36 = arith.constant 0 : index
      %c0_37 = arith.constant 0 : index
      %65 = vector.load %arg12[%c0_35, %c0_36, %c0_37] : memref<4x16x1xf32, #tpu.memory_space<vmem>>, vector<1x8x1xf32>
      %66 = vector.shape_cast %65 : vector<1x8x1xf32> to vector<8x1xf32>
      %67 = vector.shape_cast %41 : vector<8x1xf32> to vector<1x8x1xf32>
      tpu.vector_store %arg12[%c0_35, %c0_36, %c0_37], %67 {strides = array<i32>} : memref<4x16x1xf32, #tpu.memory_space<vmem>>, vector<1x8x1xf32>,
      %68 = vector.extract_strided_slice %27 {offsets = [0, 8], sizes = [8, 8], strides = [1, 1]} : vector<8x32xf32> to vector<8x8xf32>
      %69 = vector.extract_strided_slice %10 {offsets = [0, 8], sizes = [8, 8], strides = [1, 1]} : vector<8x64xf32> to vector<8x8xf32>
      %70 = vector.extract_strided_slice %10 {offsets = [0, 40], sizes = [8, 8], strides = [1, 1]} : vector<8x64xf32> to vector<8x8xf32>
      %71 = tpu.transpose %69, [1, 0] : vector<8x8xf32> -> vector<8x8xf32>
      %cst_38 = arith.constant dense<0.000000e+00> : vector<8x8xf32>
      %72 = tpu.matmul %68, %71, %cst_38 {dimension_numbers = #tpu.dot_dimension_numbers<[1], [0], [0], [1], [0, 0, 1, 1], [], []>} : vector<8x8xf32>, vector<8x8xf32>, vector<8x8xf32> -> vector<8x8xf32>
      %cst_39 = arith.constant 0.353553385 : f32
      %73 = vector.broadcast %cst_39 : f32 to vector<8x8xf32>
      %74 = arith.mulf %72, %73 : vector<8x8xf32>
      %cst_40 = arith.constant -1.000000e+30 : f32
      %75 = vector.broadcast %cst_40 : f32 to vector<8x8xf32>
      %76 = arith.select %26, %74, %75 : vector<8x8xi1>, vector<8x8xf32>
      %c1 = arith.constant 1 : index
      %c0_41 = arith.constant 0 : index
      %c0_42 = arith.constant 0 : index
      %77 = vector.load %arg12[%c1, %c0_41, %c0_42] : memref<4x16x1xf32, #tpu.memory_space<vmem>>, vector<1x8x1xf32>
      %78 = vector.shape_cast %77 : vector<1x8x1xf32> to vector<8x1xf32>
      %cst_43 = arith.constant dense<0xFF800000> : vector<8xf32>
      %79 = vector.multi_reduction <maximumf>, %76, %cst_43 [1] : vector<8x8xf32> to vector<8xf32>
      %80 = vector.shape_cast %79 : vector<8xf32> to vector<8x1xf32>
      %81 = arith.maximumf %78, %80 : vector<8x1xf32>
      %82 = arith.subf %78, %81 : vector<8x1xf32>
      %83 = math.exp %82 : vector<8x1xf32>
      %84 = vector.broadcast %81 : vector<8x1xf32> to vector<8x8xf32>
      %85 = arith.subf %76, %84 : vector<8x8xf32>
      %86 = math.exp %85 : vector<8x8xf32>
      %c1_44 = arith.constant 1 : index
      %c0_45 = arith.constant 0 : index
      %c0_46 = arith.constant 0 : index
      %87 = vector.load %arg13[%c1_44, %c0_45, %c0_46] : memref<4x16x1xf32, #tpu.memory_space<vmem>>, vector<1x8x1xf32>
      %88 = vector.shape_cast %87 : vector<1x8x1xf32> to vector<8x1xf32>
      %89 = arith.mulf %83, %88 : vector<8x1xf32>
      %cst_47 = arith.constant dense<0.000000e+00> : vector<8xf32>
      %90 = vector.multi_reduction <add>, %86, %cst_47 [1] : vector<8x8xf32> to vector<8xf32>
      %91 = vector.shape_cast %90 : vector<8xf32> to vector<8x1xf32>
      %92 = arith.addf %89, %91 : vector<8x1xf32>
      %c1_48 = arith.constant 1 : index
      %c0_49 = arith.constant 0 : index
      %c0_50 = arith.constant 0 : index
      %93 = vector.load %arg13[%c1_48, %c0_49, %c0_50] : memref<4x16x1xf32, #tpu.memory_space<vmem>>, vector<1x8x1xf32>
      %94 = vector.shape_cast %93 : vector<1x8x1xf32> to vector<8x1xf32>
      %95 = vector.shape_cast %92 : vector<8x1xf32> to vector<1x8x1xf32>
      tpu.vector_store %arg13[%c1_48, %c0_49, %c0_50], %95 {strides = array<i32>} : memref<4x16x1xf32, #tpu.memory_space<vmem>>, vector<1x8x1xf32>,
      %c1_51 = arith.constant 1 : index
      %c0_52 = arith.constant 0 : index
      %c0_53 = arith.constant 0 : index
      %96 = vector.load %arg14[%c1_51, %c0_52, %c0_53] : memref<4x16x8xf32, #tpu.memory_space<vmem>>, vector<1x8x8xf32>
      %97 = vector.shape_cast %96 : vector<1x8x8xf32> to vector<8x8xf32>
      %98 = vector.broadcast %83 : vector<8x1xf32> to vector<8x8xf32>
      %99 = arith.mulf %98, %97 : vector<8x8xf32>
      %cst_54 = arith.constant dense<0.000000e+00> : vector<8x8xf32>
      %100 = tpu.matmul %86, %70, %cst_54 {dimension_numbers = #tpu.dot_dimension_numbers<[1], [0], [0], [1], [0, 0, 1, 1], [], []>} : vector<8x8xf32>, vector<8x8xf32>, vector<8x8xf32> -> vector<8x8xf32>
      %101 = arith.addf %99, %100 : vector<8x8xf32>
      %c1_55 = arith.constant 1 : index
      %c0_56 = arith.constant 0 : index
      %c0_57 = arith.constant 0 : index
      %102 = vector.load %arg14[%c1_55, %c0_56, %c0_57] : memref<4x16x8xf32, #tpu.memory_space<vmem>>, vector<1x8x8xf32>
      %103 = vector.shape_cast %102 : vector<1x8x8xf32> to vector<8x8xf32>
      %104 = vector.shape_cast %101 : vector<8x8xf32> to vector<1x8x8xf32>
      tpu.vector_store %arg14[%c1_55, %c0_56, %c0_57], %104 {strides = array<i32>} : memref<4x16x8xf32, #tpu.memory_space<vmem>>, vector<1x8x8xf32>,
      %c1_58 = arith.constant 1 : index
      %c0_59 = arith.constant 0 : index
      %c0_60 = arith.constant 0 : index
      %105 = vector.load %arg12[%c1_58, %c0_59, %c0_60] : memref<4x16x1xf32, #tpu.memory_space<vmem>>, vector<1x8x1xf32>
      %106 = vector.shape_cast %105 : vector<1x8x1xf32> to vector<8x1xf32>
      %107 = vector.shape_cast %81 : vector<8x1xf32> to vector<1x8x1xf32>
      tpu.vector_store %arg12[%c1_58, %c0_59, %c0_60], %107 {strides = array<i32>} : memref<4x16x1xf32, #tpu.memory_space<vmem>>, vector<1x8x1xf32>,
      %108 = vector.extract_strided_slice %27 {offsets = [0, 16], sizes = [8, 8], strides = [1, 1]} : vector<8x32xf32> to vector<8x8xf32>
      %109 = vector.extract_strided_slice %10 {offsets = [0, 16], sizes = [8, 8], strides = [1, 1]} : vector<8x64xf32> to vector<8x8xf32>
      %110 = vector.extract_strided_slice %10 {offsets = [0, 48], sizes = [8, 8], strides = [1, 1]} : vector<8x64xf32> to vector<8x8xf32>
      %111 = tpu.transpose %109, [1, 0] : vector<8x8xf32> -> vector<8x8xf32>
      %cst_61 = arith.constant dense<0.000000e+00> : vector<8x8xf32>
      %112 = tpu.matmul %108, %111, %cst_61 {dimension_numbers = #tpu.dot_dimension_numbers<[1], [0], [0], [1], [0, 0, 1, 1], [], []>} : vector<8x8xf32>, vector<8x8xf32>, vector<8x8xf32> -> vector<8x8xf32>
      %cst_62 = arith.constant 0.353553385 : f32
      %113 = vector.broadcast %cst_62 : f32 to vector<8x8xf32>
      %114 = arith.mulf %112, %113 : vector<8x8xf32>
      %cst_63 = arith.constant -1.000000e+30 : f32
      %115 = vector.broadcast %cst_63 : f32 to vector<8x8xf32>
      %116 = arith.select %26, %114, %115 : vector<8x8xi1>, vector<8x8xf32>
      %c2 = arith.constant 2 : index
      %c0_64 = arith.constant 0 : index
      %c0_65 = arith.constant 0 : index
      %117 = vector.load %arg12[%c2, %c0_64, %c0_65] : memref<4x16x1xf32, #tpu.memory_space<vmem>>, vector<1x8x1xf32>
      %118 = vector.shape_cast %117 : vector<1x8x1xf32> to vector<8x1xf32>
      %cst_66 = arith.constant dense<0xFF800000> : vector<8xf32>
      %119 = vector.multi_reduction <maximumf>, %116, %cst_66 [1] : vector<8x8xf32> to vector<8xf32>
      %120 = vector.shape_cast %119 : vector<8xf32> to vector<8x1xf32>
      %121 = arith.maximumf %118, %120 : vector<8x1xf32>
      %122 = arith.subf %118, %121 : vector<8x1xf32>
      %123 = math.exp %122 : vector<8x1xf32>
      %124 = vector.broadcast %121 : vector<8x1xf32> to vector<8x8xf32>
      %125 = arith.subf %116, %124 : vector<8x8xf32>
      %126 = math.exp %125 : vector<8x8xf32>
      %c2_67 = arith.constant 2 : index
      %c0_68 = arith.constant 0 : index
      %c0_69 = arith.constant 0 : index
      %127 = vector.load %arg13[%c2_67, %c0_68, %c0_69] : memref<4x16x1xf32, #tpu.memory_space<vmem>>, vector<1x8x1xf32>
      %128 = vector.shape_cast %127 : vector<1x8x1xf32> to vector<8x1xf32>
      %129 = arith.mulf %123, %128 : vector<8x1xf32>
      %cst_70 = arith.constant dense<0.000000e+00> : vector<8xf32>
      %130 = vector.multi_reduction <add>, %126, %cst_70 [1] : vector<8x8xf32> to vector<8xf32>
      %131 = vector.shape_cast %130 : vector<8xf32> to vector<8x1xf32>
      %132 = arith.addf %129, %131 : vector<8x1xf32>
      %c2_71 = arith.constant 2 : index
      %c0_72 = arith.constant 0 : index
      %c0_73 = arith.constant 0 : index
      %133 = vector.load %arg13[%c2_71, %c0_72, %c0_73] : memref<4x16x1xf32, #tpu.memory_space<vmem>>, vector<1x8x1xf32>
      %134 = vector.shape_cast %133 : vector<1x8x1xf32> to vector<8x1xf32>
      %135 = vector.shape_cast %132 : vector<8x1xf32> to vector<1x8x1xf32>
      tpu.vector_store %arg13[%c2_71, %c0_72, %c0_73], %135 {strides = array<i32>} : memref<4x16x1xf32, #tpu.memory_space<vmem>>, vector<1x8x1xf32>,
      %c2_74 = arith.constant 2 : index
      %c0_75 = arith.constant 0 : index
      %c0_76 = arith.constant 0 : index
      %136 = vector.load %arg14[%c2_74, %c0_75, %c0_76] : memref<4x16x8xf32, #tpu.memory_space<vmem>>, vector<1x8x8xf32>
      %137 = vector.shape_cast %136 : vector<1x8x8xf32> to vector<8x8xf32>
      %138 = vector.broadcast %123 : vector<8x1xf32> to vector<8x8xf32>
      %139 = arith.mulf %138, %137 : vector<8x8xf32>
      %cst_77 = arith.constant dense<0.000000e+00> : vector<8x8xf32>
      %140 = tpu.matmul %126, %110, %cst_77 {dimension_numbers = #tpu.dot_dimension_numbers<[1], [0], [0], [1], [0, 0, 1, 1], [], []>} : vector<8x8xf32>, vector<8x8xf32>, vector<8x8xf32> -> vector<8x8xf32>
      %141 = arith.addf %139, %140 : vector<8x8xf32>
      %c2_78 = arith.constant 2 : index
      %c0_79 = arith.constant 0 : index
      %c0_80 = arith.constant 0 : index
      %142 = vector.load %arg14[%c2_78, %c0_79, %c0_80] : memref<4x16x8xf32, #tpu.memory_space<vmem>>, vector<1x8x8xf32>
      %143 = vector.shape_cast %142 : vector<1x8x8xf32> to vector<8x8xf32>
      %144 = vector.shape_cast %141 : vector<8x8xf32> to vector<1x8x8xf32>
      tpu.vector_store %arg14[%c2_78, %c0_79, %c0_80], %144 {strides = array<i32>} : memref<4x16x8xf32, #tpu.memory_space<vmem>>, vector<1x8x8xf32>,
      %c2_81 = arith.constant 2 : index
      %c0_82 = arith.constant 0 : index
      %c0_83 = arith.constant 0 : index
      %145 = vector.load %arg12[%c2_81, %c0_82, %c0_83] : memref<4x16x1xf32, #tpu.memory_space<vmem>>, vector<1x8x1xf32>
      %146 = vector.shape_cast %145 : vector<1x8x1xf32> to vector<8x1xf32>
      %147 = vector.shape_cast %121 : vector<8x1xf32> to vector<1x8x1xf32>
      tpu.vector_store %arg12[%c2_81, %c0_82, %c0_83], %147 {strides = array<i32>} : memref<4x16x1xf32, #tpu.memory_space<vmem>>, vector<1x8x1xf32>,
      %148 = vector.extract_strided_slice %27 {offsets = [0, 24], sizes = [8, 8], strides = [1, 1]} : vector<8x32xf32> to vector<8x8xf32>
      %149 = vector.extract_strided_slice %10 {offsets = [0, 24], sizes = [8, 8], strides = [1, 1]} : vector<8x64xf32> to vector<8x8xf32>
      %150 = vector.extract_strided_slice %10 {offsets = [0, 56], sizes = [8, 8], strides = [1, 1]} : vector<8x64xf32> to vector<8x8xf32>
      %151 = tpu.transpose %149, [1, 0] : vector<8x8xf32> -> vector<8x8xf32>
      %cst_84 = arith.constant dense<0.000000e+00> : vector<8x8xf32>
      %152 = tpu.matmul %148, %151, %cst_84 {dimension_numbers = #tpu.dot_dimension_numbers<[1], [0], [0], [1], [0, 0, 1, 1], [], []>} : vector<8x8xf32>, vector<8x8xf32>, vector<8x8xf32> -> vector<8x8xf32>
      %cst_85 = arith.constant 0.353553385 : f32
      %153 = vector.broadcast %cst_85 : f32 to vector<8x8xf32>
      %154 = arith.mulf %152, %153 : vector<8x8xf32>
      %cst_86 = arith.constant -1.000000e+30 : f32
      %155 = vector.broadcast %cst_86 : f32 to vector<8x8xf32>
      %156 = arith.select %26, %154, %155 : vector<8x8xi1>, vector<8x8xf32>
      %c3 = arith.constant 3 : index
      %c0_87 = arith.constant 0 : index
      %c0_88 = arith.constant 0 : index
      %157 = vector.load %arg12[%c3, %c0_87, %c0_88] : memref<4x16x1xf32, #tpu.memory_space<vmem>>, vector<1x8x1xf32>
      %158 = vector.shape_cast %157 : vector<1x8x1xf32> to vector<8x1xf32>
      %cst_89 = arith.constant dense<0xFF800000> : vector<8xf32>
      %159 = vector.multi_reduction <maximumf>, %156, %cst_89 [1] : vector<8x8xf32> to vector<8xf32>
      %160 = vector.shape_cast %159 : vector<8xf32> to vector<8x1xf32>
      %161 = arith.maximumf %158, %160 : vector<8x1xf32>
      %162 = arith.subf %158, %161 : vector<8x1xf32>
      %163 = math.exp %162 : vector<8x1xf32>
      %164 = vector.broadcast %161 : vector<8x1xf32> to vector<8x8xf32>
      %165 = arith.subf %156, %164 : vector<8x8xf32>
      %166 = math.exp %165 : vector<8x8xf32>
      %c3_90 = arith.constant 3 : index
      %c0_91 = arith.constant 0 : index
      %c0_92 = arith.constant 0 : index
      %167 = vector.load %arg13[%c3_90, %c0_91, %c0_92] : memref<4x16x1xf32, #tpu.memory_space<vmem>>, vector<1x8x1xf32>
      %168 = vector.shape_cast %167 : vector<1x8x1xf32> to vector<8x1xf32>
      %169 = arith.mulf %163, %168 : vector<8x1xf32>
      %cst_93 = arith.constant dense<0.000000e+00> : vector<8xf32>
      %170 = vector.multi_reduction <add>, %166, %cst_93 [1] : vector<8x8xf32> to vector<8xf32>
      %171 = vector.shape_cast %170 : vector<8xf32> to vector<8x1xf32>
      %172 = arith.addf %169, %171 : vector<8x1xf32>
      %c3_94 = arith.constant 3 : index
      %c0_95 = arith.constant 0 : index
      %c0_96 = arith.constant 0 : index
      %173 = vector.load %arg13[%c3_94, %c0_95, %c0_96] : memref<4x16x1xf32, #tpu.memory_space<vmem>>, vector<1x8x1xf32>
      %174 = vector.shape_cast %173 : vector<1x8x1xf32> to vector<8x1xf32>
      %175 = vector.shape_cast %172 : vector<8x1xf32> to vector<1x8x1xf32>
      tpu.vector_store %arg13[%c3_94, %c0_95, %c0_96], %175 {strides = array<i32>} : memref<4x16x1xf32, #tpu.memory_space<vmem>>, vector<1x8x1xf32>,
      %c3_97 = arith.constant 3 : index
      %c0_98 = arith.constant 0 : index
      %c0_99 = arith.constant 0 : index
      %176 = vector.load %arg14[%c3_97, %c0_98, %c0_99] : memref<4x16x8xf32, #tpu.memory_space<vmem>>, vector<1x8x8xf32>
      %177 = vector.shape_cast %176 : vector<1x8x8xf32> to vector<8x8xf32>
      %178 = vector.broadcast %163 : vector<8x1xf32> to vector<8x8xf32>
      %179 = arith.mulf %178, %177 : vector<8x8xf32>
      %cst_100 = arith.constant dense<0.000000e+00> : vector<8x8xf32>
      %180 = tpu.matmul %166, %150, %cst_100 {dimension_numbers = #tpu.dot_dimension_numbers<[1], [0], [0], [1], [0, 0, 1, 1], [], []>} : vector<8x8xf32>, vector<8x8xf32>, vector<8x8xf32> -> vector<8x8xf32>
      %181 = arith.addf %179, %180 : vector<8x8xf32>
      %c3_101 = arith.constant 3 : index
      %c0_102 = arith.constant 0 : index
      %c0_103 = arith.constant 0 : index
      %182 = vector.load %arg14[%c3_101, %c0_102, %c0_103] : memref<4x16x8xf32, #tpu.memory_space<vmem>>, vector<1x8x8xf32>
      %183 = vector.shape_cast %182 : vector<1x8x8xf32> to vector<8x8xf32>
      %184 = vector.shape_cast %181 : vector<8x8xf32> to vector<1x8x8xf32>
      tpu.vector_store %arg14[%c3_101, %c0_102, %c0_103], %184 {strides = array<i32>} : memref<4x16x8xf32, #tpu.memory_space<vmem>>, vector<1x8x8xf32>,
      %c3_104 = arith.constant 3 : index
      %c0_105 = arith.constant 0 : index
      %c0_106 = arith.constant 0 : index
      %185 = vector.load %arg12[%c3_104, %c0_105, %c0_106] : memref<4x16x1xf32, #tpu.memory_space<vmem>>, vector<1x8x1xf32>
      %186 = vector.shape_cast %185 : vector<1x8x1xf32> to vector<8x1xf32>
      %187 = vector.shape_cast %161 : vector<8x1xf32> to vector<1x8x1xf32>
      tpu.vector_store %arg12[%c3_104, %c0_105, %c0_106], %187 {strides = array<i32>} : memref<4x16x1xf32, #tpu.memory_space<vmem>>, vector<1x8x1xf32>,
    } else {
    }
    %c16_i32 = arith.constant 16 : i32
    %14 = arith.cmpi slt, %0, %c16_i32 : i32
    %15 = arith.extui %14 : i1 to i32
    %c0_i32_9 = arith.constant 0 : i32
    %16 = arith.cmpi ne, %15, %c0_i32_9 : i32
    scf.if %16 {
      %20 = tpu.iota {dimensions = array<i32: 0>} : vector<8x8xi32>
      %c8_i32_11 = arith.constant 8 : i32
      %21 = vector.broadcast %c8_i32_11 : i32 to vector<8x8xi32>
      %22 = arith.addi %21, %20 : vector<8x8xi32>
      %23 = tpu.iota {dimensions = array<i32: 1>} : vector<8x8xi32>
      %24 = vector.broadcast %0 : i32 to vector<8x8xi32>
      %25 = arith.addi %24, %23 : vector<8x8xi32>
      %26 = arith.cmpi sle, %25, %22 : vector<8x8xi32>
      %c8 = arith.constant 8 : index
      %c0_12 = arith.constant 0 : index
      %27 = vector.load %arg11[%c8, %c0_12] : memref<16x32xf32, #tpu.memory_space<vmem>>, vector<8x32xf32>
      %28 = vector.extract_strided_slice %27 {offsets = [0, 0], sizes = [8, 8], strides = [1, 1]} : vector<8x32xf32> to vector<8x8xf32>
      %29 = vector.extract_strided_slice %10 {offsets = [0, 0], sizes = [8, 8], strides = [1, 1]} : vector<8x64xf32> to vector<8x8xf32>
      %30 = vector.extract_strided_slice %10 {offsets = [0, 32], sizes = [8, 8], strides = [1, 1]} : vector<8x64xf32> to vector<8x8xf32>
      %31 = tpu.transpose %29, [1, 0] : vector<8x8xf32> -> vector<8x8xf32>
      %cst_13 = arith.constant dense<0.000000e+00> : vector<8x8xf32>
      %32 = tpu.matmul %28, %31, %cst_13 {dimension_numbers = #tpu.dot_dimension_numbers<[1], [0], [0], [1], [0, 0, 1, 1], [], []>} : vector<8x8xf32>, vector<8x8xf32>, vector<8x8xf32> -> vector<8x8xf32>
      %cst_14 = arith.constant 0.353553385 : f32
      %33 = vector.broadcast %cst_14 : f32 to vector<8x8xf32>
      %34 = arith.mulf %32, %33 : vector<8x8xf32>
      %cst_15 = arith.constant -1.000000e+30 : f32
      %35 = vector.broadcast %cst_15 : f32 to vector<8x8xf32>
      %36 = arith.select %26, %34, %35 : vector<8x8xi1>, vector<8x8xf32>
      %c0_16 = arith.constant 0 : index
      %c8_17 = arith.constant 8 : index
      %c0_18 = arith.constant 0 : index
      %37 = vector.load %arg12[%c0_16, %c8_17, %c0_18] : memref<4x16x1xf32, #tpu.memory_space<vmem>>, vector<1x8x1xf32>
      %38 = vector.shape_cast %37 : vector<1x8x1xf32> to vector<8x1xf32>
      %cst_19 = arith.constant dense<0xFF800000> : vector<8xf32>
      %39 = vector.multi_reduction <maximumf>, %36, %cst_19 [1] : vector<8x8xf32> to vector<8xf32>
      %40 = vector.shape_cast %39 : vector<8xf32> to vector<8x1xf32>
      %41 = arith.maximumf %38, %40 : vector<8x1xf32>
      %42 = arith.subf %38, %41 : vector<8x1xf32>
      %43 = math.exp %42 : vector<8x1xf32>
      %44 = vector.broadcast %41 : vector<8x1xf32> to vector<8x8xf32>
      %45 = arith.subf %36, %44 : vector<8x8xf32>
      %46 = math.exp %45 : vector<8x8xf32>
      %c0_20 = arith.constant 0 : index
      %c8_21 = arith.constant 8 : index
      %c0_22 = arith.constant 0 : index
      %47 = vector.load %arg13[%c0_20, %c8_21, %c0_22] : memref<4x16x1xf32, #tpu.memory_space<vmem>>, vector<1x8x1xf32>
      %48 = vector.shape_cast %47 : vector<1x8x1xf32> to vector<8x1xf32>
      %49 = arith.mulf %43, %48 : vector<8x1xf32>
      %cst_23 = arith.constant dense<0.000000e+00> : vector<8xf32>
      %50 = vector.multi_reduction <add>, %46, %cst_23 [1] : vector<8x8xf32> to vector<8xf32>
      %51 = vector.shape_cast %50 : vector<8xf32> to vector<8x1xf32>
      %52 = arith.addf %49, %51 : vector<8x1xf32>
      %c0_24 = arith.constant 0 : index
      %c8_25 = arith.constant 8 : index
      %c0_26 = arith.constant 0 : index
      %53 = vector.load %arg13[%c0_24, %c8_25, %c0_26] : memref<4x16x1xf32, #tpu.memory_space<vmem>>, vector<1x8x1xf32>
      %54 = vector.shape_cast %53 : vector<1x8x1xf32> to vector<8x1xf32>
      %55 = vector.shape_cast %52 : vector<8x1xf32> to vector<1x8x1xf32>
      tpu.vector_store %arg13[%c0_24, %c8_25, %c0_26], %55 {strides = array<i32>} : memref<4x16x1xf32, #tpu.memory_space<vmem>>, vector<1x8x1xf32>,
      %c0_27 = arith.constant 0 : index
      %c8_28 = arith.constant 8 : index
      %c0_29 = arith.constant 0 : index
      %56 = vector.load %arg14[%c0_27, %c8_28, %c0_29] : memref<4x16x8xf32, #tpu.memory_space<vmem>>, vector<1x8x8xf32>
      %57 = vector.shape_cast %56 : vector<1x8x8xf32> to vector<8x8xf32>
      %58 = vector.broadcast %43 : vector<8x1xf32> to vector<8x8xf32>
      %59 = arith.mulf %58, %57 : vector<8x8xf32>
      %cst_30 = arith.constant dense<0.000000e+00> : vector<8x8xf32>
      %60 = tpu.matmul %46, %30, %cst_30 {dimension_numbers = #tpu.dot_dimension_numbers<[1], [0], [0], [1], [0, 0, 1, 1], [], []>} : vector<8x8xf32>, vector<8x8xf32>, vector<8x8xf32> -> vector<8x8xf32>
      %61 = arith.addf %59, %60 : vector<8x8xf32>
      %c0_31 = arith.constant 0 : index
      %c8_32 = arith.constant 8 : index
      %c0_33 = arith.constant 0 : index
      %62 = vector.load %arg14[%c0_31, %c8_32, %c0_33] : memref<4x16x8xf32, #tpu.memory_space<vmem>>, vector<1x8x8xf32>
      %63 = vector.shape_cast %62 : vector<1x8x8xf32> to vector<8x8xf32>
      %64 = vector.shape_cast %61 : vector<8x8xf32> to vector<1x8x8xf32>
      tpu.vector_store %arg14[%c0_31, %c8_32, %c0_33], %64 {strides = array<i32>} : memref<4x16x8xf32, #tpu.memory_space<vmem>>, vector<1x8x8xf32>,
      %c0_34 = arith.constant 0 : index
      %c8_35 = arith.constant 8 : index
      %c0_36 = arith.constant 0 : index
      %65 = vector.load %arg12[%c0_34, %c8_35, %c0_36] : memref<4x16x1xf32, #tpu.memory_space<vmem>>, vector<1x8x1xf32>
      %66 = vector.shape_cast %65 : vector<1x8x1xf32> to vector<8x1xf32>
      %67 = vector.shape_cast %41 : vector<8x1xf32> to vector<1x8x1xf32>
      tpu.vector_store %arg12[%c0_34, %c8_35, %c0_36], %67 {strides = array<i32>} : memref<4x16x1xf32, #tpu.memory_space<vmem>>, vector<1x8x1xf32>,
      %68 = vector.extract_strided_slice %27 {offsets = [0, 8], sizes = [8, 8], strides = [1, 1]} : vector<8x32xf32> to vector<8x8xf32>
      %69 = vector.extract_strided_slice %10 {offsets = [0, 8], sizes = [8, 8], strides = [1, 1]} : vector<8x64xf32> to vector<8x8xf32>
      %70 = vector.extract_strided_slice %10 {offsets = [0, 40], sizes = [8, 8], strides = [1, 1]} : vector<8x64xf32> to vector<8x8xf32>
      %71 = tpu.transpose %69, [1, 0] : vector<8x8xf32> -> vector<8x8xf32>
      %cst_37 = arith.constant dense<0.000000e+00> : vector<8x8xf32>
      %72 = tpu.matmul %68, %71, %cst_37 {dimension_numbers = #tpu.dot_dimension_numbers<[1], [0], [0], [1], [0, 0, 1, 1], [], []>} : vector<8x8xf32>, vector<8x8xf32>, vector<8x8xf32> -> vector<8x8xf32>
      %cst_38 = arith.constant 0.353553385 : f32
      %73 = vector.broadcast %cst_38 : f32 to vector<8x8xf32>
      %74 = arith.mulf %72, %73 : vector<8x8xf32>
      %cst_39 = arith.constant -1.000000e+30 : f32
      %75 = vector.broadcast %cst_39 : f32 to vector<8x8xf32>
      %76 = arith.select %26, %74, %75 : vector<8x8xi1>, vector<8x8xf32>
      %c1 = arith.constant 1 : index
      %c8_40 = arith.constant 8 : index
      %c0_41 = arith.constant 0 : index
      %77 = vector.load %arg12[%c1, %c8_40, %c0_41] : memref<4x16x1xf32, #tpu.memory_space<vmem>>, vector<1x8x1xf32>
      %78 = vector.shape_cast %77 : vector<1x8x1xf32> to vector<8x1xf32>
      %cst_42 = arith.constant dense<0xFF800000> : vector<8xf32>
      %79 = vector.multi_reduction <maximumf>, %76, %cst_42 [1] : vector<8x8xf32> to vector<8xf32>
      %80 = vector.shape_cast %79 : vector<8xf32> to vector<8x1xf32>
      %81 = arith.maximumf %78, %80 : vector<8x1xf32>
      %82 = arith.subf %78, %81 : vector<8x1xf32>
      %83 = math.exp %82 : vector<8x1xf32>
      %84 = vector.broadcast %81 : vector<8x1xf32> to vector<8x8xf32>
      %85 = arith.subf %76, %84 : vector<8x8xf32>
      %86 = math.exp %85 : vector<8x8xf32>
      %c1_43 = arith.constant 1 : index
      %c8_44 = arith.constant 8 : index
      %c0_45 = arith.constant 0 : index
      %87 = vector.load %arg13[%c1_43, %c8_44, %c0_45] : memref<4x16x1xf32, #tpu.memory_space<vmem>>, vector<1x8x1xf32>
      %88 = vector.shape_cast %87 : vector<1x8x1xf32> to vector<8x1xf32>
      %89 = arith.mulf %83, %88 : vector<8x1xf32>
      %cst_46 = arith.constant dense<0.000000e+00> : vector<8xf32>
      %90 = vector.multi_reduction <add>, %86, %cst_46 [1] : vector<8x8xf32> to vector<8xf32>
      %91 = vector.shape_cast %90 : vector<8xf32> to vector<8x1xf32>
      %92 = arith.addf %89, %91 : vector<8x1xf32>
      %c1_47 = arith.constant 1 : index
      %c8_48 = arith.constant 8 : index
      %c0_49 = arith.constant 0 : index
      %93 = vector.load %arg13[%c1_47, %c8_48, %c0_49] : memref<4x16x1xf32, #tpu.memory_space<vmem>>, vector<1x8x1xf32>
      %94 = vector.shape_cast %93 : vector<1x8x1xf32> to vector<8x1xf32>
      %95 = vector.shape_cast %92 : vector<8x1xf32> to vector<1x8x1xf32>
      tpu.vector_store %arg13[%c1_47, %c8_48, %c0_49], %95 {strides = array<i32>} : memref<4x16x1xf32, #tpu.memory_space<vmem>>, vector<1x8x1xf32>,
      %c1_50 = arith.constant 1 : index
      %c8_51 = arith.constant 8 : index
      %c0_52 = arith.constant 0 : index
      %96 = vector.load %arg14[%c1_50, %c8_51, %c0_52] : memref<4x16x8xf32, #tpu.memory_space<vmem>>, vector<1x8x8xf32>
      %97 = vector.shape_cast %96 : vector<1x8x8xf32> to vector<8x8xf32>
      %98 = vector.broadcast %83 : vector<8x1xf32> to vector<8x8xf32>
      %99 = arith.mulf %98, %97 : vector<8x8xf32>
      %cst_53 = arith.constant dense<0.000000e+00> : vector<8x8xf32>
      %100 = tpu.matmul %86, %70, %cst_53 {dimension_numbers = #tpu.dot_dimension_numbers<[1], [0], [0], [1], [0, 0, 1, 1], [], []>} : vector<8x8xf32>, vector<8x8xf32>, vector<8x8xf32> -> vector<8x8xf32>
      %101 = arith.addf %99, %100 : vector<8x8xf32>
      %c1_54 = arith.constant 1 : index
      %c8_55 = arith.constant 8 : index
      %c0_56 = arith.constant 0 : index
      %102 = vector.load %arg14[%c1_54, %c8_55, %c0_56] : memref<4x16x8xf32, #tpu.memory_space<vmem>>, vector<1x8x8xf32>
      %103 = vector.shape_cast %102 : vector<1x8x8xf32> to vector<8x8xf32>
      %104 = vector.shape_cast %101 : vector<8x8xf32> to vector<1x8x8xf32>
      tpu.vector_store %arg14[%c1_54, %c8_55, %c0_56], %104 {strides = array<i32>} : memref<4x16x8xf32, #tpu.memory_space<vmem>>, vector<1x8x8xf32>,
      %c1_57 = arith.constant 1 : index
      %c8_58 = arith.constant 8 : index
      %c0_59 = arith.constant 0 : index
      %105 = vector.load %arg12[%c1_57, %c8_58, %c0_59] : memref<4x16x1xf32, #tpu.memory_space<vmem>>, vector<1x8x1xf32>
      %106 = vector.shape_cast %105 : vector<1x8x1xf32> to vector<8x1xf32>
      %107 = vector.shape_cast %81 : vector<8x1xf32> to vector<1x8x1xf32>
      tpu.vector_store %arg12[%c1_57, %c8_58, %c0_59], %107 {strides = array<i32>} : memref<4x16x1xf32, #tpu.memory_space<vmem>>, vector<1x8x1xf32>,
      %108 = vector.extract_strided_slice %27 {offsets = [0, 16], sizes = [8, 8], strides = [1, 1]} : vector<8x32xf32> to vector<8x8xf32>
      %109 = vector.extract_strided_slice %10 {offsets = [0, 16], sizes = [8, 8], strides = [1, 1]} : vector<8x64xf32> to vector<8x8xf32>
      %110 = vector.extract_strided_slice %10 {offsets = [0, 48], sizes = [8, 8], strides = [1, 1]} : vector<8x64xf32> to vector<8x8xf32>
      %111 = tpu.transpose %109, [1, 0] : vector<8x8xf32> -> vector<8x8xf32>
      %cst_60 = arith.constant dense<0.000000e+00> : vector<8x8xf32>
      %112 = tpu.matmul %108, %111, %cst_60 {dimension_numbers = #tpu.dot_dimension_numbers<[1], [0], [0], [1], [0, 0, 1, 1], [], []>} : vector<8x8xf32>, vector<8x8xf32>, vector<8x8xf32> -> vector<8x8xf32>
      %cst_61 = arith.constant 0.353553385 : f32
      %113 = vector.broadcast %cst_61 : f32 to vector<8x8xf32>
      %114 = arith.mulf %112, %113 : vector<8x8xf32>
      %cst_62 = arith.constant -1.000000e+30 : f32
      %115 = vector.broadcast %cst_62 : f32 to vector<8x8xf32>
      %116 = arith.select %26, %114, %115 : vector<8x8xi1>, vector<8x8xf32>
      %c2 = arith.constant 2 : index
      %c8_63 = arith.constant 8 : index
      %c0_64 = arith.constant 0 : index
      %117 = vector.load %arg12[%c2, %c8_63, %c0_64] : memref<4x16x1xf32, #tpu.memory_space<vmem>>, vector<1x8x1xf32>
      %118 = vector.shape_cast %117 : vector<1x8x1xf32> to vector<8x1xf32>
      %cst_65 = arith.constant dense<0xFF800000> : vector<8xf32>
      %119 = vector.multi_reduction <maximumf>, %116, %cst_65 [1] : vector<8x8xf32> to vector<8xf32>
      %120 = vector.shape_cast %119 : vector<8xf32> to vector<8x1xf32>
      %121 = arith.maximumf %118, %120 : vector<8x1xf32>
      %122 = arith.subf %118, %121 : vector<8x1xf32>
      %123 = math.exp %122 : vector<8x1xf32>
      %124 = vector.broadcast %121 : vector<8x1xf32> to vector<8x8xf32>
      %125 = arith.subf %116, %124 : vector<8x8xf32>
      %126 = math.exp %125 : vector<8x8xf32>
      %c2_66 = arith.constant 2 : index
      %c8_67 = arith.constant 8 : index
      %c0_68 = arith.constant 0 : index
      %127 = vector.load %arg13[%c2_66, %c8_67, %c0_68] : memref<4x16x1xf32, #tpu.memory_space<vmem>>, vector<1x8x1xf32>
      %128 = vector.shape_cast %127 : vector<1x8x1xf32> to vector<8x1xf32>
      %129 = arith.mulf %123, %128 : vector<8x1xf32>
      %cst_69 = arith.constant dense<0.000000e+00> : vector<8xf32>
      %130 = vector.multi_reduction <add>, %126, %cst_69 [1] : vector<8x8xf32> to vector<8xf32>
      %131 = vector.shape_cast %130 : vector<8xf32> to vector<8x1xf32>
      %132 = arith.addf %129, %131 : vector<8x1xf32>
      %c2_70 = arith.constant 2 : index
      %c8_71 = arith.constant 8 : index
      %c0_72 = arith.constant 0 : index
      %133 = vector.load %arg13[%c2_70, %c8_71, %c0_72] : memref<4x16x1xf32, #tpu.memory_space<vmem>>, vector<1x8x1xf32>
      %134 = vector.shape_cast %133 : vector<1x8x1xf32> to vector<8x1xf32>
      %135 = vector.shape_cast %132 : vector<8x1xf32> to vector<1x8x1xf32>
      tpu.vector_store %arg13[%c2_70, %c8_71, %c0_72], %135 {strides = array<i32>} : memref<4x16x1xf32, #tpu.memory_space<vmem>>, vector<1x8x1xf32>,
      %c2_73 = arith.constant 2 : index
      %c8_74 = arith.constant 8 : index
      %c0_75 = arith.constant 0 : index
      %136 = vector.load %arg14[%c2_73, %c8_74, %c0_75] : memref<4x16x8xf32, #tpu.memory_space<vmem>>, vector<1x8x8xf32>
      %137 = vector.shape_cast %136 : vector<1x8x8xf32> to vector<8x8xf32>
      %138 = vector.broadcast %123 : vector<8x1xf32> to vector<8x8xf32>
      %139 = arith.mulf %138, %137 : vector<8x8xf32>
      %cst_76 = arith.constant dense<0.000000e+00> : vector<8x8xf32>
      %140 = tpu.matmul %126, %110, %cst_76 {dimension_numbers = #tpu.dot_dimension_numbers<[1], [0], [0], [1], [0, 0, 1, 1], [], []>} : vector<8x8xf32>, vector<8x8xf32>, vector<8x8xf32> -> vector<8x8xf32>
      %141 = arith.addf %139, %140 : vector<8x8xf32>
      %c2_77 = arith.constant 2 : index
      %c8_78 = arith.constant 8 : index
      %c0_79 = arith.constant 0 : index
      %142 = vector.load %arg14[%c2_77, %c8_78, %c0_79] : memref<4x16x8xf32, #tpu.memory_space<vmem>>, vector<1x8x8xf32>
      %143 = vector.shape_cast %142 : vector<1x8x8xf32> to vector<8x8xf32>
      %144 = vector.shape_cast %141 : vector<8x8xf32> to vector<1x8x8xf32>
      tpu.vector_store %arg14[%c2_77, %c8_78, %c0_79], %144 {strides = array<i32>} : memref<4x16x8xf32, #tpu.memory_space<vmem>>, vector<1x8x8xf32>,
      %c2_80 = arith.constant 2 : index
      %c8_81 = arith.constant 8 : index
      %c0_82 = arith.constant 0 : index
      %145 = vector.load %arg12[%c2_80, %c8_81, %c0_82] : memref<4x16x1xf32, #tpu.memory_space<vmem>>, vector<1x8x1xf32>
      %146 = vector.shape_cast %145 : vector<1x8x1xf32> to vector<8x1xf32>
      %147 = vector.shape_cast %121 : vector<8x1xf32> to vector<1x8x1xf32>
      tpu.vector_store %arg12[%c2_80, %c8_81, %c0_82], %147 {strides = array<i32>} : memref<4x16x1xf32, #tpu.memory_space<vmem>>, vector<1x8x1xf32>,
      %148 = vector.extract_strided_slice %27 {offsets = [0, 24], sizes = [8, 8], strides = [1, 1]} : vector<8x32xf32> to vector<8x8xf32>
      %149 = vector.extract_strided_slice %10 {offsets = [0, 24], sizes = [8, 8], strides = [1, 1]} : vector<8x64xf32> to vector<8x8xf32>
      %150 = vector.extract_strided_slice %10 {offsets = [0, 56], sizes = [8, 8], strides = [1, 1]} : vector<8x64xf32> to vector<8x8xf32>
      %151 = tpu.transpose %149, [1, 0] : vector<8x8xf32> -> vector<8x8xf32>
      %cst_83 = arith.constant dense<0.000000e+00> : vector<8x8xf32>
      %152 = tpu.matmul %148, %151, %cst_83 {dimension_numbers = #tpu.dot_dimension_numbers<[1], [0], [0], [1], [0, 0, 1, 1], [], []>} : vector<8x8xf32>, vector<8x8xf32>, vector<8x8xf32> -> vector<8x8xf32>
      %cst_84 = arith.constant 0.353553385 : f32
      %153 = vector.broadcast %cst_84 : f32 to vector<8x8xf32>
      %154 = arith.mulf %152, %153 : vector<8x8xf32>
      %cst_85 = arith.constant -1.000000e+30 : f32
      %155 = vector.broadcast %cst_85 : f32 to vector<8x8xf32>
      %156 = arith.select %26, %154, %155 : vector<8x8xi1>, vector<8x8xf32>
      %c3 = arith.constant 3 : index
      %c8_86 = arith.constant 8 : index
      %c0_87 = arith.constant 0 : index
      %157 = vector.load %arg12[%c3, %c8_86, %c0_87] : memref<4x16x1xf32, #tpu.memory_space<vmem>>, vector<1x8x1xf32>
      %158 = vector.shape_cast %157 : vector<1x8x1xf32> to vector<8x1xf32>
      %cst_88 = arith.constant dense<0xFF800000> : vector<8xf32>
      %159 = vector.multi_reduction <maximumf>, %156, %cst_88 [1] : vector<8x8xf32> to vector<8xf32>
      %160 = vector.shape_cast %159 : vector<8xf32> to vector<8x1xf32>
      %161 = arith.maximumf %158, %160 : vector<8x1xf32>
      %162 = arith.subf %158, %161 : vector<8x1xf32>
      %163 = math.exp %162 : vector<8x1xf32>
      %164 = vector.broadcast %161 : vector<8x1xf32> to vector<8x8xf32>
      %165 = arith.subf %156, %164 : vector<8x8xf32>
      %166 = math.exp %165 : vector<8x8xf32>
      %c3_89 = arith.constant 3 : index
      %c8_90 = arith.constant 8 : index
      %c0_91 = arith.constant 0 : index
      %167 = vector.load %arg13[%c3_89, %c8_90, %c0_91] : memref<4x16x1xf32, #tpu.memory_space<vmem>>, vector<1x8x1xf32>
      %168 = vector.shape_cast %167 : vector<1x8x1xf32> to vector<8x1xf32>
      %169 = arith.mulf %163, %168 : vector<8x1xf32>
      %cst_92 = arith.constant dense<0.000000e+00> : vector<8xf32>
      %170 = vector.multi_reduction <add>, %166, %cst_92 [1] : vector<8x8xf32> to vector<8xf32>
      %171 = vector.shape_cast %170 : vector<8xf32> to vector<8x1xf32>
      %172 = arith.addf %169, %171 : vector<8x1xf32>
      %c3_93 = arith.constant 3 : index
      %c8_94 = arith.constant 8 : index
      %c0_95 = arith.constant 0 : index
      %173 = vector.load %arg13[%c3_93, %c8_94, %c0_95] : memref<4x16x1xf32, #tpu.memory_space<vmem>>, vector<1x8x1xf32>
      %174 = vector.shape_cast %173 : vector<1x8x1xf32> to vector<8x1xf32>
      %175 = vector.shape_cast %172 : vector<8x1xf32> to vector<1x8x1xf32>
      tpu.vector_store %arg13[%c3_93, %c8_94, %c0_95], %175 {strides = array<i32>} : memref<4x16x1xf32, #tpu.memory_space<vmem>>, vector<1x8x1xf32>,
      %c3_96 = arith.constant 3 : index
      %c8_97 = arith.constant 8 : index
      %c0_98 = arith.constant 0 : index
      %176 = vector.load %arg14[%c3_96, %c8_97, %c0_98] : memref<4x16x8xf32, #tpu.memory_space<vmem>>, vector<1x8x8xf32>
      %177 = vector.shape_cast %176 : vector<1x8x8xf32> to vector<8x8xf32>
      %178 = vector.broadcast %163 : vector<8x1xf32> to vector<8x8xf32>
      %179 = arith.mulf %178, %177 : vector<8x8xf32>
      %cst_99 = arith.constant dense<0.000000e+00> : vector<8x8xf32>
      %180 = tpu.matmul %166, %150, %cst_99 {dimension_numbers = #tpu.dot_dimension_numbers<[1], [0], [0], [1], [0, 0, 1, 1], [], []>} : vector<8x8xf32>, vector<8x8xf32>, vector<8x8xf32> -> vector<8x8xf32>
      %181 = arith.addf %179, %180 : vector<8x8xf32>
      %c3_100 = arith.constant 3 : index
      %c8_101 = arith.constant 8 : index
      %c0_102 = arith.constant 0 : index
      %182 = vector.load %arg14[%c3_100, %c8_101, %c0_102] : memref<4x16x8xf32, #tpu.memory_space<vmem>>, vector<1x8x8xf32>
      %183 = vector.shape_cast %182 : vector<1x8x8xf32> to vector<8x8xf32>
      %184 = vector.shape_cast %181 : vector<8x8xf32> to vector<1x8x8xf32>
      tpu.vector_store %arg14[%c3_100, %c8_101, %c0_102], %184 {strides = array<i32>} : memref<4x16x8xf32, #tpu.memory_space<vmem>>, vector<1x8x8xf32>,
      %c3_103 = arith.constant 3 : index
      %c8_104 = arith.constant 8 : index
      %c0_105 = arith.constant 0 : index
      %185 = vector.load %arg12[%c3_103, %c8_104, %c0_105] : memref<4x16x1xf32, #tpu.memory_space<vmem>>, vector<1x8x1xf32>
      %186 = vector.shape_cast %185 : vector<1x8x1xf32> to vector<8x1xf32>
      %187 = vector.shape_cast %161 : vector<8x1xf32> to vector<1x8x1xf32>
      tpu.vector_store %arg12[%c3_103, %c8_104, %c0_105], %187 {strides = array<i32>} : memref<4x16x1xf32, #tpu.memory_space<vmem>>, vector<1x8x1xf32>,
    } else {
    }
    %c1_i32 = arith.constant 1 : i32
    %17 = arith.cmpi eq, %arg1, %c1_i32 : i32
    %18 = arith.extui %17 : i1 to i32
    %c0_i32_10 = arith.constant 0 : i32
    %19 = arith.cmpi ne, %18, %c0_i32_10 : i32
    scf.if %19 {
      %c0_11 = arith.constant 0 : index
      %c0_12 = arith.constant 0 : index
      %c0_13 = arith.constant 0 : index
      %20 = vector.load %arg14[%c0_11, %c0_12, %c0_13] : memref<4x16x8xf32, #tpu.memory_space<vmem>>, vector<1x16x8xf32>
      %21 = vector.shape_cast %20 : vector<1x16x8xf32> to vector<16x8xf32>
      %c0_14 = arith.constant 0 : index
      %c0_15 = arith.constant 0 : index
      %c0_16 = arith.constant 0 : index
      %22 = vector.load %arg13[%c0_14, %c0_15, %c0_16] : memref<4x16x1xf32, #tpu.memory_space<vmem>>, vector<1x16x1xf32>
      %23 = vector.shape_cast %22 : vector<1x16x1xf32> to vector<16x1xf32>
      %24 = tpu.reciprocal %23 : vector<16x1xf32> -> vector<16x1xf32>
      %25 = vector.broadcast %24 : vector<16x1xf32> to vector<16x8xf32>
      %26 = arith.mulf %21, %25 : vector<16x8xf32>
      %c1 = arith.constant 1 : index
      %c0_17 = arith.constant 0 : index
      %c0_18 = arith.constant 0 : index
      %27 = vector.load %arg14[%c1, %c0_17, %c0_18] : memref<4x16x8xf32, #tpu.memory_space<vmem>>, vector<1x16x8xf32>
      %28 = vector.shape_cast %27 : vector<1x16x8xf32> to vector<16x8xf32>
      %c1_19 = arith.constant 1 : index
      %c0_20 = arith.constant 0 : index
      %c0_21 = arith.constant 0 : index
      %29 = vector.load %arg13[%c1_19, %c0_20, %c0_21] : memref<4x16x1xf32, #tpu.memory_space<vmem>>, vector<1x16x1xf32>
      %30 = vector.shape_cast %29 : vector<1x16x1xf32> to vector<16x1xf32>
      %31 = tpu.reciprocal %30 : vector<16x1xf32> -> vector<16x1xf32>
      %32 = vector.broadcast %31 : vector<16x1xf32> to vector<16x8xf32>
      %33 = arith.mulf %28, %32 : vector<16x8xf32>
      %c2 = arith.constant 2 : index
      %c0_22 = arith.constant 0 : index
      %c0_23 = arith.constant 0 : index
      %34 = vector.load %arg14[%c2, %c0_22, %c0_23] : memref<4x16x8xf32, #tpu.memory_space<vmem>>, vector<1x16x8xf32>
      %35 = vector.shape_cast %34 : vector<1x16x8xf32> to vector<16x8xf32>
      %c2_24 = arith.constant 2 : index
      %c0_25 = arith.constant 0 : index
      %c0_26 = arith.constant 0 : index
      %36 = vector.load %arg13[%c2_24, %c0_25, %c0_26] : memref<4x16x1xf32, #tpu.memory_space<vmem>>, vector<1x16x1xf32>
      %37 = vector.shape_cast %36 : vector<1x16x1xf32> to vector<16x1xf32>
      %38 = tpu.reciprocal %37 : vector<16x1xf32> -> vector<16x1xf32>
      %39 = vector.broadcast %38 : vector<16x1xf32> to vector<16x8xf32>
      %40 = arith.mulf %35, %39 : vector<16x8xf32>
      %c3 = arith.constant 3 : index
      %c0_27 = arith.constant 0 : index
      %c0_28 = arith.constant 0 : index
      %41 = vector.load %arg14[%c3, %c0_27, %c0_28] : memref<4x16x8xf32, #tpu.memory_space<vmem>>, vector<1x16x8xf32>
      %42 = vector.shape_cast %41 : vector<1x16x8xf32> to vector<16x8xf32>
      %c3_29 = arith.constant 3 : index
      %c0_30 = arith.constant 0 : index
      %c0_31 = arith.constant 0 : index
      %43 = vector.load %arg13[%c3_29, %c0_30, %c0_31] : memref<4x16x1xf32, #tpu.memory_space<vmem>>, vector<1x16x1xf32>
      %44 = vector.shape_cast %43 : vector<1x16x1xf32> to vector<16x1xf32>
      %45 = tpu.reciprocal %44 : vector<16x1xf32> -> vector<16x1xf32>
      %46 = vector.broadcast %45 : vector<16x1xf32> to vector<16x8xf32>
      %47 = arith.mulf %42, %46 : vector<16x8xf32>
      %48 = tpu.concatenate %26, %33, %40, %47 in 1 : vector<16x8xf32>, vector<16x8xf32>, vector<16x8xf32>, vector<16x8xf32> -> vector<16x32xf32>
      %c0_32 = arith.constant 0 : index
      %c0_33 = arith.constant 0 : index
      %49 = vector.load %arg8[%c0_32, %c0_33] : memref<32x32xf32, #tpu.memory_space<vmem>>, vector<32x32xf32>
      %cst_34 = arith.constant dense<0.000000e+00> : vector<16x32xf32>
      %50 = tpu.matmul %48, %49, %cst_34 {dimension_numbers = #tpu.dot_dimension_numbers<[1], [0], [0], [1], [0, 0, 1, 1], [], []>} : vector<16x32xf32>, vector<32x32xf32>, vector<16x32xf32> -> vector<16x32xf32>
      %c0_35 = arith.constant 0 : index
      %c0_36 = arith.constant 0 : index
      %51 = vector.load %arg9[%c0_35, %c0_36] : memref<1x32xf32, #tpu.memory_space<vmem>>, vector<1x32xf32>
      %52 = vector.broadcast %51 : vector<1x32xf32> to vector<16x32xf32>
      %53 = arith.addf %50, %52 : vector<16x32xf32>
      %c0_37 = arith.constant 0 : index
      %c0_38 = arith.constant 0 : index
      %c0_39 = arith.constant 0 : index
      %54 = vector.load %arg10[%c0_37, %c0_38, %c0_39] : memref<1x16x32xf32, #tpu.memory_space<vmem>>, vector<1x16x32xf32>
      %55 = vector.shape_cast %54 : vector<1x16x32xf32> to vector<16x32xf32>
      %56 = vector.shape_cast %53 : vector<16x32xf32> to vector<1x16x32xf32>
      tpu.vector_store %arg10[%c0_37, %c0_38, %c0_39], %56 {strides = array<i32>} : memref<1x16x32xf32, #tpu.memory_space<vmem>>, vector<1x16x32xf32>,
    } else {
    }
    return
  }
  func.func @transform_0(%arg0: i32, %arg1: i32) -> (i32, i32, i32) {
    %c0_i32 = arith.constant 0 : i32
    %c0_i32_0 = arith.constant 0 : i32
    %c0_i32_1 = arith.constant 0 : i32
    return %arg0, %c0_i32, %c0_i32_0 : i32, i32, i32
  }
  func.func @transform_1(%arg0: i32, %arg1: i32) -> (i32, i32, i32) {
    %c0_i32 = arith.constant 0 : i32
    %c0_i32_0 = arith.constant 0 : i32
    return %arg0, %arg1, %c0_i32 : i32, i32, i32
  }
  func.func @transform_2(%arg0: i32, %arg1: i32) -> (i32, i32) {
    %c0_i32 = arith.constant 0 : i32
    %c0_i32_0 = arith.constant 0 : i32
    %c0_i32_1 = arith.constant 0 : i32
    return %c0_i32, %c0_i32_0 : i32, i32
  }
  func.func @transform_3(%arg0: i32, %arg1: i32) -> (i32, i32) {
    %c0_i32 = arith.constant 0 : i32
    %c0_i32_0 = arith.constant 0 : i32
    %c0_i32_1 = arith.constant 0 : i32
    return %c0_i32, %c0_i32_0 : i32, i32
  }
  func.func @transform_4(%arg0: i32, %arg1: i32) -> (i32, i32) {
    %c0_i32 = arith.constant 0 : i32
    %c0_i32_0 = arith.constant 0 : i32
    %c0_i32_1 = arith.constant 0 : i32
    return %c0_i32, %c0_i32_0 : i32, i32
  }
  func.func @transform_5(%arg0: i32, %arg1: i32) -> (i32, i32) {
    %c0_i32 = arith.constant 0 : i32
    %c0_i32_0 = arith.constant 0 : i32
    %c0_i32_1 = arith.constant 0 : i32
    return %c0_i32, %c0_i32_0 : i32, i32
  }
  func.func @transform_6(%arg0: i32, %arg1: i32) -> (i32, i32) {
    %c0_i32 = arith.constant 0 : i32
    %c0_i32_0 = arith.constant 0 : i32
    %c0_i32_1 = arith.constant 0 : i32
    return %c0_i32, %c0_i32_0 : i32, i32
  }
  func.func @transform_7(%arg0: i32, %arg1: i32) -> (i32, i32) {
    %c0_i32 = arith.constant 0 : i32
    %c0_i32_0 = arith.constant 0 : i32
    %c0_i32_1 = arith.constant 0 : i32
    return %c0_i32, %c0_i32_0 : i32, i32
  }
  func.func @transform_8(%arg0: i32, %arg1: i32) -> (i32, i32, i32) {
    %c0_i32 = arith.constant 0 : i32
    %c0_i32_0 = arith.constant 0 : i32
    %c0_i32_1 = arith.constant 0 : i32
    return %arg0, %c0_i32, %c0_i32_0 : i32, i32, i32
  }
}

</mosaic_0001>

<llo_original>
// kernel: tpu_custom_call.1
$region0: #{tpu_custom_call.1}
  #allocation0 [shape = 'u32[]', space=smem, size = 0x4, offset = 0x4, fixed_abs, tag = 'smem constant byte address 0x4 - core index']
  #allocation1 [shape = 'u32[144,128]{1,0:T(1,128)}', space=vmem, size = 0x12000, scoped, tag = 'internal scratch']
  #allocation2 [shape = 'f32[16,32]{1,0:T(8,128)}', space=vmem, size = 0x2000, scoped, tag = 'scratch operand']
  #allocation3 [shape = 'f32[4,16,1]{2,1,0:T(8,128)}', space=vmem, size = 0x8000, scoped, tag = 'scratch operand']
  #allocation4 [shape = 'f32[4,16,1]{2,1,0:T(8,128)}', space=vmem, size = 0x8000, scoped, tag = 'scratch operand']
  #allocation5 [shape = 'f32[4,16,8]{2,1,0:T(8,128)}', space=vmem, size = 0x8000, scoped, tag = 'scratch operand']
  %s0 = inlined_call_operand.hbm [shape: f32[2,16,32], index: 0, kind: input, shape index: {}]
  %s1 = inlined_call_operand.hbm [shape: f32[2,16,32], index: 1, kind: input, shape index: {}]
  %s2 = inlined_call_operand.hbm [shape: f32[32,32], index: 2, kind: input, shape index: {}]
  %s3 = inlined_call_operand.hbm [shape: f32[32,64], index: 3, kind: input, shape index: {}]
  %s4 = inlined_call_operand.vmem [shape: f32[1,32], index: 4, kind: input, shape index: {}]
  %s5 = inlined_call_operand.vmem [shape: f32[1,64], index: 5, kind: input, shape index: {}]
  %s6 = inlined_call_operand.hbm [shape: f32[32,32], index: 6, kind: input, shape index: {}]
  %s7 = inlined_call_operand.vmem [shape: f32[1,32], index: 7, kind: input, shape index: {}]
  %s8 = inlined_call_operand.hbm [shape: f32[2,16,32], index: 8, kind: output, shape index: {}]
  %s9 = sld [smem:[#allocation0]]
  $region101: #{tpu_custom_call.1} parent=0
    _
  %s11 = ssub.s32 1, %s9
  %s12 = scalar_select 0, %s11, %s9
  $region1: #{tpu_custom_call.1} parent=0
    #allocation6 [shape = 'u8[16384]{0}', space=vmem, size = 0x4000, scoped, tag = 'input window, operand 0']
    #allocation7 [shape = 's32[2]{0}', space=sflag, size = 0x8, scoped, tag = 'scoped memory for tpu_custom_call.1']
    #allocation8 [shape = 's32[2]{0}', space=sflag, size = 0x8, scoped, tag = 'scoped memory for tpu_custom_call.1']
    #allocation9 [shape = 'u8[8192]{0}', space=vmem, size = 0x2000, scoped, tag = 'input window, operand 1']
    #allocation10 [shape = 's32[2]{0}', space=sflag, size = 0x8, scoped, tag = 'scoped memory for tpu_custom_call.1']
    #allocation11 [shape = 'u8[16384]{0}', space=vmem, size = 0x4000, scoped, tag = 'input window, operand 2, single buffered']
    #allocation12 [shape = 'u8[16384]{0}', space=vmem, size = 0x4000, scoped, tag = 'input window, operand 3, single buffered']
    #allocation13 [shape = 's32[1]{0}', space=sflag, size = 0x4, scoped, tag = 'scoped memory for tpu_custom_call.1']
    #allocation14 [shape = 'u8[16384]{0}', space=vmem, size = 0x4000, scoped, tag = 'input window, operand 6, single buffered']
    #allocation15 [shape = 'u8[16384]{0}', space=vmem, size = 0x4000, scoped, tag = 'output window, operand 0']
    %13 = vsyncpa [#allocation7], 0
    %s14 = scalar_lea.sflag [#allocation7], 1
    %15 = vsyncpa %s14, 0
    %16 = vsyncpa [#allocation10], 0
    %s17 = scalar_lea.sflag [#allocation10], 1
    %18 = vsyncpa %s17, 0
    %19 = vsyncpa [#allocation13], 0
    %20 = vsyncpa [#allocation8], 0
    %s21 = scalar_lea.sflag [#allocation8], 1
    %22 = vsyncpa %s21, 0
    loop: start=0, step=1, limit=6
    $region2: #{tpu_custom_call.1} parent=1 // loop_pre_header
      _
    $region3: #{tpu_custom_call.1} parent=1 // loop_header
      %s24 = sphi 0, %s28
      %p25 = scmp.ge.s32.totalorder %s24, 6
      %s31 = sphi 0, %s43
      %s32 = sphi 0, %s39
      %s33 = sphi 0, %s31
      %s34 = sphi 0, %s32
      %s35 = sphi 0, %s33
      %s36 = sphi 0, %s34
      %s46 = sphi 0, %s48
      %s49 = sphi 0, %s46
      %s50 = sphi 0, %s49
      %s66 = sphi 0, %s50
      %s74 = sphi 0, %s76
      %s77 = sphi 0, %s74
      %s78 = sphi 0, %s77
      %s94 = sphi 0, %s78
      %s98 = sphi 0, %s98
      %s100 = sphi 0, %s98
      %s101 = sphi 0, %s100
      %s115 = sphi 0, %s101
      %s119 = sphi 0, %s119
      %s121 = sphi 0, %s119
      %s122 = sphi 0, %s121
      %s136 = sphi 0, %s122
      %s140 = sphi 0, %s140
      %s142 = sphi 0, %s140
      %s143 = sphi 0, %s142
      %s157 = sphi 0, %s143
      %s161 = sphi 0, %s161
      %s163 = sphi 0, %s161
      %s164 = sphi 0, %s163
      %s178 = sphi 0, %s164
      %s182 = sphi 0, %s182
      %s184 = sphi 0, %s182
      %s185 = sphi 0, %s184
      %s199 = sphi 0, %s185
      %s203 = sphi 0, %s203
      %s205 = sphi 0, %s203
      %s206 = sphi 0, %s205
      %s220 = sphi 0, %s206
      %s226 = sphi 0, %s228
      %s229 = sphi 0, %s226
      %s230 = sphi 0, %s229
      %s246 = sphi 0, %s230
    $region4: #{tpu_custom_call.1} parent=1 // loop_header_branch
      %27 = sbr.rel (%p25) target = $region8
    $region5: #{tpu_custom_call.1} parent=1 // loop_body
      %s29 = ssub.s32 %s24, 1
      %s30 = ssub.s32 %s24, 2
      %s37 = sadd.s32 1, %s32
      %p38 = scmp.ge.s32.totalorder %s37, 2
      %s39 = scalar_select %p38, 0, %s37
      %s40 = sadd.s32 1, %s31
      %s41 = scalar_select %p38, %s40, %s31
      %p42 = scmp.ge.s32.totalorder %s41, 2
      %s43 = scalar_select %p42, 0, %s41
      %s44 = ssub.s32 %s31, %s43
      %p45 = scmp.eq.s32.totalorder %s44, 0
      %s47 = sadd.s32 %s46, 1
      %s48 = scalar_select %p45, %s46, %s47
      %p51 = pneg %p45
      %p52 = scmp.eq.s32.totalorder %s24, 3
      %p53 = por %p51, %p52
      %p54 = scmp.ne.s32.totalorder %s46, %s49
      %p55 = scmp.eq.s32.totalorder %s24, 0
      %p56 = por %p54, %p55
      %p57 = scmp.ne.s32.totalorder %s46, %s49
      %p58 = scmp.eq.s32.totalorder %s29, 3
      %p59 = por %p57, %p58
      %p60 = scmp.ne.s32.totalorder %s49, %s50
      %p61 = scmp.eq.s32.totalorder %s29, 0
      %p62 = por %p60, %p61
      %p63 = scmp.ne.s32.totalorder %s49, %s50
      %p64 = scmp.eq.s32.totalorder %s30, 3
      %p65 = por %p63, %p64
      %p67 = scmp.ne.s32.totalorder %s50, %s66
      %p68 = scmp.eq.s32.totalorder %s30, 0
      %p69 = por %p67, %p68
      %s70 = ssub.s32 %s31, %s43
      %s71 = ssub.s32 %s32, %s39
      %s72 = sor.u32 %s70, %s71
      %p73 = scmp.eq.s32.totalorder %s72, 0
      %s75 = sadd.s32 %s74, 1
      %s76 = scalar_select %p73, %s74, %s75
      %p79 = pneg %p73
      %p80 = scmp.eq.s32.totalorder %s24, 3
      %p81 = por %p79, %p80
      %p82 = scmp.ne.s32.totalorder %s74, %s77
      %p83 = scmp.eq.s32.totalorder %s24, 0
      %p84 = por %p82, %p83
      %p85 = scmp.ne.s32.totalorder %s74, %s77
      %p86 = scmp.eq.s32.totalorder %s29, 3
      %p87 = por %p85, %p86
      %p88 = scmp.ne.s32.totalorder %s77, %s78
      %p89 = scmp.eq.s32.totalorder %s29, 0
      %p90 = por %p88, %p89
      %p91 = scmp.ne.s32.totalorder %s77, %s78
      %p92 = scmp.eq.s32.totalorder %s30, 3
      %p93 = por %p91, %p92
      %p95 = scmp.ne.s32.totalorder %s78, %s94
      %p96 = scmp.eq.s32.totalorder %s30, 0
      %p97 = por %p95, %p96
      %s99 = sadd.s32 %s98, 1
      %p102 = scmp.eq.s32.totalorder %s24, 3
      %p103 = scmp.ne.s32.totalorder %s98, %s100
      %p104 = scmp.eq.s32.totalorder %s24, 0
      %p105 = por %p103, %p104
      %p106 = scmp.ne.s32.totalorder %s98, %s100
      %p107 = scmp.eq.s32.totalorder %s29, 3
      %p108 = por %p106, %p107
      %p109 = scmp.ne.s32.totalorder %s100, %s101
      %p110 = scmp.eq.s32.totalorder %s29, 0
      %p111 = por %p109, %p110
      %p112 = scmp.ne.s32.totalorder %s100, %s101
      %p113 = scmp.eq.s32.totalorder %s30, 3
      %p114 = por %p112, %p113
      %p116 = scmp.ne.s32.totalorder %s101, %s115
      %p117 = scmp.eq.s32.totalorder %s30, 0
      %p118 = por %p116, %p117
      %s120 = sadd.s32 %s119, 1
      %p123 = scmp.eq.s32.totalorder %s24, 3
      %p124 = scmp.ne.s32.totalorder %s119, %s121
      %p125 = scmp.eq.s32.totalorder %s24, 0
      %p126 = por %p124, %p125
      %p127 = scmp.ne.s32.totalorder %s119, %s121
      %p128 = scmp.eq.s32.totalorder %s29, 3
      %p129 = por %p127, %p128
      %p130 = scmp.ne.s32.totalorder %s121, %s122
      %p131 = scmp.eq.s32.totalorder %s29, 0
      %p132 = por %p130, %p131
      %p133 = scmp.ne.s32.totalorder %s121, %s122
      %p134 = scmp.eq.s32.totalorder %s30, 3
      %p135 = por %p133, %p134
      %p137 = scmp.ne.s32.totalorder %s122, %s136
      %p138 = scmp.eq.s32.totalorder %s30, 0
      %p139 = por %p137, %p138
      %s141 = sadd.s32 %s140, 1
      %p144 = scmp.eq.s32.totalorder %s24, 3
      %p145 = scmp.ne.s32.totalorder %s140, %s142
      %p146 = scmp.eq.s32.totalorder %s24, 0
      %p147 = por %p145, %p146
      %p148 = scmp.ne.s32.totalorder %s140, %s142
      %p149 = scmp.eq.s32.totalorder %s29, 3
      %p150 = por %p148, %p149
      %p151 = scmp.ne.s32.totalorder %s142, %s143
      %p152 = scmp.eq.s32.totalorder %s29, 0
      %p153 = por %p151, %p152
      %p154 = scmp.ne.s32.totalorder %s142, %s143
      %p155 = scmp.eq.s32.totalorder %s30, 3
      %p156 = por %p154, %p155
      %p158 = scmp.ne.s32.totalorder %s143, %s157
      %p159 = scmp.eq.s32.totalorder %s30, 0
      %p160 = por %p158, %p159
      %s162 = sadd.s32 %s161, 1
      %p165 = scmp.eq.s32.totalorder %s24, 3
      %p166 = scmp.ne.s32.totalorder %s161, %s163
      %p167 = scmp.eq.s32.totalorder %s24, 0
      %p168 = por %p166, %p167
      %p169 = scmp.ne.s32.totalorder %s161, %s163
      %p170 = scmp.eq.s32.totalorder %s29, 3
      %p171 = por %p169, %p170
      %p172 = scmp.ne.s32.totalorder %s163, %s164
      %p173 = scmp.eq.s32.totalorder %s29, 0
      %p174 = por %p172, %p173
      %p175 = scmp.ne.s32.totalorder %s163, %s164
      %p176 = scmp.eq.s32.totalorder %s30, 3
      %p177 = por %p175, %p176
      %p179 = scmp.ne.s32.totalorder %s164, %s178
      %p180 = scmp.eq.s32.totalorder %s30, 0
      %p181 = por %p179, %p180
      %s183 = sadd.s32 %s182, 1
      %p186 = scmp.eq.s32.totalorder %s24, 3
      %p187 = scmp.ne.s32.totalorder %s182, %s184
      %p188 = scmp.eq.s32.totalorder %s24, 0
      %p189 = por %p187, %p188
      %p190 = scmp.ne.s32.totalorder %s182, %s184
      %p191 = scmp.eq.s32.totalorder %s29, 3
      %p192 = por %p190, %p191
      %p193 = scmp.ne.s32.totalorder %s184, %s185
      %p194 = scmp.eq.s32.totalorder %s29, 0
      %p195 = por %p193, %p194
      %p196 = scmp.ne.s32.totalorder %s184, %s185
      %p197 = scmp.eq.s32.totalorder %s30, 3
      %p198 = por %p196, %p197
      %p200 = scmp.ne.s32.totalorder %s185, %s199
      %p201 = scmp.eq.s32.totalorder %s30, 0
      %p202 = por %p200, %p201
      %s204 = sadd.s32 %s203, 1
      %p207 = scmp.eq.s32.totalorder %s24, 3
      %p208 = scmp.ne.s32.totalorder %s203, %s205
      %p209 = scmp.eq.s32.totalorder %s24, 0
      %p210 = por %p208, %p209
      %p211 = scmp.ne.s32.totalorder %s203, %s205
      %p212 = scmp.eq.s32.totalorder %s29, 3
      %p213 = por %p211, %p212
      %p214 = scmp.ne.s32.totalorder %s205, %s206
      %p215 = scmp.eq.s32.totalorder %s29, 0
      %p216 = por %p214, %p215
      %p217 = scmp.ne.s32.totalorder %s205, %s206
      %p218 = scmp.eq.s32.totalorder %s30, 3
      %p219 = por %p217, %p218
      %p221 = scmp.ne.s32.totalorder %s206, %s220
      %p222 = scmp.eq.s32.totalorder %s30, 0
      %p223 = por %p221, %p222
      %s224 = ssub.s32 %s31, %s43
      %p225 = scmp.eq.s32.totalorder %s224, 0
      %s227 = sadd.s32 %s226, 1
      %s228 = scalar_select %p225, %s226, %s227
      %p231 = pneg %p225
      %p232 = scmp.eq.s32.totalorder %s24, 3
      %p233 = por %p231, %p232
      %p234 = scmp.ne.s32.totalorder %s226, %s229
      %p235 = scmp.eq.s32.totalorder %s24, 0
      %p236 = por %p234, %p235
      %p237 = scmp.ne.s32.totalorder %s226, %s229
      %p238 = scmp.eq.s32.totalorder %s29, 3
      %p239 = por %p237, %p238
      %p240 = scmp.ne.s32.totalorder %s229, %s230
      %p241 = scmp.eq.s32.totalorder %s29, 0
      %p242 = por %p240, %p241
      %p243 = scmp.ne.s32.totalorder %s229, %s230
      %p244 = scmp.eq.s32.totalorder %s30, 3
      %p245 = por %p243, %p244
      %p247 = scmp.ne.s32.totalorder %s230, %s246
      %p248 = scmp.eq.s32.totalorder %s30, 0
      %p249 = por %p247, %p248
      %p250 = scmp.le.s32.totalorder 1, %s24
      %p251 = scmp.lt.s32.totalorder %s24, 5
      %p252 = pnand %p250, %p251
      %p253 = pneg %p252
      // Predicated region
      $region9: #{tpu_custom_call.1} parent=5 // pred_check
        _
      $region10: #{tpu_custom_call.1} parent=5 // pred_check_branch
        %255 = sbr.rel (%p252) target = $region12
      $region11: #{tpu_custom_call.1} parent=5 // pred_region
        %s256 = ssub.s32 %s24, 1
        // Predicated region
        $region13: #{tpu_custom_call.1} parent=11 // pred_check
          %p257 = pneg %p111
        $region14: #{tpu_custom_call.1} parent=11 // pred_check_branch
          %259 = sbr.rel (%p257) target = $region16
        $region15: #{tpu_custom_call.1} parent=11 // pred_region
          %s261 = ssub.s32 512, 512
          %262 = vsyncadd [#allocation10], %s261
          %s263 = sshll.u32 [#allocation11], 4
          %s264 = int_to_ptr.vmem [resolvable:$true] %s263
          %269 = dma.hbm_to_vmem [thread:$0]  %s2, 512, %s264, [#allocation10], 128, 128, 8
        $region16: #{tpu_custom_call.1} parent=11 // pred_fallthru
          _
        // Predicated region
        $region17: #{tpu_custom_call.1} parent=11 // pred_check
          %p270 = pneg %p132
        $region18: #{tpu_custom_call.1} parent=11 // pred_check_branch
          %272 = sbr.rel (%p270) target = $region20
        $region19: #{tpu_custom_call.1} parent=11 // pred_region
          %s274 = ssub.s32 512, 512
          %275 = vsyncadd [#allocation13], %s274
          %s276 = sshll.u32 [#allocation12], 4
          %s277 = int_to_ptr.vmem [resolvable:$true] %s276
          %282 = dma.hbm_to_vmem [thread:$0]  %s3, 512, %s277, [#allocation13], 128, 128, 8
        $region20: #{tpu_custom_call.1} parent=11 // pred_fallthru
          _
        // Predicated region
        $region21: #{tpu_custom_call.1} parent=11 // pred_check
          %p283 = pneg %p153
        $region22: #{tpu_custom_call.1} parent=11 // pred_check_branch
          %285 = sbr.rel (%p283) target = $region24
        $region23: #{tpu_custom_call.1} parent=11 // pred_region
          _
        $region24: #{tpu_custom_call.1} parent=11 // pred_fallthru
          _
        // Predicated region
        $region25: #{tpu_custom_call.1} parent=11 // pred_check
          %p286 = pneg %p174
        $region26: #{tpu_custom_call.1} parent=11 // pred_check_branch
          %288 = sbr.rel (%p286) target = $region28
        $region27: #{tpu_custom_call.1} parent=11 // pred_region
          _
        $region28: #{tpu_custom_call.1} parent=11 // pred_fallthru
          _
        // Predicated region
        $region29: #{tpu_custom_call.1} parent=11 // pred_check
          %p289 = pneg %p195
        $region30: #{tpu_custom_call.1} parent=11 // pred_check_branch
          %291 = sbr.rel (%p289) target = $region32
        $region31: #{tpu_custom_call.1} parent=11 // pred_region
          %s293 = ssub.s32 512, 512
          %294 = vsyncadd [#allocation13], %s293
          %s295 = sshll.u32 [#allocation14], 4
          %s296 = int_to_ptr.vmem [resolvable:$true] %s295
          %301 = dma.hbm_to_vmem [thread:$0]  %s6, 512, %s296, [#allocation13], 128, 128, 8
        $region32: #{tpu_custom_call.1} parent=11 // pred_fallthru
          _
        // Predicated region
        $region33: #{tpu_custom_call.1} parent=11 // pred_check
          %p302 = pneg %p216
        $region34: #{tpu_custom_call.1} parent=11 // pred_check_branch
          %304 = sbr.rel (%p302) target = $region36
        $region35: #{tpu_custom_call.1} parent=11 // pred_region
          _
        $region36: #{tpu_custom_call.1} parent=11 // pred_fallthru
          _
      $region12: #{tpu_custom_call.1} parent=5 // pred_fallthru
        _
      %p305 = scmp.lt.s32.totalorder %s24, 4
      // Predicated region
      $region37: #{tpu_custom_call.1} parent=5 // pred_check
        %p306 = pneg %p305
      $region38: #{tpu_custom_call.1} parent=5 // pred_check_branch
        %308 = sbr.rel (%p306) target = $region40
      $region39: #{tpu_custom_call.1} parent=5 // pred_region
        // Predicated region
        $region41: #{tpu_custom_call.1} parent=39 // pred_check
          %p309 = pneg %p56
        $region42: #{tpu_custom_call.1} parent=39 // pred_check_branch
          %311 = sbr.rel (%p309) target = $region44
        $region43: #{tpu_custom_call.1} parent=39 // pred_region
          %s312 = sand.u32 %s46, 1
          %s313 = scalar_lea.sflag [#allocation7], %s312
          %s314 = sand.u32 %s46, 1
          %s315 = smul.addr %s314, 16
          %s316 = scalar_lea.vmem [#allocation6], %s315
          %s318 = ssub.s32 256, 256
          %319 = vsyncadd %s313, %s318
          %s320 = smul.addr %s31, 2
          %s321 = smul.addr %s320, 128
          %s322 = scalar_lea.hbm %s0, %s321
          %s323 = sshll.u32 %s316, 4
          %s324 = int_to_ptr.vmem [resolvable:$true] %s323
          %329 = dma.hbm_to_vmem [thread:$0]  %s322, 256, %s324, %s313, 128, 128, 8
        $region44: #{tpu_custom_call.1} parent=39 // pred_fallthru
          _
        // Predicated region
        $region45: #{tpu_custom_call.1} parent=39 // pred_check
          %p330 = pneg %p84
        $region46: #{tpu_custom_call.1} parent=39 // pred_check_branch
          %332 = sbr.rel (%p330) target = $region48
        $region47: #{tpu_custom_call.1} parent=39 // pred_region
          %s333 = sand.u32 %s24, 1
          %s334 = scalar_lea.sflag [#allocation10], %s333
          %s335 = sand.u32 %s74, 1
          %s336 = smul.addr %s335, 8
          %s337 = scalar_lea.vmem [#allocation9], %s336
          %s339 = ssub.s32 128, 128
          %340 = vsyncadd %s334, %s339
          %s341 = smul.addr %s31, 2
          %s342 = sadd.s32 %s32, %s341
          %s343 = smul.addr %s342, 128
          %s344 = scalar_lea.hbm %s1, %s343
          %s346 = sshll.u32 %s337, 4
          %s347 = int_to_ptr.vmem [resolvable:$true] %s346
          %349 = dma.hbm_to_vmem [thread:$0]  %s344, 128, %s347, %s334
        $region48: #{tpu_custom_call.1} parent=39 // pred_fallthru
          _
      $region40: #{tpu_custom_call.1} parent=5 // pred_fallthru
        _
      %p350 = scmp.le.s32.totalorder 1, %s24
      %p351 = scmp.lt.s32.totalorder %s24, 5
      %p352 = pnand %p350, %p351
      %p353 = pneg %p352
      // Predicated region
      $region49: #{tpu_custom_call.1} parent=5 // pred_check
        _
      $region50: #{tpu_custom_call.1} parent=5 // pred_check_branch
        %355 = sbr.rel (%p352) target = $region52
      $region51: #{tpu_custom_call.1} parent=5 // pred_region
        %s356 = ssub.s32 %s24, 1
        %s357 = sand.u32 %s49, 1
        %s358 = scalar_lea.sflag [#allocation7], %s357
        %s359 = sand.u32 %s49, 1
        %s360 = smul.addr %s359, 16
        %s361 = scalar_lea.vmem [#allocation6], %s360
        // Predicated region
        $region53: #{tpu_custom_call.1} parent=51 // pred_check
          %p362 = pneg %p62
        $region54: #{tpu_custom_call.1} parent=51 // pred_check_branch
          %364 = sbr.rel (%p362) target = $region56
        $region55: #{tpu_custom_call.1} parent=51 // pred_region
          %365 = dma.done %s358, 256
        $region56: #{tpu_custom_call.1} parent=51 // pred_fallthru
          _
        %s366 = sand.u32 %s29, 1
        %s367 = scalar_lea.sflag [#allocation10], %s366
        %s368 = sand.u32 %s77, 1
        %s369 = smul.addr %s368, 8
        %s370 = scalar_lea.vmem [#allocation9], %s369
        // Predicated region
        $region57: #{tpu_custom_call.1} parent=51 // pred_check
          %p371 = pneg %p90
        $region58: #{tpu_custom_call.1} parent=51 // pred_check_branch
          %373 = sbr.rel (%p371) target = $region60
        $region59: #{tpu_custom_call.1} parent=51 // pred_region
          %374 = dma.done %s367, 128
        $region60: #{tpu_custom_call.1} parent=51 // pred_fallthru
          _
        // Predicated region
        $region61: #{tpu_custom_call.1} parent=51 // pred_check
          %p375 = pneg %p111
        $region62: #{tpu_custom_call.1} parent=51 // pred_check_branch
          %377 = sbr.rel (%p375) target = $region64
        $region63: #{tpu_custom_call.1} parent=51 // pred_region
          %378 = dma.done [#allocation10], 512
        $region64: #{tpu_custom_call.1} parent=51 // pred_fallthru
          _
        // Predicated region
        $region65: #{tpu_custom_call.1} parent=51 // pred_check
          %p379 = pneg %p132
        $region66: #{tpu_custom_call.1} parent=51 // pred_check_branch
          %381 = sbr.rel (%p379) target = $region68
        $region67: #{tpu_custom_call.1} parent=51 // pred_region
          %382 = dma.done [#allocation13], 512
        $region68: #{tpu_custom_call.1} parent=51 // pred_fallthru
          _
        // Predicated region
        $region69: #{tpu_custom_call.1} parent=51 // pred_check
          %p383 = pneg %p195
        $region70: #{tpu_custom_call.1} parent=51 // pred_check_branch
          %385 = sbr.rel (%p383) target = $region72
        $region71: #{tpu_custom_call.1} parent=51 // pred_region
          %386 = dma.done [#allocation13], 512
        $region72: #{tpu_custom_call.1} parent=51 // pred_fallthru
          _
        %s387 = sand.u32 %s49, 1
        %s388 = scalar_lea.sflag [#allocation7], %s387
        %s389 = sand.u32 %s49, 1
        %s390 = smul.addr %s389, 16
        %s391 = scalar_lea.vmem [#allocation6], %s390
        %p392 = pneg %p62
        %p393 = pneg %p59
        %s394 = sand.u32 %s29, 1
        %s395 = scalar_lea.sflag [#allocation10], %s394
        %s396 = sand.u32 %s77, 1
        %s397 = smul.addr %s396, 8
        %s398 = scalar_lea.vmem [#allocation9], %s397
        %p399 = pneg %p90
        %p400 = pneg %p87
        %p401 = pneg %p111
        %p402 = pneg %p108
        %p403 = pneg %p132
        %p404 = pneg %p129
        %p405 = pneg %p153
        %p406 = pneg %p150
        %p407 = pneg %p174
        %p408 = pneg %p171
        %p409 = pneg %p195
        %p410 = pneg %p192
        %p411 = pneg %p216
        %p412 = pneg %p213
        %p413 = pneg %p242
        %p414 = pneg %p239
        %s415 = sand.u32 %s229, 1
        %s416 = scalar_lea.sflag [#allocation8], %s415
        %s417 = sand.u32 %s229, 1
        %s418 = smul.addr %s417, 16
        %s419 = scalar_lea.vmem [#allocation15], %s418
        %s420 = smul.u32 %s34, 8
        %p421 = scmp.eq.s32.totalorder %s34, 0
        // Predicated region
        $region73: #{tpu_custom_call.1} parent=51 // pred_check
          %p422 = pneg %p421
        $region74: #{tpu_custom_call.1} parent=51 // pred_check_branch
          %424 = sbr.rel (%p422) target = $region76
        $region75: #{tpu_custom_call.1} parent=51 // pred_region
          %v425 = vld [vmem:[%s361] sm:$0xff]
          %v426 = vld [vmem:[%s361 + $0x8] sm:$0xff]
          %v427 = vld [vmem:[#allocation11] sm:$0xff]
          %v428 = vld [vmem:[#allocation11 + $0x8] sm:$0xff]
          %v429 = vld [vmem:[#allocation11 + $0x10] sm:$0xff]
          %v430 = vld [vmem:[#allocation11 + $0x18] sm:$0xff]
          %v431 = vld [vmem:[%s4] sm:$0x1]
          %v433 = vlaneseq
          %v434 = vshrl.u32 %v433, 7
          %v435 = vsub.s32 0, %v434
          %v436 = vrot.slane %v431, %v435
          %vm438 = vcmask 261120
          %v440 = vsel %vm438, %v425, 0
          %v443 = vsel %vm438, %v426, 0
          %445 = vmatprep.subr.mxu0 0.0
          %446 = vmatpush1.msra.mxu0 %v427
          %447 = vmatprep.subr.mxu0 0.0
          %448 = vmatpush1.msra.mxu0 %v428
          %449 = vmatprep.subr.mxu0 0.0
          %450 = vmatpush1.msra.mxu0 %v429
          %451 = vmatprep.subr.mxu0 0.0
          %452 = vmatpush1.msra.mxu0 %v430
          %453 = vmatprep.subr.mxu0 0.0
          %454 = vmatpush1.msra.mxu0 0.0
          %455 = vmatprep.subr.mxu0 0.0
          %456 = vmatpush1.msra.mxu0 0.0
          %457 = vmatprep.subr.mxu0 0.0
          %458 = vmatpush1.msra.mxu0 0.0
          %459 = vmatprep.subr.mxu0 0.0
          %460 = vmatpush1.msra.mxu0 0.0
          %461 = vmatprep.subr.mxu0 0.0
          %462 = vmatpush1.msra.mxu0 0.0
          %463 = vmatprep.subr.mxu0 0.0
          %464 = vmatpush1.msra.mxu0 0.0
          %465 = vmatprep.subr.mxu0 0.0
          %466 = vmatpush1.msra.mxu0 0.0
          %467 = vmatprep.subr.mxu0 0.0
          %468 = vmatpush1.msra.mxu0 0.0
          %469 = vmatprep.subr.mxu0 0.0
          %470 = vmatpush1.msra.mxu0 0.0
          %471 = vmatprep.subr.mxu0 0.0
          %472 = vmatpush1.msra.mxu0 0.0
          %473 = vmatprep.subr.mxu0 0.0
          %474 = vmatpush1.msra.mxu0 0.0
          %475 = vmatprep.subr.mxu0 0.0
          %476 = vmatpush1.msra.mxu0 0.0
          %477 = vmatprep.subr.mxu0 0.0
          %478 = vmatpush1.msra.mxu0 0.0
          %479 = vmatprep.subr.mxu0 0.0
          %480 = vmatpush1.msra.mxu0 0.0
          %481 = vmatprep.subr.mxu0 0.0
          %482 = vmatpush1.msra.mxu0 0.0
          %483 = vmatprep.subr.mxu0 0.0
          %484 = vmatpush1.msra.mxu0 0.0
          %485 = vmatprep.subr.mxu0 0.0
          %486 = vmatpush1.msra.mxu0 0.0
          %487 = vmatprep.subr.mxu0 0.0
          %488 = vmatpush1.msra.mxu0 0.0
          %489 = vmatprep.subr.mxu0 0.0
          %490 = vmatpush1.msra.mxu0 0.0
          %491 = vmatprep.subr.mxu0 0.0
          %492 = vmatpush1.msra.mxu0 0.0
          %493 = vmatprep.subr.mxu0 0.0
          %494 = vmatpush1.msra.mxu0 0.0
          %495 = vmatprep.subr.mxu0 0.0
          %496 = vmatpush1.msra.mxu0 0.0
          %497 = vmatprep.subr.mxu0 0.0
          %498 = vmatpush1.msra.mxu0 0.0
          %499 = vmatprep.subr.mxu0 0.0
          %500 = vmatpush1.msra.mxu0 0.0
          %501 = vmatprep.subr.mxu0 0.0
          %502 = vmatpush1.msra.mxu0 0.0
          %503 = vmatprep.subr.mxu0 0.0
          %504 = vmatpush1.msra.mxu0 0.0
          %505 = vmatprep.subr.mxu0 0.0
          %506 = vmatpush1.msra.mxu0 0.0
          %507 = vmatprep.subr.mxu0 0.0
          %508 = vmatpush1.msra.mxu0 0.0
          %509 = vmatprep.mubr.f32.mxu0 0.0
          %510 = vmatmul.mubr.f32.gmra.mrb[0].mxu0 %v440
          %v511 = vpop.f32.mrb[0].mxu0
          %v512 = vadd.f32 %v436, %v511
          %v513 = vpop.f32.mrb[0].mxu0
          %514 = vmatprep.mubr.f32.mxu0 0.0
          %515 = vmatmul.mubr.f32.gmra.mrb[0].mxu0 %v443
          %v516 = vpop.f32.mrb[0].mxu0
          %v517 = vadd.f32 %v436, %v516
          %v518 = vpop.f32.mrb[0].mxu0
          %519 = vdwg.mxu0
          %520 = vst.msk [vmem:[#allocation2] sm:$0xff] %vm438, %v512
          %521 = vst.msk [vmem:[#allocation2 + $0x8] sm:$0xff] %vm438, %v517
          %vm522 = vcmask 7168
          %523 = vst.msk [vmem:[#allocation3] sm:$0xff] %vm522, -1e+30
          %524 = vst.msk [vmem:[#allocation3 + $0x8] sm:$0xff] %vm522, -1e+30
          %525 = vst.msk [vmem:[#allocation3 + $0x10] sm:$0xff] %vm522, -1e+30
          %526 = vst.msk [vmem:[#allocation3 + $0x18] sm:$0xff] %vm522, -1e+30
          %527 = vst.msk [vmem:[#allocation3 + $0x20] sm:$0xff] %vm522, -1e+30
          %528 = vst.msk [vmem:[#allocation3 + $0x28] sm:$0xff] %vm522, -1e+30
          %529 = vst.msk [vmem:[#allocation3 + $0x30] sm:$0xff] %vm522, -1e+30
          %530 = vst.msk [vmem:[#allocation3 + $0x38] sm:$0xff] %vm522, -1e+30
          %531 = vst.msk [vmem:[#allocation4] sm:$0xff] %vm522, 0.0
          %532 = vst.msk [vmem:[#allocation4 + $0x8] sm:$0xff] %vm522, 0.0
          %533 = vst.msk [vmem:[#allocation4 + $0x10] sm:$0xff] %vm522, 0.0
          %534 = vst.msk [vmem:[#allocation4 + $0x18] sm:$0xff] %vm522, 0.0
          %535 = vst.msk [vmem:[#allocation4 + $0x20] sm:$0xff] %vm522, 0.0
          %536 = vst.msk [vmem:[#allocation4 + $0x28] sm:$0xff] %vm522, 0.0
          %537 = vst.msk [vmem:[#allocation4 + $0x30] sm:$0xff] %vm522, 0.0
          %538 = vst.msk [vmem:[#allocation4 + $0x38] sm:$0xff] %vm522, 0.0
          %vm539 = vcmask 64512
          %540 = vst.msk [vmem:[#allocation5] sm:$0xff] %vm539, 0.0
          %541 = vst.msk [vmem:[#allocation5 + $0x8] sm:$0xff] %vm539, 0.0
          %542 = vst.msk [vmem:[#allocation5 + $0x10] sm:$0xff] %vm539, 0.0
          %543 = vst.msk [vmem:[#allocation5 + $0x18] sm:$0xff] %vm539, 0.0
          %544 = vst.msk [vmem:[#allocation5 + $0x20] sm:$0xff] %vm539, 0.0
          %545 = vst.msk [vmem:[#allocation5 + $0x28] sm:$0xff] %vm539, 0.0
          %546 = vst.msk [vmem:[#allocation5 + $0x30] sm:$0xff] %vm539, 0.0
          %547 = vst.msk [vmem:[#allocation5 + $0x38] sm:$0xff] %vm539, 0.0
        $region76: #{tpu_custom_call.1} parent=51 // pred_fallthru
          _
        %v548 = vld [vmem:[%s370] sm:$0xff]
        %v549 = vld [vmem:[#allocation12] sm:$0xff]
        %v550 = vld [vmem:[#allocation12 + $0x8] sm:$0xff]
        %v551 = vld [vmem:[#allocation12 + $0x10] sm:$0xff]
        %v552 = vld [vmem:[#allocation12 + $0x18] sm:$0xff]
        %v553 = vld [vmem:[%s5] sm:$0x1]
        %v555 = vlaneseq
        %v556 = vshrl.u32 %v555, 7
        %v557 = vsub.s32 0, %v556
        %v558 = vrot.slane %v553, %v557
        %vm560 = vcmask 261120
        %v562 = vsel %vm560, %v548, 0
        %564 = vmatprep.subr.mxu0 0.0
        %565 = vmatpush1.msra.mxu0 %v549
        %566 = vmatprep.subr.mxu0 0.0
        %567 = vmatpush1.msra.mxu0 %v550
        %568 = vmatprep.subr.mxu0 0.0
        %569 = vmatpush1.msra.mxu0 %v551
        %570 = vmatprep.subr.mxu0 0.0
        %571 = vmatpush1.msra.mxu0 %v552
        %572 = vmatprep.subr.mxu0 0.0
        %573 = vmatpush1.msra.mxu0 0.0
        %574 = vmatprep.subr.mxu0 0.0
        %575 = vmatpush1.msra.mxu0 0.0
        %576 = vmatprep.subr.mxu0 0.0
        %577 = vmatpush1.msra.mxu0 0.0
        %578 = vmatprep.subr.mxu0 0.0
        %579 = vmatpush1.msra.mxu0 0.0
        %580 = vmatprep.subr.mxu0 0.0
        %581 = vmatpush1.msra.mxu0 0.0
        %582 = vmatprep.subr.mxu0 0.0
        %583 = vmatpush1.msra.mxu0 0.0
        %584 = vmatprep.subr.mxu0 0.0
        %585 = vmatpush1.msra.mxu0 0.0
        %586 = vmatprep.subr.mxu0 0.0
        %587 = vmatpush1.msra.mxu0 0.0
        %588 = vmatprep.subr.mxu0 0.0
        %589 = vmatpush1.msra.mxu0 0.0
        %590 = vmatprep.subr.mxu0 0.0
        %591 = vmatpush1.msra.mxu0 0.0
        %592 = vmatprep.subr.mxu0 0.0
        %593 = vmatpush1.msra.mxu0 0.0
        %594 = vmatprep.subr.mxu0 0.0
        %595 = vmatpush1.msra.mxu0 0.0
        %596 = vmatprep.subr.mxu0 0.0
        %597 = vmatpush1.msra.mxu0 0.0
        %598 = vmatprep.subr.mxu0 0.0
        %599 = vmatpush1.msra.mxu0 0.0
        %600 = vmatprep.subr.mxu0 0.0
        %601 = vmatpush1.msra.mxu0 0.0
        %602 = vmatprep.subr.mxu0 0.0
        %603 = vmatpush1.msra.mxu0 0.0
        %604 = vmatprep.subr.mxu0 0.0
        %605 = vmatpush1.msra.mxu0 0.0
        %606 = vmatprep.subr.mxu0 0.0
        %607 = vmatpush1.msra.mxu0 0.0
        %608 = vmatprep.subr.mxu0 0.0
        %609 = vmatpush1.msra.mxu0 0.0
        %610 = vmatprep.subr.mxu0 0.0
        %611 = vmatpush1.msra.mxu0 0.0
        %612 = vmatprep.subr.mxu0 0.0
        %613 = vmatpush1.msra.mxu0 0.0
        %614 = vmatprep.subr.mxu0 0.0
        %615 = vmatpush1.msra.mxu0 0.0
        %616 = vmatprep.subr.mxu0 0.0
        %617 = vmatpush1.msra.mxu0 0.0
        %618 = vmatprep.subr.mxu0 0.0
        %619 = vmatpush1.msra.mxu0 0.0
        %620 = vmatprep.subr.mxu0 0.0
        %621 = vmatpush1.msra.mxu0 0.0
        %622 = vmatprep.subr.mxu0 0.0
        %623 = vmatpush1.msra.mxu0 0.0
        %624 = vmatprep.subr.mxu0 0.0
        %625 = vmatpush1.msra.mxu0 0.0
        %626 = vmatprep.subr.mxu0 0.0
        %627 = vmatpush1.msra.mxu0 0.0
        %628 = vmatprep.mubr.f32.mxu0 0.0
        %629 = vmatmul.mubr.f32.gmra.mrb[0].mxu0 %v562
        %v630 = vpop.f32.mrb[0].mxu0
        %v631 = vadd.f32 %v558, %v630
        %v632 = vpop.f32.mrb[0].mxu0
        %633 = vdwg.mxu0
        %p634 = scmp.lt.s32.totalorder %s420, 8
        // Predicated region
        $region77: #{tpu_custom_call.1} parent=51 // pred_check
          %p635 = pneg %p634
        $region78: #{tpu_custom_call.1} parent=51 // pred_check_branch
          %637 = sbr.rel (%p635) target = $region80
        $region79: #{tpu_custom_call.1} parent=51 // pred_region
          %v638 = vlaneseq
          %v639 = vshrl.u32 %v638, 7
          %v640 = vlaneseq
          %v641 = vand.u32 %v640, 127
          %v642 = vstv %s420
          %v643 = vadd.s32 %v642, %v641
          %vm644 = vcmp.le.s32.totalorder %v643, %v639
          %v645 = vld [vmem:[#allocation2] sm:$0xff]
          %vm646 = vcmask 64512
          %v648 = vsel %vm646, %v645, 0
          %v651 = vsel %vm646, %v631, 0
          %653 = vmatprep.subr.mxu0 0.0
          %654 = vmatpush1.xpose.msra.mxu0 %v651
          %655 = vmatprep.subr.mxu0 0.0
          %656 = vmatpush1.xpose.msra.mxu0 0.0
          %657 = vmatprep.subr.mxu0 0.0
          %658 = vmatpush1.xpose.msra.mxu0 0.0
          %659 = vmatprep.subr.mxu0 0.0
          %660 = vmatpush1.xpose.msra.mxu0 0.0
          %661 = vmatprep.subr.mxu0 0.0
          %662 = vmatpush1.xpose.msra.mxu0 0.0
          %663 = vmatprep.subr.mxu0 0.0
          %664 = vmatpush1.xpose.msra.mxu0 0.0
          %665 = vmatprep.subr.mxu0 0.0
          %666 = vmatpush1.xpose.msra.mxu0 0.0
          %667 = vmatprep.subr.mxu0 0.0
          %668 = vmatpush1.xpose.msra.mxu0 0.0
          %669 = vmatprep.subr.mxu0 0.0
          %670 = vmatpush1.xpose.msra.mxu0 0.0
          %671 = vmatprep.subr.mxu0 0.0
          %672 = vmatpush1.xpose.msra.mxu0 0.0
          %673 = vmatprep.subr.mxu0 0.0
          %674 = vmatpush1.xpose.msra.mxu0 0.0
          %675 = vmatprep.subr.mxu0 0.0
          %676 = vmatpush1.xpose.msra.mxu0 0.0
          %677 = vmatprep.subr.mxu0 0.0
          %678 = vmatpush1.xpose.msra.mxu0 0.0
          %679 = vmatprep.subr.mxu0 0.0
          %680 = vmatpush1.xpose.msra.mxu0 0.0
          %681 = vmatprep.subr.mxu0 0.0
          %682 = vmatpush1.xpose.msra.mxu0 0.0
          %683 = vmatprep.subr.mxu0 0.0
          %684 = vmatpush1.xpose.msra.mxu0 0.0
          %685 = vmatprep.subr.mxu0 0.0
          %686 = vmatpush1.xpose.msra.mxu0 0.0
          %687 = vmatprep.subr.mxu0 0.0
          %688 = vmatpush1.xpose.msra.mxu0 0.0
          %689 = vmatprep.subr.mxu0 0.0
          %690 = vmatpush1.xpose.msra.mxu0 0.0
          %691 = vmatprep.subr.mxu0 0.0
          %692 = vmatpush1.xpose.msra.mxu0 0.0
          %693 = vmatprep.subr.mxu0 0.0
          %694 = vmatpush1.xpose.msra.mxu0 0.0
          %695 = vmatprep.subr.mxu0 0.0
          %696 = vmatpush1.xpose.msra.mxu0 0.0
          %697 = vmatprep.subr.mxu0 0.0
          %698 = vmatpush1.xpose.msra.mxu0 0.0
          %699 = vmatprep.subr.mxu0 0.0
          %700 = vmatpush1.xpose.msra.mxu0 0.0
          %701 = vmatprep.subr.mxu0 0.0
          %702 = vmatpush1.xpose.msra.mxu0 0.0
          %703 = vmatprep.subr.mxu0 0.0
          %704 = vmatpush1.xpose.msra.mxu0 0.0
          %705 = vmatprep.subr.mxu0 0.0
          %706 = vmatpush1.xpose.msra.mxu0 0.0
          %707 = vmatprep.subr.mxu0 0.0
          %708 = vmatpush1.xpose.msra.mxu0 0.0
          %709 = vmatprep.subr.mxu0 0.0
          %710 = vmatpush1.xpose.msra.mxu0 0.0
          %711 = vmatprep.subr.mxu0 0.0
          %712 = vmatpush1.xpose.msra.mxu0 0.0
          %713 = vmatprep.subr.mxu0 0.0
          %714 = vmatpush1.xpose.msra.mxu0 0.0
          %715 = vmatprep.subr.mxu0 0.0
          %716 = vmatpush1.xpose.msra.mxu0 0.0
          %717 = vmatprep.mubr.f32.mxu0 0.0
          %718 = vmatmul.mubr.f32.gmra.mrb[0].mxu0 %v648
          %v719 = vpop.f32.mrb[0].mxu0
          %v720 = vadd.f32 0.0, %v719
          %v721 = vpop.f32.mrb[0].mxu0
          %722 = vdwg.mxu0
          %v723 = vmul.f32 %v720, 0.35355338
          %v724 = vsel %vm644, %v723, -1e+30
          %v725 = vld [vmem:[#allocation3] sm:$0xff]
          %v726 = vsel %vm646, %v724, -inf
          %727 = vmax.xlane.f32.xlu0 %v726
          %v728 = vpop.xlane.xlu0 %727
          %v729 = vmax.f32 %v725, %v728
          %v730 = vsub.f32 %v725, %v729
          %v731 = vmul.f32 %v730, 1.442695
          %v732 = vpow.pop %v731
          %734 = vset.pattern.permute.xlu0 0
          %735 = vperm.xlu0 %734, %v729
          %v736 = vpop.permute.xlu0 %735
          %v738 = vsub.f32 %v724, %v736
          %v739 = vmul.f32 %v738, 1.442695
          %v740 = vpow.pop %v739
          %v741 = vld [vmem:[#allocation4] sm:$0xff]
          %v742 = vmul.f32 %v732, %v741
          %v743 = vsel %vm646, %v740, 0.0
          %744 = vadd.xlane.f32.xlu0 %v743
          %v745 = vpop.xlane.xlu0 %744
          %v746 = vadd.f32 %v742, %v745
          %vm747 = vcmask 7168
          %748 = vst.msk [vmem:[#allocation4] sm:$0xff] %vm747, %v746
          %v749 = vld [vmem:[#allocation5] sm:$0xff]
          %751 = vset.pattern.permute.xlu0 0
          %752 = vperm.xlu0 %751, %v732
          %v753 = vpop.permute.xlu0 %752
          %v755 = vmul.f32 %v753, %v749
          %756 = vrot.lane.b32.xlu0 %v631, 96
          %v757 = vpop.permute.xlu0 %756
          %v760 = vsel %vm646, %v740, 0
          %762 = vmatprep.subr.mxu0 0.0
          %763 = vmatpush1.msra.mxu0 %v757
          %764 = vmatprep.subr.mxu0 0.0
          %765 = vmatpush1.msra.mxu0 0.0
          %766 = vmatprep.subr.mxu0 0.0
          %767 = vmatpush1.msra.mxu0 0.0
          %768 = vmatprep.subr.mxu0 0.0
          %769 = vmatpush1.msra.mxu0 0.0
          %770 = vmatprep.subr.mxu0 0.0
          %771 = vmatpush1.msra.mxu0 0.0
          %772 = vmatprep.subr.mxu0 0.0
          %773 = vmatpush1.msra.mxu0 0.0
          %774 = vmatprep.subr.mxu0 0.0
          %775 = vmatpush1.msra.mxu0 0.0
          %776 = vmatprep.subr.mxu0 0.0
          %777 = vmatpush1.msra.mxu0 0.0
          %778 = vmatprep.subr.mxu0 0.0
          %779 = vmatpush1.msra.mxu0 0.0
          %780 = vmatprep.subr.mxu0 0.0
          %781 = vmatpush1.msra.mxu0 0.0
          %782 = vmatprep.subr.mxu0 0.0
          %783 = vmatpush1.msra.mxu0 0.0
          %784 = vmatprep.subr.mxu0 0.0
          %785 = vmatpush1.msra.mxu0 0.0
          %786 = vmatprep.subr.mxu0 0.0
          %787 = vmatpush1.msra.mxu0 0.0
          %788 = vmatprep.subr.mxu0 0.0
          %789 = vmatpush1.msra.mxu0 0.0
          %790 = vmatprep.subr.mxu0 0.0
          %791 = vmatpush1.msra.mxu0 0.0
          %792 = vmatprep.subr.mxu0 0.0
          %793 = vmatpush1.msra.mxu0 0.0
          %794 = vmatprep.subr.mxu0 0.0
          %795 = vmatpush1.msra.mxu0 0.0
          %796 = vmatprep.subr.mxu0 0.0
          %797 = vmatpush1.msra.mxu0 0.0
          %798 = vmatprep.subr.mxu0 0.0
          %799 = vmatpush1.msra.mxu0 0.0
          %800 = vmatprep.subr.mxu0 0.0
          %801 = vmatpush1.msra.mxu0 0.0
          %802 = vmatprep.subr.mxu0 0.0
          %803 = vmatpush1.msra.mxu0 0.0
          %804 = vmatprep.subr.mxu0 0.0
          %805 = vmatpush1.msra.mxu0 0.0
          %806 = vmatprep.subr.mxu0 0.0
          %807 = vmatpush1.msra.mxu0 0.0
          %808 = vmatprep.subr.mxu0 0.0
          %809 = vmatpush1.msra.mxu0 0.0
          %810 = vmatprep.subr.mxu0 0.0
          %811 = vmatpush1.msra.mxu0 0.0
          %812 = vmatprep.subr.mxu0 0.0
          %813 = vmatpush1.msra.mxu0 0.0
          %814 = vmatprep.subr.mxu0 0.0
          %815 = vmatpush1.msra.mxu0 0.0
          %816 = vmatprep.subr.mxu0 0.0
          %817 = vmatpush1.msra.mxu0 0.0
          %818 = vmatprep.subr.mxu0 0.0
          %819 = vmatpush1.msra.mxu0 0.0
          %820 = vmatprep.subr.mxu0 0.0
          %821 = vmatpush1.msra.mxu0 0.0
          %822 = vmatprep.subr.mxu0 0.0
          %823 = vmatpush1.msra.mxu0 0.0
          %824 = vmatprep.subr.mxu0 0.0
          %825 = vmatpush1.msra.mxu0 0.0
          %826 = vmatprep.mubr.f32.mxu0 0.0
          %827 = vmatmul.mubr.f32.gmra.mrb[0].mxu0 %v760
          %v828 = vpop.f32.mrb[0].mxu0
          %v829 = vadd.f32 0.0, %v828
          %v830 = vpop.f32.mrb[0].mxu0
          %831 = vdwg.mxu0
          %v832 = vadd.f32 %v755, %v829
          %833 = vst.msk [vmem:[#allocation5] sm:$0xff] %vm646, %v832
          %834 = vst.msk [vmem:[#allocation3] sm:$0xff] %vm747, %v729
          %835 = vrot.lane.b32.xlu0 %v645, 120
          %v836 = vpop.permute.xlu0 %835
          %837 = vrot.lane.b32.xlu0 %v631, 120
          %v838 = vpop.permute.xlu0 %837
          %v839 = vsel %vm646, %v836, 0
          %v841 = vsel %vm646, %v838, 0
          %843 = vmatprep.subr.mxu0 0.0
          %844 = vmatpush1.xpose.msra.mxu0 %v841
          %845 = vmatprep.subr.mxu0 0.0
          %846 = vmatpush1.xpose.msra.mxu0 0.0
          %847 = vmatprep.subr.mxu0 0.0
          %848 = vmatpush1.xpose.msra.mxu0 0.0
          %849 = vmatprep.subr.mxu0 0.0
          %850 = vmatpush1.xpose.msra.mxu0 0.0
          %851 = vmatprep.subr.mxu0 0.0
          %852 = vmatpush1.xpose.msra.mxu0 0.0
          %853 = vmatprep.subr.mxu0 0.0
          %854 = vmatpush1.xpose.msra.mxu0 0.0
          %855 = vmatprep.subr.mxu0 0.0
          %856 = vmatpush1.xpose.msra.mxu0 0.0
          %857 = vmatprep.subr.mxu0 0.0
          %858 = vmatpush1.xpose.msra.mxu0 0.0
          %859 = vmatprep.subr.mxu0 0.0
          %860 = vmatpush1.xpose.msra.mxu0 0.0
          %861 = vmatprep.subr.mxu0 0.0
          %862 = vmatpush1.xpose.msra.mxu0 0.0
          %863 = vmatprep.subr.mxu0 0.0
          %864 = vmatpush1.xpose.msra.mxu0 0.0
          %865 = vmatprep.subr.mxu0 0.0
          %866 = vmatpush1.xpose.msra.mxu0 0.0
          %867 = vmatprep.subr.mxu0 0.0
          %868 = vmatpush1.xpose.msra.mxu0 0.0
          %869 = vmatprep.subr.mxu0 0.0
          %870 = vmatpush1.xpose.msra.mxu0 0.0
          %871 = vmatprep.subr.mxu0 0.0
          %872 = vmatpush1.xpose.msra.mxu0 0.0
          %873 = vmatprep.subr.mxu0 0.0
          %874 = vmatpush1.xpose.msra.mxu0 0.0
          %875 = vmatprep.subr.mxu0 0.0
          %876 = vmatpush1.xpose.msra.mxu0 0.0
          %877 = vmatprep.subr.mxu0 0.0
          %878 = vmatpush1.xpose.msra.mxu0 0.0
          %879 = vmatprep.subr.mxu0 0.0
          %880 = vmatpush1.xpose.msra.mxu0 0.0
          %881 = vmatprep.subr.mxu0 0.0
          %882 = vmatpush1.xpose.msra.mxu0 0.0
          %883 = vmatprep.subr.mxu0 0.0
          %884 = vmatpush1.xpose.msra.mxu0 0.0
          %885 = vmatprep.subr.mxu0 0.0
          %886 = vmatpush1.xpose.msra.mxu0 0.0
          %887 = vmatprep.subr.mxu0 0.0
          %888 = vmatpush1.xpose.msra.mxu0 0.0
          %889 = vmatprep.subr.mxu0 0.0
          %890 = vmatpush1.xpose.msra.mxu0 0.0
          %891 = vmatprep.subr.mxu0 0.0
          %892 = vmatpush1.xpose.msra.mxu0 0.0
          %893 = vmatprep.subr.mxu0 0.0
          %894 = vmatpush1.xpose.msra.mxu0 0.0
          %895 = vmatprep.subr.mxu0 0.0
          %896 = vmatpush1.xpose.msra.mxu0 0.0
          %897 = vmatprep.subr.mxu0 0.0
          %898 = vmatpush1.xpose.msra.mxu0 0.0
          %899 = vmatprep.subr.mxu0 0.0
          %900 = vmatpush1.xpose.msra.mxu0 0.0
          %901 = vmatprep.subr.mxu0 0.0
          %902 = vmatpush1.xpose.msra.mxu0 0.0
          %903 = vmatprep.subr.mxu0 0.0
          %904 = vmatpush1.xpose.msra.mxu0 0.0
          %905 = vmatprep.subr.mxu0 0.0
          %906 = vmatpush1.xpose.msra.mxu0 0.0
          %907 = vmatprep.mubr.f32.mxu0 0.0
          %908 = vmatmul.mubr.f32.gmra.mrb[0].mxu0 %v839
          %v909 = vpop.f32.mrb[0].mxu0
          %v910 = vadd.f32 0.0, %v909
          %v911 = vpop.f32.mrb[0].mxu0
          %912 = vdwg.mxu0
          %v913 = vmul.f32 %v910, 0.35355338
          %v914 = vsel %vm644, %v913, -1e+30
          %s915 = scalar_lea.vmem [#allocation3], 16
          %v916 = vld [vmem:[%s915] sm:$0xff]
          %v917 = vsel %vm646, %v914, -inf
          %918 = vmax.xlane.f32.xlu0 %v917
          %v919 = vpop.xlane.xlu0 %918
          %v920 = vmax.f32 %v916, %v919
          %v921 = vsub.f32 %v916, %v920
          %v922 = vmul.f32 %v921, 1.442695
          %v923 = vpow.pop %v922
          %925 = vset.pattern.permute.xlu0 0
          %926 = vperm.xlu0 %925, %v920
          %v927 = vpop.permute.xlu0 %926
          %v929 = vsub.f32 %v914, %v927
          %v930 = vmul.f32 %v929, 1.442695
          %v931 = vpow.pop %v930
          %s932 = scalar_lea.vmem [#allocation4], 16
          %v933 = vld [vmem:[%s932] sm:$0xff]
          %v934 = vmul.f32 %v923, %v933
          %v935 = vsel %vm646, %v931, 0.0
          %936 = vadd.xlane.f32.xlu0 %v935
          %v937 = vpop.xlane.xlu0 %936
          %v938 = vadd.f32 %v934, %v937
          %939 = vst.msk [vmem:[%s932] sm:$0xff] %vm747, %v938
          %s940 = scalar_lea.vmem [#allocation5], 16
          %v941 = vld [vmem:[%s940] sm:$0xff]
          %943 = vset.pattern.permute.xlu0 0
          %944 = vperm.xlu0 %943, %v923
          %v945 = vpop.permute.xlu0 %944
          %v947 = vmul.f32 %v945, %v941
          %948 = vrot.lane.b32.xlu0 %v631, 88
          %v949 = vpop.permute.xlu0 %948
          %v952 = vsel %vm646, %v931, 0
          %954 = vmatprep.subr.mxu0 0.0
          %955 = vmatpush1.msra.mxu0 %v949
          %956 = vmatprep.subr.mxu0 0.0
          %957 = vmatpush1.msra.mxu0 0.0
          %958 = vmatprep.subr.mxu0 0.0
          %959 = vmatpush1.msra.mxu0 0.0
          %960 = vmatprep.subr.mxu0 0.0
          %961 = vmatpush1.msra.mxu0 0.0
          %962 = vmatprep.subr.mxu0 0.0
          %963 = vmatpush1.msra.mxu0 0.0
          %964 = vmatprep.subr.mxu0 0.0
          %965 = vmatpush1.msra.mxu0 0.0
          %966 = vmatprep.subr.mxu0 0.0
          %967 = vmatpush1.msra.mxu0 0.0
          %968 = vmatprep.subr.mxu0 0.0
          %969 = vmatpush1.msra.mxu0 0.0
          %970 = vmatprep.subr.mxu0 0.0
          %971 = vmatpush1.msra.mxu0 0.0
          %972 = vmatprep.subr.mxu0 0.0
          %973 = vmatpush1.msra.mxu0 0.0
          %974 = vmatprep.subr.mxu0 0.0
          %975 = vmatpush1.msra.mxu0 0.0
          %976 = vmatprep.subr.mxu0 0.0
          %977 = vmatpush1.msra.mxu0 0.0
          %978 = vmatprep.subr.mxu0 0.0
          %979 = vmatpush1.msra.mxu0 0.0
          %980 = vmatprep.subr.mxu0 0.0
          %981 = vmatpush1.msra.mxu0 0.0
          %982 = vmatprep.subr.mxu0 0.0
          %983 = vmatpush1.msra.mxu0 0.0
          %984 = vmatprep.subr.mxu0 0.0
          %985 = vmatpush1.msra.mxu0 0.0
          %986 = vmatprep.subr.mxu0 0.0
          %987 = vmatpush1.msra.mxu0 0.0
          %988 = vmatprep.subr.mxu0 0.0
          %989 = vmatpush1.msra.mxu0 0.0
          %990 = vmatprep.subr.mxu0 0.0
          %991 = vmatpush1.msra.mxu0 0.0
          %992 = vmatprep.subr.mxu0 0.0
          %993 = vmatpush1.msra.mxu0 0.0
          %994 = vmatprep.subr.mxu0 0.0
          %995 = vmatpush1.msra.mxu0 0.0
          %996 = vmatprep.subr.mxu0 0.0
          %997 = vmatpush1.msra.mxu0 0.0
          %998 = vmatprep.subr.mxu0 0.0
          %999 = vmatpush1.msra.mxu0 0.0
          %1000 = vmatprep.subr.mxu0 0.0
          %1001 = vmatpush1.msra.mxu0 0.0
          %1002 = vmatprep.subr.mxu0 0.0
          %1003 = vmatpush1.msra.mxu0 0.0
          %1004 = vmatprep.subr.mxu0 0.0
          %1005 = vmatpush1.msra.mxu0 0.0
          %1006 = vmatprep.subr.mxu0 0.0
          %1007 = vmatpush1.msra.mxu0 0.0
          %1008 = vmatprep.subr.mxu0 0.0
          %1009 = vmatpush1.msra.mxu0 0.0
          %1010 = vmatprep.subr.mxu0 0.0
          %1011 = vmatpush1.msra.mxu0 0.0
          %1012 = vmatprep.subr.mxu0 0.0
          %1013 = vmatpush1.msra.mxu0 0.0
          %1014 = vmatprep.subr.mxu0 0.0
          %1015 = vmatpush1.msra.mxu0 0.0
          %1016 = vmatprep.subr.mxu0 0.0
          %1017 = vmatpush1.msra.mxu0 0.0
          %1018 = vmatprep.mubr.f32.mxu0 0.0
          %1019 = vmatmul.mubr.f32.gmra.mrb[0].mxu0 %v952
          %v1020 = vpop.f32.mrb[0].mxu0
          %v1021 = vadd.f32 0.0, %v1020
          %v1022 = vpop.f32.mrb[0].mxu0
          %1023 = vdwg.mxu0
          %v1024 = vadd.f32 %v947, %v1021
          %1025 = vst.msk [vmem:[%s940] sm:$0xff] %vm646, %v1024
          %1026 = vst.msk [vmem:[%s915] sm:$0xff] %vm747, %v920
          %1027 = vrot.lane.b32.xlu0 %v645, 112
          %v1028 = vpop.permute.xlu0 %1027
          %1029 = vrot.lane.b32.xlu0 %v631, 112
          %v1030 = vpop.permute.xlu0 %1029
          %v1031 = vsel %vm646, %v1028, 0
          %v1033 = vsel %vm646, %v1030, 0
          %1035 = vmatprep.subr.mxu0 0.0
          %1036 = vmatpush1.xpose.msra.mxu0 %v1033
          %1037 = vmatprep.subr.mxu0 0.0
          %1038 = vmatpush1.xpose.msra.mxu0 0.0
          %1039 = vmatprep.subr.mxu0 0.0
          %1040 = vmatpush1.xpose.msra.mxu0 0.0
          %1041 = vmatprep.subr.mxu0 0.0
          %1042 = vmatpush1.xpose.msra.mxu0 0.0
          %1043 = vmatprep.subr.mxu0 0.0
          %1044 = vmatpush1.xpose.msra.mxu0 0.0
          %1045 = vmatprep.subr.mxu0 0.0
          %1046 = vmatpush1.xpose.msra.mxu0 0.0
          %1047 = vmatprep.subr.mxu0 0.0
          %1048 = vmatpush1.xpose.msra.mxu0 0.0
          %1049 = vmatprep.subr.mxu0 0.0
          %1050 = vmatpush1.xpose.msra.mxu0 0.0
          %1051 = vmatprep.subr.mxu0 0.0
          %1052 = vmatpush1.xpose.msra.mxu0 0.0
          %1053 = vmatprep.subr.mxu0 0.0
          %1054 = vmatpush1.xpose.msra.mxu0 0.0
          %1055 = vmatprep.subr.mxu0 0.0
          %1056 = vmatpush1.xpose.msra.mxu0 0.0
          %1057 = vmatprep.subr.mxu0 0.0
          %1058 = vmatpush1.xpose.msra.mxu0 0.0
          %1059 = vmatprep.subr.mxu0 0.0
          %1060 = vmatpush1.xpose.msra.mxu0 0.0
          %1061 = vmatprep.subr.mxu0 0.0
          %1062 = vmatpush1.xpose.msra.mxu0 0.0
          %1063 = vmatprep.subr.mxu0 0.0
          %1064 = vmatpush1.xpose.msra.mxu0 0.0
          %1065 = vmatprep.subr.mxu0 0.0
          %1066 = vmatpush1.xpose.msra.mxu0 0.0
          %1067 = vmatprep.subr.mxu0 0.0
          %1068 = vmatpush1.xpose.msra.mxu0 0.0
          %1069 = vmatprep.subr.mxu0 0.0
          %1070 = vmatpush1.xpose.msra.mxu0 0.0
          %1071 = vmatprep.subr.mxu0 0.0
          %1072 = vmatpush1.xpose.msra.mxu0 0.0
          %1073 = vmatprep.subr.mxu0 0.0
          %1074 = vmatpush1.xpose.msra.mxu0 0.0
          %1075 = vmatprep.subr.mxu0 0.0
          %1076 = vmatpush1.xpose.msra.mxu0 0.0
          %1077 = vmatprep.subr.mxu0 0.0
          %1078 = vmatpush1.xpose.msra.mxu0 0.0
          %1079 = vmatprep.subr.mxu0 0.0
          %1080 = vmatpush1.xpose.msra.mxu0 0.0
          %1081 = vmatprep.subr.mxu0 0.0
          %1082 = vmatpush1.xpose.msra.mxu0 0.0
          %1083 = vmatprep.subr.mxu0 0.0
          %1084 = vmatpush1.xpose.msra.mxu0 0.0
          %1085 = vmatprep.subr.mxu0 0.0
          %1086 = vmatpush1.xpose.msra.mxu0 0.0
          %1087 = vmatprep.subr.mxu0 0.0
          %1088 = vmatpush1.xpose.msra.mxu0 0.0
          %1089 = vmatprep.subr.mxu0 0.0
          %1090 = vmatpush1.xpose.msra.mxu0 0.0
          %1091 = vmatprep.subr.mxu0 0.0
          %1092 = vmatpush1.xpose.msra.mxu0 0.0
          %1093 = vmatprep.subr.mxu0 0.0
          %1094 = vmatpush1.xpose.msra.mxu0 0.0
          %1095 = vmatprep.subr.mxu0 0.0
          %1096 = vmatpush1.xpose.msra.mxu0 0.0
          %1097 = vmatprep.subr.mxu0 0.0
          %1098 = vmatpush1.xpose.msra.mxu0 0.0
          %1099 = vmatprep.mubr.f32.mxu0 0.0
          %1100 = vmatmul.mubr.f32.gmra.mrb[0].mxu0 %v1031
          %v1101 = vpop.f32.mrb[0].mxu0
          %v1102 = vadd.f32 0.0, %v1101
          %v1103 = vpop.f32.mrb[0].mxu0
          %1104 = vdwg.mxu0
          %v1105 = vmul.f32 %v1102, 0.35355338
          %v1106 = vsel %vm644, %v1105, -1e+30
          %s1107 = scalar_lea.vmem [#allocation3], 32
          %v1108 = vld [vmem:[%s1107] sm:$0xff]
          %v1109 = vsel %vm646, %v1106, -inf
          %1110 = vmax.xlane.f32.xlu0 %v1109
          %v1111 = vpop.xlane.xlu0 %1110
          %v1112 = vmax.f32 %v1108, %v1111
          %v1113 = vsub.f32 %v1108, %v1112
          %v1114 = vmul.f32 %v1113, 1.442695
          %v1115 = vpow.pop %v1114
          %1117 = vset.pattern.permute.xlu0 0
          %1118 = vperm.xlu0 %1117, %v1112
          %v1119 = vpop.permute.xlu0 %1118
          %v1121 = vsub.f32 %v1106, %v1119
          %v1122 = vmul.f32 %v1121, 1.442695
          %v1123 = vpow.pop %v1122
          %s1124 = scalar_lea.vmem [#allocation4], 32
          %v1125 = vld [vmem:[%s1124] sm:$0xff]
          %v1126 = vmul.f32 %v1115, %v1125
          %v1127 = vsel %vm646, %v1123, 0.0
          %1128 = vadd.xlane.f32.xlu0 %v1127
          %v1129 = vpop.xlane.xlu0 %1128
          %v1130 = vadd.f32 %v1126, %v1129
          %1131 = vst.msk [vmem:[%s1124] sm:$0xff] %vm747, %v1130
          %s1132 = scalar_lea.vmem [#allocation5], 32
          %v1133 = vld [vmem:[%s1132] sm:$0xff]
          %1135 = vset.pattern.permute.xlu0 0
          %1136 = vperm.xlu0 %1135, %v1115
          %v1137 = vpop.permute.xlu0 %1136
          %v1139 = vmul.f32 %v1137, %v1133
          %1140 = vrot.lane.b32.xlu0 %v631, 80
          %v1141 = vpop.permute.xlu0 %1140
          %v1144 = vsel %vm646, %v1123, 0
          %1146 = vmatprep.subr.mxu0 0.0
          %1147 = vmatpush1.msra.mxu0 %v1141
          %1148 = vmatprep.subr.mxu0 0.0
          %1149 = vmatpush1.msra.mxu0 0.0
          %1150 = vmatprep.subr.mxu0 0.0
          %1151 = vmatpush1.msra.mxu0 0.0
          %1152 = vmatprep.subr.mxu0 0.0
          %1153 = vmatpush1.msra.mxu0 0.0
          %1154 = vmatprep.subr.mxu0 0.0
          %1155 = vmatpush1.msra.mxu0 0.0
          %1156 = vmatprep.subr.mxu0 0.0
          %1157 = vmatpush1.msra.mxu0 0.0
          %1158 = vmatprep.subr.mxu0 0.0
          %1159 = vmatpush1.msra.mxu0 0.0
          %1160 = vmatprep.subr.mxu0 0.0
          %1161 = vmatpush1.msra.mxu0 0.0
          %1162 = vmatprep.subr.mxu0 0.0
          %1163 = vmatpush1.msra.mxu0 0.0
          %1164 = vmatprep.subr.mxu0 0.0
          %1165 = vmatpush1.msra.mxu0 0.0
          %1166 = vmatprep.subr.mxu0 0.0
          %1167 = vmatpush1.msra.mxu0 0.0
          %1168 = vmatprep.subr.mxu0 0.0
          %1169 = vmatpush1.msra.mxu0 0.0
          %1170 = vmatprep.subr.mxu0 0.0
          %1171 = vmatpush1.msra.mxu0 0.0
          %1172 = vmatprep.subr.mxu0 0.0
          %1173 = vmatpush1.msra.mxu0 0.0
          %1174 = vmatprep.subr.mxu0 0.0
          %1175 = vmatpush1.msra.mxu0 0.0
          %1176 = vmatprep.subr.mxu0 0.0
          %1177 = vmatpush1.msra.mxu0 0.0
          %1178 = vmatprep.subr.mxu0 0.0
          %1179 = vmatpush1.msra.mxu0 0.0
          %1180 = vmatprep.subr.mxu0 0.0
          %1181 = vmatpush1.msra.mxu0 0.0
          %1182 = vmatprep.subr.mxu0 0.0
          %1183 = vmatpush1.msra.mxu0 0.0
          %1184 = vmatprep.subr.mxu0 0.0
          %1185 = vmatpush1.msra.mxu0 0.0
          %1186 = vmatprep.subr.mxu0 0.0
          %1187 = vmatpush1.msra.mxu0 0.0
          %1188 = vmatprep.subr.mxu0 0.0
          %1189 = vmatpush1.msra.mxu0 0.0
          %1190 = vmatprep.subr.mxu0 0.0
          %1191 = vmatpush1.msra.mxu0 0.0
          %1192 = vmatprep.subr.mxu0 0.0
          %1193 = vmatpush1.msra.mxu0 0.0
          %1194 = vmatprep.subr.mxu0 0.0
          %1195 = vmatpush1.msra.mxu0 0.0
          %1196 = vmatprep.subr.mxu0 0.0
          %1197 = vmatpush1.msra.mxu0 0.0
          %1198 = vmatprep.subr.mxu0 0.0
          %1199 = vmatpush1.msra.mxu0 0.0
          %1200 = vmatprep.subr.mxu0 0.0
          %1201 = vmatpush1.msra.mxu0 0.0
          %1202 = vmatprep.subr.mxu0 0.0
          %1203 = vmatpush1.msra.mxu0 0.0
          %1204 = vmatprep.subr.mxu0 0.0
          %1205 = vmatpush1.msra.mxu0 0.0
          %1206 = vmatprep.subr.mxu0 0.0
          %1207 = vmatpush1.msra.mxu0 0.0
          %1208 = vmatprep.subr.mxu0 0.0
          %1209 = vmatpush1.msra.mxu0 0.0
          %1210 = vmatprep.mubr.f32.mxu0 0.0
          %1211 = vmatmul.mubr.f32.gmra.mrb[0].mxu0 %v1144
          %v1212 = vpop.f32.mrb[0].mxu0
          %v1213 = vadd.f32 0.0, %v1212
          %v1214 = vpop.f32.mrb[0].mxu0
          %1215 = vdwg.mxu0
          %v1216 = vadd.f32 %v1139, %v1213
          %1217 = vst.msk [vmem:[%s1132] sm:$0xff] %vm646, %v1216
          %1218 = vst.msk [vmem:[%s1107] sm:$0xff] %vm747, %v1112
          %1219 = vrot.lane.b32.xlu0 %v645, 104
          %v1220 = vpop.permute.xlu0 %1219
          %1221 = vrot.lane.b32.xlu0 %v631, 104
          %v1222 = vpop.permute.xlu0 %1221
          %v1223 = vsel %vm646, %v1220, 0
          %v1225 = vsel %vm646, %v1222, 0
          %1227 = vmatprep.subr.mxu0 0.0
          %1228 = vmatpush1.xpose.msra.mxu0 %v1225
          %1229 = vmatprep.subr.mxu0 0.0
          %1230 = vmatpush1.xpose.msra.mxu0 0.0
          %1231 = vmatprep.subr.mxu0 0.0
          %1232 = vmatpush1.xpose.msra.mxu0 0.0
          %1233 = vmatprep.subr.mxu0 0.0
          %1234 = vmatpush1.xpose.msra.mxu0 0.0
          %1235 = vmatprep.subr.mxu0 0.0
          %1236 = vmatpush1.xpose.msra.mxu0 0.0
          %1237 = vmatprep.subr.mxu0 0.0
          %1238 = vmatpush1.xpose.msra.mxu0 0.0
          %1239 = vmatprep.subr.mxu0 0.0
          %1240 = vmatpush1.xpose.msra.mxu0 0.0
          %1241 = vmatprep.subr.mxu0 0.0
          %1242 = vmatpush1.xpose.msra.mxu0 0.0
          %1243 = vmatprep.subr.mxu0 0.0
          %1244 = vmatpush1.xpose.msra.mxu0 0.0
          %1245 = vmatprep.subr.mxu0 0.0
          %1246 = vmatpush1.xpose.msra.mxu0 0.0
          %1247 = vmatprep.subr.mxu0 0.0
          %1248 = vmatpush1.xpose.msra.mxu0 0.0
          %1249 = vmatprep.subr.mxu0 0.0
          %1250 = vmatpush1.xpose.msra.mxu0 0.0
          %1251 = vmatprep.subr.mxu0 0.0
          %1252 = vmatpush1.xpose.msra.mxu0 0.0
          %1253 = vmatprep.subr.mxu0 0.0
          %1254 = vmatpush1.xpose.msra.mxu0 0.0
          %1255 = vmatprep.subr.mxu0 0.0
          %1256 = vmatpush1.xpose.msra.mxu0 0.0
          %1257 = vmatprep.subr.mxu0 0.0
          %1258 = vmatpush1.xpose.msra.mxu0 0.0
          %1259 = vmatprep.subr.mxu0 0.0
          %1260 = vmatpush1.xpose.msra.mxu0 0.0
          %1261 = vmatprep.subr.mxu0 0.0
          %1262 = vmatpush1.xpose.msra.mxu0 0.0
          %1263 = vmatprep.subr.mxu0 0.0
          %1264 = vmatpush1.xpose.msra.mxu0 0.0
          %1265 = vmatprep.subr.mxu0 0.0
          %1266 = vmatpush1.xpose.msra.mxu0 0.0
          %1267 = vmatprep.subr.mxu0 0.0
          %1268 = vmatpush1.xpose.msra.mxu0 0.0
          %1269 = vmatprep.subr.mxu0 0.0
          %1270 = vmatpush1.xpose.msra.mxu0 0.0
          %1271 = vmatprep.subr.mxu0 0.0
          %1272 = vmatpush1.xpose.msra.mxu0 0.0
          %1273 = vmatprep.subr.mxu0 0.0
          %1274 = vmatpush1.xpose.msra.mxu0 0.0
          %1275 = vmatprep.subr.mxu0 0.0
          %1276 = vmatpush1.xpose.msra.mxu0 0.0
          %1277 = vmatprep.subr.mxu0 0.0
          %1278 = vmatpush1.xpose.msra.mxu0 0.0
          %1279 = vmatprep.subr.mxu0 0.0
          %1280 = vmatpush1.xpose.msra.mxu0 0.0
          %1281 = vmatprep.subr.mxu0 0.0
          %1282 = vmatpush1.xpose.msra.mxu0 0.0
          %1283 = vmatprep.subr.mxu0 0.0
          %1284 = vmatpush1.xpose.msra.mxu0 0.0
          %1285 = vmatprep.subr.mxu0 0.0
          %1286 = vmatpush1.xpose.msra.mxu0 0.0
          %1287 = vmatprep.subr.mxu0 0.0
          %1288 = vmatpush1.xpose.msra.mxu0 0.0
          %1289 = vmatprep.subr.mxu0 0.0
          %1290 = vmatpush1.xpose.msra.mxu0 0.0
          %1291 = vmatprep.mubr.f32.mxu0 0.0
          %1292 = vmatmul.mubr.f32.gmra.mrb[0].mxu0 %v1223
          %v1293 = vpop.f32.mrb[0].mxu0
          %v1294 = vadd.f32 0.0, %v1293
          %v1295 = vpop.f32.mrb[0].mxu0
          %1296 = vdwg.mxu0
          %v1297 = vmul.f32 %v1294, 0.35355338
          %v1298 = vsel %vm644, %v1297, -1e+30
          %s1299 = scalar_lea.vmem [#allocation3], 48
          %v1300 = vld [vmem:[%s1299] sm:$0xff]
          %v1301 = vsel %vm646, %v1298, -inf
          %1302 = vmax.xlane.f32.xlu0 %v1301
          %v1303 = vpop.xlane.xlu0 %1302
          %v1304 = vmax.f32 %v1300, %v1303
          %v1305 = vsub.f32 %v1300, %v1304
          %v1306 = vmul.f32 %v1305, 1.442695
          %v1307 = vpow.pop %v1306
          %1309 = vset.pattern.permute.xlu0 0
          %1310 = vperm.xlu0 %1309, %v1304
          %v1311 = vpop.permute.xlu0 %1310
          %v1313 = vsub.f32 %v1298, %v1311
          %v1314 = vmul.f32 %v1313, 1.442695
          %v1315 = vpow.pop %v1314
          %s1316 = scalar_lea.vmem [#allocation4], 48
          %v1317 = vld [vmem:[%s1316] sm:$0xff]
          %v1318 = vmul.f32 %v1307, %v1317
          %v1319 = vsel %vm646, %v1315, 0.0
          %1320 = vadd.xlane.f32.xlu0 %v1319
          %v1321 = vpop.xlane.xlu0 %1320
          %v1322 = vadd.f32 %v1318, %v1321
          %1323 = vst.msk [vmem:[%s1316] sm:$0xff] %vm747, %v1322
          %s1324 = scalar_lea.vmem [#allocation5], 48
          %v1325 = vld [vmem:[%s1324] sm:$0xff]
          %1327 = vset.pattern.permute.xlu0 0
          %1328 = vperm.xlu0 %1327, %v1307
          %v1329 = vpop.permute.xlu0 %1328
          %v1331 = vmul.f32 %v1329, %v1325
          %1332 = vrot.lane.b32.xlu0 %v631, 72
          %v1333 = vpop.permute.xlu0 %1332
          %v1336 = vsel %vm646, %v1315, 0
          %1338 = vmatprep.subr.mxu0 0.0
          %1339 = vmatpush1.msra.mxu0 %v1333
          %1340 = vmatprep.subr.mxu0 0.0
          %1341 = vmatpush1.msra.mxu0 0.0
          %1342 = vmatprep.subr.mxu0 0.0
          %1343 = vmatpush1.msra.mxu0 0.0
          %1344 = vmatprep.subr.mxu0 0.0
          %1345 = vmatpush1.msra.mxu0 0.0
          %1346 = vmatprep.subr.mxu0 0.0
          %1347 = vmatpush1.msra.mxu0 0.0
          %1348 = vmatprep.subr.mxu0 0.0
          %1349 = vmatpush1.msra.mxu0 0.0
          %1350 = vmatprep.subr.mxu0 0.0
          %1351 = vmatpush1.msra.mxu0 0.0
          %1352 = vmatprep.subr.mxu0 0.0
          %1353 = vmatpush1.msra.mxu0 0.0
          %1354 = vmatprep.subr.mxu0 0.0
          %1355 = vmatpush1.msra.mxu0 0.0
          %1356 = vmatprep.subr.mxu0 0.0
          %1357 = vmatpush1.msra.mxu0 0.0
          %1358 = vmatprep.subr.mxu0 0.0
          %1359 = vmatpush1.msra.mxu0 0.0
          %1360 = vmatprep.subr.mxu0 0.0
          %1361 = vmatpush1.msra.mxu0 0.0
          %1362 = vmatprep.subr.mxu0 0.0
          %1363 = vmatpush1.msra.mxu0 0.0
          %1364 = vmatprep.subr.mxu0 0.0
          %1365 = vmatpush1.msra.mxu0 0.0
          %1366 = vmatprep.subr.mxu0 0.0
          %1367 = vmatpush1.msra.mxu0 0.0
          %1368 = vmatprep.subr.mxu0 0.0
          %1369 = vmatpush1.msra.mxu0 0.0
          %1370 = vmatprep.subr.mxu0 0.0
          %1371 = vmatpush1.msra.mxu0 0.0
          %1372 = vmatprep.subr.mxu0 0.0
          %1373 = vmatpush1.msra.mxu0 0.0
          %1374 = vmatprep.subr.mxu0 0.0
          %1375 = vmatpush1.msra.mxu0 0.0
          %1376 = vmatprep.subr.mxu0 0.0
          %1377 = vmatpush1.msra.mxu0 0.0
          %1378 = vmatprep.subr.mxu0 0.0
          %1379 = vmatpush1.msra.mxu0 0.0
          %1380 = vmatprep.subr.mxu0 0.0
          %1381 = vmatpush1.msra.mxu0 0.0
          %1382 = vmatprep.subr.mxu0 0.0
          %1383 = vmatpush1.msra.mxu0 0.0
          %1384 = vmatprep.subr.mxu0 0.0
          %1385 = vmatpush1.msra.mxu0 0.0
          %1386 = vmatprep.subr.mxu0 0.0
          %1387 = vmatpush1.msra.mxu0 0.0
          %1388 = vmatprep.subr.mxu0 0.0
          %1389 = vmatpush1.msra.mxu0 0.0
          %1390 = vmatprep.subr.mxu0 0.0
          %1391 = vmatpush1.msra.mxu0 0.0
          %1392 = vmatprep.subr.mxu0 0.0
          %1393 = vmatpush1.msra.mxu0 0.0
          %1394 = vmatprep.subr.mxu0 0.0
          %1395 = vmatpush1.msra.mxu0 0.0
          %1396 = vmatprep.subr.mxu0 0.0
          %1397 = vmatpush1.msra.mxu0 0.0
          %1398 = vmatprep.subr.mxu0 0.0
          %1399 = vmatpush1.msra.mxu0 0.0
          %1400 = vmatprep.subr.mxu0 0.0
          %1401 = vmatpush1.msra.mxu0 0.0
          %1402 = vmatprep.mubr.f32.mxu0 0.0
          %1403 = vmatmul.mubr.f32.gmra.mrb[0].mxu0 %v1336
          %v1404 = vpop.f32.mrb[0].mxu0
          %v1405 = vadd.f32 0.0, %v1404
          %v1406 = vpop.f32.mrb[0].mxu0
          %1407 = vdwg.mxu0
          %v1408 = vadd.f32 %v1331, %v1405
          %1409 = vst.msk [vmem:[%s1324] sm:$0xff] %vm646, %v1408
          %1410 = vst.msk [vmem:[%s1299] sm:$0xff] %vm747, %v1304
        $region80: #{tpu_custom_call.1} parent=51 // pred_fallthru
          _
        %p1411 = scmp.lt.s32.totalorder %s420, 16
        // Predicated region
        $region81: #{tpu_custom_call.1} parent=51 // pred_check
          %p1412 = pneg %p1411
        $region82: #{tpu_custom_call.1} parent=51 // pred_check_branch
          %1414 = sbr.rel (%p1412) target = $region84
        $region83: #{tpu_custom_call.1} parent=51 // pred_region
          %v1415 = vlaneseq
          %v1416 = vshrl.u32 %v1415, 7
          %v1417 = vadd.s32 %v1416, 8
          %v1418 = vlaneseq
          %v1419 = vand.u32 %v1418, 127
          %v1420 = vstv %s420
          %v1421 = vadd.s32 %v1420, %v1419
          %vm1422 = vcmp.le.s32.totalorder %v1421, %v1417
          %v1423 = vld [vmem:[#allocation2 + $0x8] sm:$0xff]
          %vm1424 = vcmask 64512
          %v1426 = vsel %vm1424, %v1423, 0
          %v1429 = vsel %vm1424, %v631, 0
          %1431 = vmatprep.subr.mxu0 0.0
          %1432 = vmatpush1.xpose.msra.mxu0 %v1429
          %1433 = vmatprep.subr.mxu0 0.0
          %1434 = vmatpush1.xpose.msra.mxu0 0.0
          %1435 = vmatprep.subr.mxu0 0.0
          %1436 = vmatpush1.xpose.msra.mxu0 0.0
          %1437 = vmatprep.subr.mxu0 0.0
          %1438 = vmatpush1.xpose.msra.mxu0 0.0
          %1439 = vmatprep.subr.mxu0 0.0
          %1440 = vmatpush1.xpose.msra.mxu0 0.0
          %1441 = vmatprep.subr.mxu0 0.0
          %1442 = vmatpush1.xpose.msra.mxu0 0.0
          %1443 = vmatprep.subr.mxu0 0.0
          %1444 = vmatpush1.xpose.msra.mxu0 0.0
          %1445 = vmatprep.subr.mxu0 0.0
          %1446 = vmatpush1.xpose.msra.mxu0 0.0
          %1447 = vmatprep.subr.mxu0 0.0
          %1448 = vmatpush1.xpose.msra.mxu0 0.0
          %1449 = vmatprep.subr.mxu0 0.0
          %1450 = vmatpush1.xpose.msra.mxu0 0.0
          %1451 = vmatprep.subr.mxu0 0.0
          %1452 = vmatpush1.xpose.msra.mxu0 0.0
          %1453 = vmatprep.subr.mxu0 0.0
          %1454 = vmatpush1.xpose.msra.mxu0 0.0
          %1455 = vmatprep.subr.mxu0 0.0
          %1456 = vmatpush1.xpose.msra.mxu0 0.0
          %1457 = vmatprep.subr.mxu0 0.0
          %1458 = vmatpush1.xpose.msra.mxu0 0.0
          %1459 = vmatprep.subr.mxu0 0.0
          %1460 = vmatpush1.xpose.msra.mxu0 0.0
          %1461 = vmatprep.subr.mxu0 0.0
          %1462 = vmatpush1.xpose.msra.mxu0 0.0
          %1463 = vmatprep.subr.mxu0 0.0
          %1464 = vmatpush1.xpose.msra.mxu0 0.0
          %1465 = vmatprep.subr.mxu0 0.0
          %1466 = vmatpush1.xpose.msra.mxu0 0.0
          %1467 = vmatprep.subr.mxu0 0.0
          %1468 = vmatpush1.xpose.msra.mxu0 0.0
          %1469 = vmatprep.subr.mxu0 0.0
          %1470 = vmatpush1.xpose.msra.mxu0 0.0
          %1471 = vmatprep.subr.mxu0 0.0
          %1472 = vmatpush1.xpose.msra.mxu0 0.0
          %1473 = vmatprep.subr.mxu0 0.0
          %1474 = vmatpush1.xpose.msra.mxu0 0.0
          %1475 = vmatprep.subr.mxu0 0.0
          %1476 = vmatpush1.xpose.msra.mxu0 0.0
          %1477 = vmatprep.subr.mxu0 0.0
          %1478 = vmatpush1.xpose.msra.mxu0 0.0
          %1479 = vmatprep.subr.mxu0 0.0
          %1480 = vmatpush1.xpose.msra.mxu0 0.0
          %1481 = vmatprep.subr.mxu0 0.0
          %1482 = vmatpush1.xpose.msra.mxu0 0.0
          %1483 = vmatprep.subr.mxu0 0.0
          %1484 = vmatpush1.xpose.msra.mxu0 0.0
          %1485 = vmatprep.subr.mxu0 0.0
          %1486 = vmatpush1.xpose.msra.mxu0 0.0
          %1487 = vmatprep.subr.mxu0 0.0
          %1488 = vmatpush1.xpose.msra.mxu0 0.0
          %1489 = vmatprep.subr.mxu0 0.0
          %1490 = vmatpush1.xpose.msra.mxu0 0.0
          %1491 = vmatprep.subr.mxu0 0.0
          %1492 = vmatpush1.xpose.msra.mxu0 0.0
          %1493 = vmatprep.subr.mxu0 0.0
          %1494 = vmatpush1.xpose.msra.mxu0 0.0
          %1495 = vmatprep.mubr.f32.mxu0 0.0
          %1496 = vmatmul.mubr.f32.gmra.mrb[0].mxu0 %v1426
          %v1497 = vpop.f32.mrb[0].mxu0
          %v1498 = vadd.f32 0.0, %v1497
          %v1499 = vpop.f32.mrb[0].mxu0
          %1500 = vdwg.mxu0
          %v1501 = vmul.f32 %v1498, 0.35355338
          %v1502 = vsel %vm1422, %v1501, -1e+30
          %v1503 = vld [vmem:[#allocation3 + $0x8] sm:$0xff]
          %v1504 = vsel %vm1424, %v1502, -inf
          %1505 = vmax.xlane.f32.xlu0 %v1504
          %v1506 = vpop.xlane.xlu0 %1505
          %v1507 = vmax.f32 %v1503, %v1506
          %v1508 = vsub.f32 %v1503, %v1507
          %v1509 = vmul.f32 %v1508, 1.442695
          %v1510 = vpow.pop %v1509
          %1512 = vset.pattern.permute.xlu0 0
          %1513 = vperm.xlu0 %1512, %v1507
          %v1514 = vpop.permute.xlu0 %1513
          %v1516 = vsub.f32 %v1502, %v1514
          %v1517 = vmul.f32 %v1516, 1.442695
          %v1518 = vpow.pop %v1517
          %v1519 = vld [vmem:[#allocation4 + $0x8] sm:$0xff]
          %v1520 = vmul.f32 %v1510, %v1519
          %v1521 = vsel %vm1424, %v1518, 0.0
          %1522 = vadd.xlane.f32.xlu0 %v1521
          %v1523 = vpop.xlane.xlu0 %1522
          %v1524 = vadd.f32 %v1520, %v1523
          %vm1525 = vcmask 7168
          %1526 = vst.msk [vmem:[#allocation4 + $0x8] sm:$0xff] %vm1525, %v1524
          %v1527 = vld [vmem:[#allocation5 + $0x8] sm:$0xff]
          %1529 = vset.pattern.permute.xlu0 0
          %1530 = vperm.xlu0 %1529, %v1510
          %v1531 = vpop.permute.xlu0 %1530
          %v1533 = vmul.f32 %v1531, %v1527
          %1534 = vrot.lane.b32.xlu0 %v631, 96
          %v1535 = vpop.permute.xlu0 %1534
          %v1538 = vsel %vm1424, %v1518, 0
          %1540 = vmatprep.subr.mxu0 0.0
          %1541 = vmatpush1.msra.mxu0 %v1535
          %1542 = vmatprep.subr.mxu0 0.0
          %1543 = vmatpush1.msra.mxu0 0.0
          %1544 = vmatprep.subr.mxu0 0.0
          %1545 = vmatpush1.msra.mxu0 0.0
          %1546 = vmatprep.subr.mxu0 0.0
          %1547 = vmatpush1.msra.mxu0 0.0
          %1548 = vmatprep.subr.mxu0 0.0
          %1549 = vmatpush1.msra.mxu0 0.0
          %1550 = vmatprep.subr.mxu0 0.0
          %1551 = vmatpush1.msra.mxu0 0.0
          %1552 = vmatprep.subr.mxu0 0.0
          %1553 = vmatpush1.msra.mxu0 0.0
          %1554 = vmatprep.subr.mxu0 0.0
          %1555 = vmatpush1.msra.mxu0 0.0
          %1556 = vmatprep.subr.mxu0 0.0
          %1557 = vmatpush1.msra.mxu0 0.0
          %1558 = vmatprep.subr.mxu0 0.0
          %1559 = vmatpush1.msra.mxu0 0.0
          %1560 = vmatprep.subr.mxu0 0.0
          %1561 = vmatpush1.msra.mxu0 0.0
          %1562 = vmatprep.subr.mxu0 0.0
          %1563 = vmatpush1.msra.mxu0 0.0
          %1564 = vmatprep.subr.mxu0 0.0
          %1565 = vmatpush1.msra.mxu0 0.0
          %1566 = vmatprep.subr.mxu0 0.0
          %1567 = vmatpush1.msra.mxu0 0.0
          %1568 = vmatprep.subr.mxu0 0.0
          %1569 = vmatpush1.msra.mxu0 0.0
          %1570 = vmatprep.subr.mxu0 0.0
          %1571 = vmatpush1.msra.mxu0 0.0
          %1572 = vmatprep.subr.mxu0 0.0
          %1573 = vmatpush1.msra.mxu0 0.0
          %1574 = vmatprep.subr.mxu0 0.0
          %1575 = vmatpush1.msra.mxu0 0.0
          %1576 = vmatprep.subr.mxu0 0.0
          %1577 = vmatpush1.msra.mxu0 0.0
          %1578 = vmatprep.subr.mxu0 0.0
          %1579 = vmatpush1.msra.mxu0 0.0
          %1580 = vmatprep.subr.mxu0 0.0
          %1581 = vmatpush1.msra.mxu0 0.0
          %1582 = vmatprep.subr.mxu0 0.0
          %1583 = vmatpush1.msra.mxu0 0.0
          %1584 = vmatprep.subr.mxu0 0.0
          %1585 = vmatpush1.msra.mxu0 0.0
          %1586 = vmatprep.subr.mxu0 0.0
          %1587 = vmatpush1.msra.mxu0 0.0
          %1588 = vmatprep.subr.mxu0 0.0
          %1589 = vmatpush1.msra.mxu0 0.0
          %1590 = vmatprep.subr.mxu0 0.0
          %1591 = vmatpush1.msra.mxu0 0.0
          %1592 = vmatprep.subr.mxu0 0.0
          %1593 = vmatpush1.msra.mxu0 0.0
          %1594 = vmatprep.subr.mxu0 0.0
          %1595 = vmatpush1.msra.mxu0 0.0
          %1596 = vmatprep.subr.mxu0 0.0
          %1597 = vmatpush1.msra.mxu0 0.0
          %1598 = vmatprep.subr.mxu0 0.0
          %1599 = vmatpush1.msra.mxu0 0.0
          %1600 = vmatprep.subr.mxu0 0.0
          %1601 = vmatpush1.msra.mxu0 0.0
          %1602 = vmatprep.subr.mxu0 0.0
          %1603 = vmatpush1.msra.mxu0 0.0
          %1604 = vmatprep.mubr.f32.mxu0 0.0
          %1605 = vmatmul.mubr.f32.gmra.mrb[0].mxu0 %v1538
          %v1606 = vpop.f32.mrb[0].mxu0
          %v1607 = vadd.f32 0.0, %v1606
          %v1608 = vpop.f32.mrb[0].mxu0
          %1609 = vdwg.mxu0
          %v1610 = vadd.f32 %v1533, %v1607
          %1611 = vst.msk [vmem:[#allocation5 + $0x8] sm:$0xff] %vm1424, %v1610
          %1612 = vst.msk [vmem:[#allocation3 + $0x8] sm:$0xff] %vm1525, %v1507
          %1613 = vrot.lane.b32.xlu0 %v1423, 120
          %v1614 = vpop.permute.xlu0 %1613
          %1615 = vrot.lane.b32.xlu0 %v631, 120
          %v1616 = vpop.permute.xlu0 %1615
          %v1617 = vsel %vm1424, %v1614, 0
          %v1619 = vsel %vm1424, %v1616, 0
          %1621 = vmatprep.subr.mxu0 0.0
          %1622 = vmatpush1.xpose.msra.mxu0 %v1619
          %1623 = vmatprep.subr.mxu0 0.0
          %1624 = vmatpush1.xpose.msra.mxu0 0.0
          %1625 = vmatprep.subr.mxu0 0.0
          %1626 = vmatpush1.xpose.msra.mxu0 0.0
          %1627 = vmatprep.subr.mxu0 0.0
          %1628 = vmatpush1.xpose.msra.mxu0 0.0
          %1629 = vmatprep.subr.mxu0 0.0
          %1630 = vmatpush1.xpose.msra.mxu0 0.0
          %1631 = vmatprep.subr.mxu0 0.0
          %1632 = vmatpush1.xpose.msra.mxu0 0.0
          %1633 = vmatprep.subr.mxu0 0.0
          %1634 = vmatpush1.xpose.msra.mxu0 0.0
          %1635 = vmatprep.subr.mxu0 0.0
          %1636 = vmatpush1.xpose.msra.mxu0 0.0
          %1637 = vmatprep.subr.mxu0 0.0
          %1638 = vmatpush1.xpose.msra.mxu0 0.0
          %1639 = vmatprep.subr.mxu0 0.0
          %1640 = vmatpush1.xpose.msra.mxu0 0.0
          %1641 = vmatprep.subr.mxu0 0.0
          %1642 = vmatpush1.xpose.msra.mxu0 0.0
          %1643 = vmatprep.subr.mxu0 0.0
          %1644 = vmatpush1.xpose.msra.mxu0 0.0
          %1645 = vmatprep.subr.mxu0 0.0
          %1646 = vmatpush1.xpose.msra.mxu0 0.0
          %1647 = vmatprep.subr.mxu0 0.0
          %1648 = vmatpush1.xpose.msra.mxu0 0.0
          %1649 = vmatprep.subr.mxu0 0.0
          %1650 = vmatpush1.xpose.msra.mxu0 0.0
          %1651 = vmatprep.subr.mxu0 0.0
          %1652 = vmatpush1.xpose.msra.mxu0 0.0
          %1653 = vmatprep.subr.mxu0 0.0
          %1654 = vmatpush1.xpose.msra.mxu0 0.0
          %1655 = vmatprep.subr.mxu0 0.0
          %1656 = vmatpush1.xpose.msra.mxu0 0.0
          %1657 = vmatprep.subr.mxu0 0.0
          %1658 = vmatpush1.xpose.msra.mxu0 0.0
          %1659 = vmatprep.subr.mxu0 0.0
          %1660 = vmatpush1.xpose.msra.mxu0 0.0
          %1661 = vmatprep.subr.mxu0 0.0
          %1662 = vmatpush1.xpose.msra.mxu0 0.0
          %1663 = vmatprep.subr.mxu0 0.0
          %1664 = vmatpush1.xpose.msra.mxu0 0.0
          %1665 = vmatprep.subr.mxu0 0.0
          %1666 = vmatpush1.xpose.msra.mxu0 0.0
          %1667 = vmatprep.subr.mxu0 0.0
          %1668 = vmatpush1.xpose.msra.mxu0 0.0
          %1669 = vmatprep.subr.mxu0 0.0
          %1670 = vmatpush1.xpose.msra.mxu0 0.0
          %1671 = vmatprep.subr.mxu0 0.0
          %1672 = vmatpush1.xpose.msra.mxu0 0.0
          %1673 = vmatprep.subr.mxu0 0.0
          %1674 = vmatpush1.xpose.msra.mxu0 0.0
          %1675 = vmatprep.subr.mxu0 0.0
          %1676 = vmatpush1.xpose.msra.mxu0 0.0
          %1677 = vmatprep.subr.mxu0 0.0
          %1678 = vmatpush1.xpose.msra.mxu0 0.0
          %1679 = vmatprep.subr.mxu0 0.0
          %1680 = vmatpush1.xpose.msra.mxu0 0.0
          %1681 = vmatprep.subr.mxu0 0.0
          %1682 = vmatpush1.xpose.msra.mxu0 0.0
          %1683 = vmatprep.subr.mxu0 0.0
          %1684 = vmatpush1.xpose.msra.mxu0 0.0
          %1685 = vmatprep.mubr.f32.mxu0 0.0
          %1686 = vmatmul.mubr.f32.gmra.mrb[0].mxu0 %v1617
          %v1687 = vpop.f32.mrb[0].mxu0
          %v1688 = vadd.f32 0.0, %v1687
          %v1689 = vpop.f32.mrb[0].mxu0
          %1690 = vdwg.mxu0
          %v1691 = vmul.f32 %v1688, 0.35355338
          %v1692 = vsel %vm1422, %v1691, -1e+30
          %s1693 = scalar_lea.vmem [#allocation3], 16
          %v1694 = vld [vmem:[%s1693 + $0x8] sm:$0xff]
          %v1695 = vsel %vm1424, %v1692, -inf
          %1696 = vmax.xlane.f32.xlu0 %v1695
          %v1697 = vpop.xlane.xlu0 %1696
          %v1698 = vmax.f32 %v1694, %v1697
          %v1699 = vsub.f32 %v1694, %v1698
          %v1700 = vmul.f32 %v1699, 1.442695
          %v1701 = vpow.pop %v1700
          %1703 = vset.pattern.permute.xlu0 0
          %1704 = vperm.xlu0 %1703, %v1698
          %v1705 = vpop.permute.xlu0 %1704
          %v1707 = vsub.f32 %v1692, %v1705
          %v1708 = vmul.f32 %v1707, 1.442695
          %v1709 = vpow.pop %v1708
          %s1710 = scalar_lea.vmem [#allocation4], 16
          %v1711 = vld [vmem:[%s1710 + $0x8] sm:$0xff]
          %v1712 = vmul.f32 %v1701, %v1711
          %v1713 = vsel %vm1424, %v1709, 0.0
          %1714 = vadd.xlane.f32.xlu0 %v1713
          %v1715 = vpop.xlane.xlu0 %1714
          %v1716 = vadd.f32 %v1712, %v1715
          %1717 = vst.msk [vmem:[%s1710 + $0x8] sm:$0xff] %vm1525, %v1716
          %s1718 = scalar_lea.vmem [#allocation5], 16
          %v1719 = vld [vmem:[%s1718 + $0x8] sm:$0xff]
          %1721 = vset.pattern.permute.xlu0 0
          %1722 = vperm.xlu0 %1721, %v1701
          %v1723 = vpop.permute.xlu0 %1722
          %v1725 = vmul.f32 %v1723, %v1719
          %1726 = vrot.lane.b32.xlu0 %v631, 88
          %v1727 = vpop.permute.xlu0 %1726
          %v1730 = vsel %vm1424, %v1709, 0
          %1732 = vmatprep.subr.mxu0 0.0
          %1733 = vmatpush1.msra.mxu0 %v1727
          %1734 = vmatprep.subr.mxu0 0.0
          %1735 = vmatpush1.msra.mxu0 0.0
          %1736 = vmatprep.subr.mxu0 0.0
          %1737 = vmatpush1.msra.mxu0 0.0
          %1738 = vmatprep.subr.mxu0 0.0
          %1739 = vmatpush1.msra.mxu0 0.0
          %1740 = vmatprep.subr.mxu0 0.0
          %1741 = vmatpush1.msra.mxu0 0.0
          %1742 = vmatprep.subr.mxu0 0.0
          %1743 = vmatpush1.msra.mxu0 0.0
          %1744 = vmatprep.subr.mxu0 0.0
          %1745 = vmatpush1.msra.mxu0 0.0
          %1746 = vmatprep.subr.mxu0 0.0
          %1747 = vmatpush1.msra.mxu0 0.0
          %1748 = vmatprep.subr.mxu0 0.0
          %1749 = vmatpush1.msra.mxu0 0.0
          %1750 = vmatprep.subr.mxu0 0.0
          %1751 = vmatpush1.msra.mxu0 0.0
          %1752 = vmatprep.subr.mxu0 0.0
          %1753 = vmatpush1.msra.mxu0 0.0
          %1754 = vmatprep.subr.mxu0 0.0
          %1755 = vmatpush1.msra.mxu0 0.0
          %1756 = vmatprep.subr.mxu0 0.0
          %1757 = vmatpush1.msra.mxu0 0.0
          %1758 = vmatprep.subr.mxu0 0.0
          %1759 = vmatpush1.msra.mxu0 0.0
          %1760 = vmatprep.subr.mxu0 0.0
          %1761 = vmatpush1.msra.mxu0 0.0
          %1762 = vmatprep.subr.mxu0 0.0
          %1763 = vmatpush1.msra.mxu0 0.0
          %1764 = vmatprep.subr.mxu0 0.0
          %1765 = vmatpush1.msra.mxu0 0.0
          %1766 = vmatprep.subr.mxu0 0.0
          %1767 = vmatpush1.msra.mxu0 0.0
          %1768 = vmatprep.subr.mxu0 0.0
          %1769 = vmatpush1.msra.mxu0 0.0
          %1770 = vmatprep.subr.mxu0 0.0
          %1771 = vmatpush1.msra.mxu0 0.0
          %1772 = vmatprep.subr.mxu0 0.0
          %1773 = vmatpush1.msra.mxu0 0.0
          %1774 = vmatprep.subr.mxu0 0.0
          %1775 = vmatpush1.msra.mxu0 0.0
          %1776 = vmatprep.subr.mxu0 0.0
          %1777 = vmatpush1.msra.mxu0 0.0
          %1778 = vmatprep.subr.mxu0 0.0
          %1779 = vmatpush1.msra.mxu0 0.0
          %1780 = vmatprep.subr.mxu0 0.0
          %1781 = vmatpush1.msra.mxu0 0.0
          %1782 = vmatprep.subr.mxu0 0.0
          %1783 = vmatpush1.msra.mxu0 0.0
          %1784 = vmatprep.subr.mxu0 0.0
          %1785 = vmatpush1.msra.mxu0 0.0
          %1786 = vmatprep.subr.mxu0 0.0
          %1787 = vmatpush1.msra.mxu0 0.0
          %1788 = vmatprep.subr.mxu0 0.0
          %1789 = vmatpush1.msra.mxu0 0.0
          %1790 = vmatprep.subr.mxu0 0.0
          %1791 = vmatpush1.msra.mxu0 0.0
          %1792 = vmatprep.subr.mxu0 0.0
          %1793 = vmatpush1.msra.mxu0 0.0
          %1794 = vmatprep.subr.mxu0 0.0
          %1795 = vmatpush1.msra.mxu0 0.0
          %1796 = vmatprep.mubr.f32.mxu0 0.0
          %1797 = vmatmul.mubr.f32.gmra.mrb[0].mxu0 %v1730
          %v1798 = vpop.f32.mrb[0].mxu0
          %v1799 = vadd.f32 0.0, %v1798
          %v1800 = vpop.f32.mrb[0].mxu0
          %1801 = vdwg.mxu0
          %v1802 = vadd.f32 %v1725, %v1799
          %1803 = vst.msk [vmem:[%s1718 + $0x8] sm:$0xff] %vm1424, %v1802
          %1804 = vst.msk [vmem:[%s1693 + $0x8] sm:$0xff] %vm1525, %v1698
          %1805 = vrot.lane.b32.xlu0 %v1423, 112
          %v1806 = vpop.permute.xlu0 %1805
          %1807 = vrot.lane.b32.xlu0 %v631, 112
          %v1808 = vpop.permute.xlu0 %1807
          %v1809 = vsel %vm1424, %v1806, 0
          %v1811 = vsel %vm1424, %v1808, 0
          %1813 = vmatprep.subr.mxu0 0.0
          %1814 = vmatpush1.xpose.msra.mxu0 %v1811
          %1815 = vmatprep.subr.mxu0 0.0
          %1816 = vmatpush1.xpose.msra.mxu0 0.0
          %1817 = vmatprep.subr.mxu0 0.0
          %1818 = vmatpush1.xpose.msra.mxu0 0.0
          %1819 = vmatprep.subr.mxu0 0.0
          %1820 = vmatpush1.xpose.msra.mxu0 0.0
          %1821 = vmatprep.subr.mxu0 0.0
          %1822 = vmatpush1.xpose.msra.mxu0 0.0
          %1823 = vmatprep.subr.mxu0 0.0
          %1824 = vmatpush1.xpose.msra.mxu0 0.0
          %1825 = vmatprep.subr.mxu0 0.0
          %1826 = vmatpush1.xpose.msra.mxu0 0.0
          %1827 = vmatprep.subr.mxu0 0.0
          %1828 = vmatpush1.xpose.msra.mxu0 0.0
          %1829 = vmatprep.subr.mxu0 0.0
          %1830 = vmatpush1.xpose.msra.mxu0 0.0
          %1831 = vmatprep.subr.mxu0 0.0
          %1832 = vmatpush1.xpose.msra.mxu0 0.0
          %1833 = vmatprep.subr.mxu0 0.0
          %1834 = vmatpush1.xpose.msra.mxu0 0.0
          %1835 = vmatprep.subr.mxu0 0.0
          %1836 = vmatpush1.xpose.msra.mxu0 0.0
          %1837 = vmatprep.subr.mxu0 0.0
          %1838 = vmatpush1.xpose.msra.mxu0 0.0
          %1839 = vmatprep.subr.mxu0 0.0
          %1840 = vmatpush1.xpose.msra.mxu0 0.0
          %1841 = vmatprep.subr.mxu0 0.0
          %1842 = vmatpush1.xpose.msra.mxu0 0.0
          %1843 = vmatprep.subr.mxu0 0.0
          %1844 = vmatpush1.xpose.msra.mxu0 0.0
          %1845 = vmatprep.subr.mxu0 0.0
          %1846 = vmatpush1.xpose.msra.mxu0 0.0
          %1847 = vmatprep.subr.mxu0 0.0
          %1848 = vmatpush1.xpose.msra.mxu0 0.0
          %1849 = vmatprep.subr.mxu0 0.0
          %1850 = vmatpush1.xpose.msra.mxu0 0.0
          %1851 = vmatprep.subr.mxu0 0.0
          %1852 = vmatpush1.xpose.msra.mxu0 0.0
          %1853 = vmatprep.subr.mxu0 0.0
          %1854 = vmatpush1.xpose.msra.mxu0 0.0
          %1855 = vmatprep.subr.mxu0 0.0
          %1856 = vmatpush1.xpose.msra.mxu0 0.0
          %1857 = vmatprep.subr.mxu0 0.0
          %1858 = vmatpush1.xpose.msra.mxu0 0.0
          %1859 = vmatprep.subr.mxu0 0.0
          %1860 = vmatpush1.xpose.msra.mxu0 0.0
          %1861 = vmatprep.subr.mxu0 0.0
          %1862 = vmatpush1.xpose.msra.mxu0 0.0
          %1863 = vmatprep.subr.mxu0 0.0
          %1864 = vmatpush1.xpose.msra.mxu0 0.0
          %1865 = vmatprep.subr.mxu0 0.0
          %1866 = vmatpush1.xpose.msra.mxu0 0.0
          %1867 = vmatprep.subr.mxu0 0.0
          %1868 = vmatpush1.xpose.msra.mxu0 0.0
          %1869 = vmatprep.subr.mxu0 0.0
          %1870 = vmatpush1.xpose.msra.mxu0 0.0
          %1871 = vmatprep.subr.mxu0 0.0
          %1872 = vmatpush1.xpose.msra.mxu0 0.0
          %1873 = vmatprep.subr.mxu0 0.0
          %1874 = vmatpush1.xpose.msra.mxu0 0.0
          %1875 = vmatprep.subr.mxu0 0.0
          %1876 = vmatpush1.xpose.msra.mxu0 0.0
          %1877 = vmatprep.mubr.f32.mxu0 0.0
          %1878 = vmatmul.mubr.f32.gmra.mrb[0].mxu0 %v1809
          %v1879 = vpop.f32.mrb[0].mxu0
          %v1880 = vadd.f32 0.0, %v1879
          %v1881 = vpop.f32.mrb[0].mxu0
          %1882 = vdwg.mxu0
          %v1883 = vmul.f32 %v1880, 0.35355338
          %v1884 = vsel %vm1422, %v1883, -1e+30
          %s1885 = scalar_lea.vmem [#allocation3], 32
          %v1886 = vld [vmem:[%s1885 + $0x8] sm:$0xff]
          %v1887 = vsel %vm1424, %v1884, -inf
          %1888 = vmax.xlane.f32.xlu0 %v1887
          %v1889 = vpop.xlane.xlu0 %1888
          %v1890 = vmax.f32 %v1886, %v1889
          %v1891 = vsub.f32 %v1886, %v1890
          %v1892 = vmul.f32 %v1891, 1.442695
          %v1893 = vpow.pop %v1892
          %1895 = vset.pattern.permute.xlu0 0
          %1896 = vperm.xlu0 %1895, %v1890
          %v1897 = vpop.permute.xlu0 %1896
          %v1899 = vsub.f32 %v1884, %v1897
          %v1900 = vmul.f32 %v1899, 1.442695
          %v1901 = vpow.pop %v1900
          %s1902 = scalar_lea.vmem [#allocation4], 32
          %v1903 = vld [vmem:[%s1902 + $0x8] sm:$0xff]
          %v1904 = vmul.f32 %v1893, %v1903
          %v1905 = vsel %vm1424, %v1901, 0.0
          %1906 = vadd.xlane.f32.xlu0 %v1905
          %v1907 = vpop.xlane.xlu0 %1906
          %v1908 = vadd.f32 %v1904, %v1907
          %1909 = vst.msk [vmem:[%s1902 + $0x8] sm:$0xff] %vm1525, %v1908
          %s1910 = scalar_lea.vmem [#allocation5], 32
          %v1911 = vld [vmem:[%s1910 + $0x8] sm:$0xff]
          %1913 = vset.pattern.permute.xlu0 0
          %1914 = vperm.xlu0 %1913, %v1893
          %v1915 = vpop.permute.xlu0 %1914
          %v1917 = vmul.f32 %v1915, %v1911
          %1918 = vrot.lane.b32.xlu0 %v631, 80
          %v1919 = vpop.permute.xlu0 %1918
          %v1922 = vsel %vm1424, %v1901, 0
          %1924 = vmatprep.subr.mxu0 0.0
          %1925 = vmatpush1.msra.mxu0 %v1919
          %1926 = vmatprep.subr.mxu0 0.0
          %1927 = vmatpush1.msra.mxu0 0.0
          %1928 = vmatprep.subr.mxu0 0.0
          %1929 = vmatpush1.msra.mxu0 0.0
          %1930 = vmatprep.subr.mxu0 0.0
          %1931 = vmatpush1.msra.mxu0 0.0
          %1932 = vmatprep.subr.mxu0 0.0
          %1933 = vmatpush1.msra.mxu0 0.0
          %1934 = vmatprep.subr.mxu0 0.0
          %1935 = vmatpush1.msra.mxu0 0.0
          %1936 = vmatprep.subr.mxu0 0.0
          %1937 = vmatpush1.msra.mxu0 0.0
          %1938 = vmatprep.subr.mxu0 0.0
          %1939 = vmatpush1.msra.mxu0 0.0
          %1940 = vmatprep.subr.mxu0 0.0
          %1941 = vmatpush1.msra.mxu0 0.0
          %1942 = vmatprep.subr.mxu0 0.0
          %1943 = vmatpush1.msra.mxu0 0.0
          %1944 = vmatprep.subr.mxu0 0.0
          %1945 = vmatpush1.msra.mxu0 0.0
          %1946 = vmatprep.subr.mxu0 0.0
          %1947 = vmatpush1.msra.mxu0 0.0
          %1948 = vmatprep.subr.mxu0 0.0
          %1949 = vmatpush1.msra.mxu0 0.0
          %1950 = vmatprep.subr.mxu0 0.0
          %1951 = vmatpush1.msra.mxu0 0.0
          %1952 = vmatprep.subr.mxu0 0.0
          %1953 = vmatpush1.msra.mxu0 0.0
          %1954 = vmatprep.subr.mxu0 0.0
          %1955 = vmatpush1.msra.mxu0 0.0
          %1956 = vmatprep.subr.mxu0 0.0
          %1957 = vmatpush1.msra.mxu0 0.0
          %1958 = vmatprep.subr.mxu0 0.0
          %1959 = vmatpush1.msra.mxu0 0.0
          %1960 = vmatprep.subr.mxu0 0.0
          %1961 = vmatpush1.msra.mxu0 0.0
          %1962 = vmatprep.subr.mxu0 0.0
          %1963 = vmatpush1.msra.mxu0 0.0
          %1964 = vmatprep.subr.mxu0 0.0
          %1965 = vmatpush1.msra.mxu0 0.0
          %1966 = vmatprep.subr.mxu0 0.0
          %1967 = vmatpush1.msra.mxu0 0.0
          %1968 = vmatprep.subr.mxu0 0.0
          %1969 = vmatpush1.msra.mxu0 0.0
          %1970 = vmatprep.subr.mxu0 0.0
          %1971 = vmatpush1.msra.mxu0 0.0
          %1972 = vmatprep.subr.mxu0 0.0
          %1973 = vmatpush1.msra.mxu0 0.0
          %1974 = vmatprep.subr.mxu0 0.0
          %1975 = vmatpush1.msra.mxu0 0.0
          %1976 = vmatprep.subr.mxu0 0.0
          %1977 = vmatpush1.msra.mxu0 0.0
          %1978 = vmatprep.subr.mxu0 0.0
          %1979 = vmatpush1.msra.mxu0 0.0
          %1980 = vmatprep.subr.mxu0 0.0
          %1981 = vmatpush1.msra.mxu0 0.0
          %1982 = vmatprep.subr.mxu0 0.0
          %1983 = vmatpush1.msra.mxu0 0.0
          %1984 = vmatprep.subr.mxu0 0.0
          %1985 = vmatpush1.msra.mxu0 0.0
          %1986 = vmatprep.subr.mxu0 0.0
          %1987 = vmatpush1.msra.mxu0 0.0
          %1988 = vmatprep.mubr.f32.mxu0 0.0
          %1989 = vmatmul.mubr.f32.gmra.mrb[0].mxu0 %v1922
          %v1990 = vpop.f32.mrb[0].mxu0
          %v1991 = vadd.f32 0.0, %v1990
          %v1992 = vpop.f32.mrb[0].mxu0
          %1993 = vdwg.mxu0
          %v1994 = vadd.f32 %v1917, %v1991
          %1995 = vst.msk [vmem:[%s1910 + $0x8] sm:$0xff] %vm1424, %v1994
          %1996 = vst.msk [vmem:[%s1885 + $0x8] sm:$0xff] %vm1525, %v1890
          %1997 = vrot.lane.b32.xlu0 %v1423, 104
          %v1998 = vpop.permute.xlu0 %1997
          %1999 = vrot.lane.b32.xlu0 %v631, 104
          %v2000 = vpop.permute.xlu0 %1999
          %v2001 = vsel %vm1424, %v1998, 0
          %v2003 = vsel %vm1424, %v2000, 0
          %2005 = vmatprep.subr.mxu0 0.0
          %2006 = vmatpush1.xpose.msra.mxu0 %v2003
          %2007 = vmatprep.subr.mxu0 0.0
          %2008 = vmatpush1.xpose.msra.mxu0 0.0
          %2009 = vmatprep.subr.mxu0 0.0
          %2010 = vmatpush1.xpose.msra.mxu0 0.0
          %2011 = vmatprep.subr.mxu0 0.0
          %2012 = vmatpush1.xpose.msra.mxu0 0.0
          %2013 = vmatprep.subr.mxu0 0.0
          %2014 = vmatpush1.xpose.msra.mxu0 0.0
          %2015 = vmatprep.subr.mxu0 0.0
          %2016 = vmatpush1.xpose.msra.mxu0 0.0
          %2017 = vmatprep.subr.mxu0 0.0
          %2018 = vmatpush1.xpose.msra.mxu0 0.0
          %2019 = vmatprep.subr.mxu0 0.0
          %2020 = vmatpush1.xpose.msra.mxu0 0.0
          %2021 = vmatprep.subr.mxu0 0.0
          %2022 = vmatpush1.xpose.msra.mxu0 0.0
          %2023 = vmatprep.subr.mxu0 0.0
          %2024 = vmatpush1.xpose.msra.mxu0 0.0
          %2025 = vmatprep.subr.mxu0 0.0
          %2026 = vmatpush1.xpose.msra.mxu0 0.0
          %2027 = vmatprep.subr.mxu0 0.0
          %2028 = vmatpush1.xpose.msra.mxu0 0.0
          %2029 = vmatprep.subr.mxu0 0.0
          %2030 = vmatpush1.xpose.msra.mxu0 0.0
          %2031 = vmatprep.subr.mxu0 0.0
          %2032 = vmatpush1.xpose.msra.mxu0 0.0
          %2033 = vmatprep.subr.mxu0 0.0
          %2034 = vmatpush1.xpose.msra.mxu0 0.0
          %2035 = vmatprep.subr.mxu0 0.0
          %2036 = vmatpush1.xpose.msra.mxu0 0.0
          %2037 = vmatprep.subr.mxu0 0.0
          %2038 = vmatpush1.xpose.msra.mxu0 0.0
          %2039 = vmatprep.subr.mxu0 0.0
          %2040 = vmatpush1.xpose.msra.mxu0 0.0
          %2041 = vmatprep.subr.mxu0 0.0
          %2042 = vmatpush1.xpose.msra.mxu0 0.0
          %2043 = vmatprep.subr.mxu0 0.0
          %2044 = vmatpush1.xpose.msra.mxu0 0.0
          %2045 = vmatprep.subr.mxu0 0.0
          %2046 = vmatpush1.xpose.msra.mxu0 0.0
          %2047 = vmatprep.subr.mxu0 0.0
          %2048 = vmatpush1.xpose.msra.mxu0 0.0
          %2049 = vmatprep.subr.mxu0 0.0
          %2050 = vmatpush1.xpose.msra.mxu0 0.0
          %2051 = vmatprep.subr.mxu0 0.0
          %2052 = vmatpush1.xpose.msra.mxu0 0.0
          %2053 = vmatprep.subr.mxu0 0.0
          %2054 = vmatpush1.xpose.msra.mxu0 0.0
          %2055 = vmatprep.subr.mxu0 0.0
          %2056 = vmatpush1.xpose.msra.mxu0 0.0
          %2057 = vmatprep.subr.mxu0 0.0
          %2058 = vmatpush1.xpose.msra.mxu0 0.0
          %2059 = vmatprep.subr.mxu0 0.0
          %2060 = vmatpush1.xpose.msra.mxu0 0.0
          %2061 = vmatprep.subr.mxu0 0.0
          %2062 = vmatpush1.xpose.msra.mxu0 0.0
          %2063 = vmatprep.subr.mxu0 0.0
          %2064 = vmatpush1.xpose.msra.mxu0 0.0
          %2065 = vmatprep.subr.mxu0 0.0
          %2066 = vmatpush1.xpose.msra.mxu0 0.0
          %2067 = vmatprep.subr.mxu0 0.0
          %2068 = vmatpush1.xpose.msra.mxu0 0.0
          %2069 = vmatprep.mubr.f32.mxu0 0.0
          %2070 = vmatmul.mubr.f32.gmra.mrb[0].mxu0 %v2001
          %v2071 = vpop.f32.mrb[0].mxu0
          %v2072 = vadd.f32 0.0, %v2071
          %v2073 = vpop.f32.mrb[0].mxu0
          %2074 = vdwg.mxu0
          %v2075 = vmul.f32 %v2072, 0.35355338
          %v2076 = vsel %vm1422, %v2075, -1e+30
          %s2077 = scalar_lea.vmem [#allocation3], 48
          %v2078 = vld [vmem:[%s2077 + $0x8] sm:$0xff]
          %v2079 = vsel %vm1424, %v2076, -inf
          %2080 = vmax.xlane.f32.xlu0 %v2079
          %v2081 = vpop.xlane.xlu0 %2080
          %v2082 = vmax.f32 %v2078, %v2081
          %v2083 = vsub.f32 %v2078, %v2082
          %v2084 = vmul.f32 %v2083, 1.442695
          %v2085 = vpow.pop %v2084
          %2087 = vset.pattern.permute.xlu0 0
          %2088 = vperm.xlu0 %2087, %v2082
          %v2089 = vpop.permute.xlu0 %2088
          %v2091 = vsub.f32 %v2076, %v2089
          %v2092 = vmul.f32 %v2091, 1.442695
          %v2093 = vpow.pop %v2092
          %s2094 = scalar_lea.vmem [#allocation4], 48
          %v2095 = vld [vmem:[%s2094 + $0x8] sm:$0xff]
          %v2096 = vmul.f32 %v2085, %v2095
          %v2097 = vsel %vm1424, %v2093, 0.0
          %2098 = vadd.xlane.f32.xlu0 %v2097
          %v2099 = vpop.xlane.xlu0 %2098
          %v2100 = vadd.f32 %v2096, %v2099
          %2101 = vst.msk [vmem:[%s2094 + $0x8] sm:$0xff] %vm1525, %v2100
          %s2102 = scalar_lea.vmem [#allocation5], 48
          %v2103 = vld [vmem:[%s2102 + $0x8] sm:$0xff]
          %2105 = vset.pattern.permute.xlu0 0
          %2106 = vperm.xlu0 %2105, %v2085
          %v2107 = vpop.permute.xlu0 %2106
          %v2109 = vmul.f32 %v2107, %v2103
          %2110 = vrot.lane.b32.xlu0 %v631, 72
          %v2111 = vpop.permute.xlu0 %2110
          %v2114 = vsel %vm1424, %v2093, 0
          %2116 = vmatprep.subr.mxu0 0.0
          %2117 = vmatpush1.msra.mxu0 %v2111
          %2118 = vmatprep.subr.mxu0 0.0
          %2119 = vmatpush1.msra.mxu0 0.0
          %2120 = vmatprep.subr.mxu0 0.0
          %2121 = vmatpush1.msra.mxu0 0.0
          %2122 = vmatprep.subr.mxu0 0.0
          %2123 = vmatpush1.msra.mxu0 0.0
          %2124 = vmatprep.subr.mxu0 0.0
          %2125 = vmatpush1.msra.mxu0 0.0
          %2126 = vmatprep.subr.mxu0 0.0
          %2127 = vmatpush1.msra.mxu0 0.0
          %2128 = vmatprep.subr.mxu0 0.0
          %2129 = vmatpush1.msra.mxu0 0.0
          %2130 = vmatprep.subr.mxu0 0.0
          %2131 = vmatpush1.msra.mxu0 0.0
          %2132 = vmatprep.subr.mxu0 0.0
          %2133 = vmatpush1.msra.mxu0 0.0
          %2134 = vmatprep.subr.mxu0 0.0
          %2135 = vmatpush1.msra.mxu0 0.0
          %2136 = vmatprep.subr.mxu0 0.0
          %2137 = vmatpush1.msra.mxu0 0.0
          %2138 = vmatprep.subr.mxu0 0.0
          %2139 = vmatpush1.msra.mxu0 0.0
          %2140 = vmatprep.subr.mxu0 0.0
          %2141 = vmatpush1.msra.mxu0 0.0
          %2142 = vmatprep.subr.mxu0 0.0
          %2143 = vmatpush1.msra.mxu0 0.0
          %2144 = vmatprep.subr.mxu0 0.0
          %2145 = vmatpush1.msra.mxu0 0.0
          %2146 = vmatprep.subr.mxu0 0.0
          %2147 = vmatpush1.msra.mxu0 0.0
          %2148 = vmatprep.subr.mxu0 0.0
          %2149 = vmatpush1.msra.mxu0 0.0
          %2150 = vmatprep.subr.mxu0 0.0
          %2151 = vmatpush1.msra.mxu0 0.0
          %2152 = vmatprep.subr.mxu0 0.0
          %2153 = vmatpush1.msra.mxu0 0.0
          %2154 = vmatprep.subr.mxu0 0.0
          %2155 = vmatpush1.msra.mxu0 0.0
          %2156 = vmatprep.subr.mxu0 0.0
          %2157 = vmatpush1.msra.mxu0 0.0
          %2158 = vmatprep.subr.mxu0 0.0
          %2159 = vmatpush1.msra.mxu0 0.0
          %2160 = vmatprep.subr.mxu0 0.0
          %2161 = vmatpush1.msra.mxu0 0.0
          %2162 = vmatprep.subr.mxu0 0.0
          %2163 = vmatpush1.msra.mxu0 0.0
          %2164 = vmatprep.subr.mxu0 0.0
          %2165 = vmatpush1.msra.mxu0 0.0
          %2166 = vmatprep.subr.mxu0 0.0
          %2167 = vmatpush1.msra.mxu0 0.0
          %2168 = vmatprep.subr.mxu0 0.0
          %2169 = vmatpush1.msra.mxu0 0.0
          %2170 = vmatprep.subr.mxu0 0.0
          %2171 = vmatpush1.msra.mxu0 0.0
          %2172 = vmatprep.subr.mxu0 0.0
          %2173 = vmatpush1.msra.mxu0 0.0
          %2174 = vmatprep.subr.mxu0 0.0
          %2175 = vmatpush1.msra.mxu0 0.0
          %2176 = vmatprep.subr.mxu0 0.0
          %2177 = vmatpush1.msra.mxu0 0.0
          %2178 = vmatprep.subr.mxu0 0.0
          %2179 = vmatpush1.msra.mxu0 0.0
          %2180 = vmatprep.mubr.f32.mxu0 0.0
          %2181 = vmatmul.mubr.f32.gmra.mrb[0].mxu0 %v2114
          %v2182 = vpop.f32.mrb[0].mxu0
          %v2183 = vadd.f32 0.0, %v2182
          %v2184 = vpop.f32.mrb[0].mxu0
          %2185 = vdwg.mxu0
          %v2186 = vadd.f32 %v2109, %v2183
          %2187 = vst.msk [vmem:[%s2102 + $0x8] sm:$0xff] %vm1424, %v2186
          %2188 = vst.msk [vmem:[%s2077 + $0x8] sm:$0xff] %vm1525, %v2082
        $region84: #{tpu_custom_call.1} parent=51 // pred_fallthru
          _
        %p2189 = scmp.eq.s32.totalorder %s34, 1
        // Predicated region
        $region85: #{tpu_custom_call.1} parent=51 // pred_check
          %p2190 = pneg %p2189
        $region86: #{tpu_custom_call.1} parent=51 // pred_check_branch
          %2192 = sbr.rel (%p2190) target = $region88
        $region87: #{tpu_custom_call.1} parent=51 // pred_region
          %v2193 = vld [vmem:[#allocation5] sm:$0xff]
          %v2194 = vld [vmem:[#allocation5 + $0x8] sm:$0xff]
          %v2195 = vld [vmem:[#allocation4] sm:$0xff]
          %v2196 = vld [vmem:[#allocation4 + $0x8] sm:$0xff]
          %v2197 = vrcp.pop %v2195
          %v2198 = vrcp.pop %v2196
          %2200 = vset.pattern.permute.xlu0 0
          %2201 = vperm.xlu0 %2200, %v2197
          %v2202 = vpop.permute.xlu0 %2201
          %2205 = vset.pattern.permute.xlu0 0
          %2206 = vperm.xlu0 %2205, %v2198
          %v2207 = vpop.permute.xlu0 %2206
          %v2209 = vmul.f32 %v2193, %v2202
          %v2210 = vmul.f32 %v2194, %v2207
          %s2211 = scalar_lea.vmem [#allocation5], 16
          %v2212 = vld [vmem:[%s2211] sm:$0xff]
          %v2213 = vld [vmem:[%s2211 + $0x8] sm:$0xff]
          %s2214 = scalar_lea.vmem [#allocation4], 16
          %v2215 = vld [vmem:[%s2214] sm:$0xff]
          %v2216 = vld [vmem:[%s2214 + $0x8] sm:$0xff]
          %v2217 = vrcp.pop %v2215
          %v2218 = vrcp.pop %v2216
          %2220 = vset.pattern.permute.xlu0 0
          %2221 = vperm.xlu0 %2220, %v2217
          %v2222 = vpop.permute.xlu0 %2221
          %2225 = vset.pattern.permute.xlu0 0
          %2226 = vperm.xlu0 %2225, %v2218
          %v2227 = vpop.permute.xlu0 %2226
          %v2229 = vmul.f32 %v2212, %v2222
          %v2230 = vmul.f32 %v2213, %v2227
          %s2231 = scalar_lea.vmem [#allocation5], 32
          %v2232 = vld [vmem:[%s2231] sm:$0xff]
          %v2233 = vld [vmem:[%s2231 + $0x8] sm:$0xff]
          %s2234 = scalar_lea.vmem [#allocation4], 32
          %v2235 = vld [vmem:[%s2234] sm:$0xff]
          %v2236 = vld [vmem:[%s2234 + $0x8] sm:$0xff]
          %v2237 = vrcp.pop %v2235
          %v2238 = vrcp.pop %v2236
          %2240 = vset.pattern.permute.xlu0 0
          %2241 = vperm.xlu0 %2240, %v2237
          %v2242 = vpop.permute.xlu0 %2241
          %2245 = vset.pattern.permute.xlu0 0
          %2246 = vperm.xlu0 %2245, %v2238
          %v2247 = vpop.permute.xlu0 %2246
          %v2249 = vmul.f32 %v2232, %v2242
          %v2250 = vmul.f32 %v2233, %v2247
          %s2251 = scalar_lea.vmem [#allocation5], 48
          %v2252 = vld [vmem:[%s2251] sm:$0xff]
          %v2253 = vld [vmem:[%s2251 + $0x8] sm:$0xff]
          %s2254 = scalar_lea.vmem [#allocation4], 48
          %v2255 = vld [vmem:[%s2254] sm:$0xff]
          %v2256 = vld [vmem:[%s2254 + $0x8] sm:$0xff]
          %v2257 = vrcp.pop %v2255
          %v2258 = vrcp.pop %v2256
          %2260 = vset.pattern.permute.xlu0 0
          %2261 = vperm.xlu0 %2260, %v2257
          %v2262 = vpop.permute.xlu0 %2261
          %2265 = vset.pattern.permute.xlu0 0
          %2266 = vperm.xlu0 %2265, %v2258
          %v2267 = vpop.permute.xlu0 %2266
          %v2269 = vmul.f32 %v2252, %v2262
          %v2270 = vmul.f32 %v2253, %v2267
          %2273 = vrot.lane.b32.xlu0 %v2229, 8
          %v2274 = vpop.permute.xlu0 %2273
          %2275 = vrot.lane.b32.xlu0 %v2230, 8
          %v2276 = vpop.permute.xlu0 %2275
          %2281 = vrot.lane.b32.xlu0 %v2249, 16
          %v2282 = vpop.permute.xlu0 %2281
          %2283 = vrot.lane.b32.xlu0 %v2250, 16
          %v2284 = vpop.permute.xlu0 %2283
          %2289 = vrot.lane.b32.xlu0 %v2269, 24
          %v2290 = vpop.permute.xlu0 %2289
          %2291 = vrot.lane.b32.xlu0 %v2270, 24
          %v2292 = vpop.permute.xlu0 %2291
          %vm2295 = vcmask 64512
          %v2296 = vsel %vm2295, %v2209, %v2274
          %v2297 = vsel %vm2295, %v2210, %v2276
          %vm2298 = vcmask 130048
          %v2299 = vsel %vm2298, %v2296, %v2282
          %v2300 = vsel %vm2298, %v2297, %v2284
          %vm2301 = vcmask 195584
          %v2302 = vsel %vm2301, %v2299, %v2290
          %v2303 = vsel %vm2301, %v2300, %v2292
          %v2304 = vld [vmem:[#allocation14] sm:$0xff]
          %v2305 = vld [vmem:[#allocation14 + $0x8] sm:$0xff]
          %v2306 = vld [vmem:[#allocation14 + $0x10] sm:$0xff]
          %v2307 = vld [vmem:[#allocation14 + $0x18] sm:$0xff]
          %v2308 = vld [vmem:[%s7] sm:$0x1]
          %v2310 = vlaneseq
          %v2311 = vshrl.u32 %v2310, 7
          %v2312 = vsub.s32 0, %v2311
          %v2313 = vrot.slane %v2308, %v2312
          %v2316 = vsel %vm560, %v2302, 0
          %v2319 = vsel %vm560, %v2303, 0
          %2321 = vmatprep.subr.mxu0 0.0
          %2322 = vmatpush1.msra.mxu0 %v2304
          %2323 = vmatprep.subr.mxu0 0.0
          %2324 = vmatpush1.msra.mxu0 %v2305
          %2325 = vmatprep.subr.mxu0 0.0
          %2326 = vmatpush1.msra.mxu0 %v2306
          %2327 = vmatprep.subr.mxu0 0.0
          %2328 = vmatpush1.msra.mxu0 %v2307
          %2329 = vmatprep.subr.mxu0 0.0
          %2330 = vmatpush1.msra.mxu0 0.0
          %2331 = vmatprep.subr.mxu0 0.0
          %2332 = vmatpush1.msra.mxu0 0.0
          %2333 = vmatprep.subr.mxu0 0.0
          %2334 = vmatpush1.msra.mxu0 0.0
          %2335 = vmatprep.subr.mxu0 0.0
          %2336 = vmatpush1.msra.mxu0 0.0
          %2337 = vmatprep.subr.mxu0 0.0
          %2338 = vmatpush1.msra.mxu0 0.0
          %2339 = vmatprep.subr.mxu0 0.0
          %2340 = vmatpush1.msra.mxu0 0.0
          %2341 = vmatprep.subr.mxu0 0.0
          %2342 = vmatpush1.msra.mxu0 0.0
          %2343 = vmatprep.subr.mxu0 0.0
          %2344 = vmatpush1.msra.mxu0 0.0
          %2345 = vmatprep.subr.mxu0 0.0
          %2346 = vmatpush1.msra.mxu0 0.0
          %2347 = vmatprep.subr.mxu0 0.0
          %2348 = vmatpush1.msra.mxu0 0.0
          %2349 = vmatprep.subr.mxu0 0.0
          %2350 = vmatpush1.msra.mxu0 0.0
          %2351 = vmatprep.subr.mxu0 0.0
          %2352 = vmatpush1.msra.mxu0 0.0
          %2353 = vmatprep.subr.mxu0 0.0
          %2354 = vmatpush1.msra.mxu0 0.0
          %2355 = vmatprep.subr.mxu0 0.0
          %2356 = vmatpush1.msra.mxu0 0.0
          %2357 = vmatprep.subr.mxu0 0.0
          %2358 = vmatpush1.msra.mxu0 0.0
          %2359 = vmatprep.subr.mxu0 0.0
          %2360 = vmatpush1.msra.mxu0 0.0
          %2361 = vmatprep.subr.mxu0 0.0
          %2362 = vmatpush1.msra.mxu0 0.0
          %2363 = vmatprep.subr.mxu0 0.0
          %2364 = vmatpush1.msra.mxu0 0.0
          %2365 = vmatprep.subr.mxu0 0.0
          %2366 = vmatpush1.msra.mxu0 0.0
          %2367 = vmatprep.subr.mxu0 0.0
          %2368 = vmatpush1.msra.mxu0 0.0
          %2369 = vmatprep.subr.mxu0 0.0
          %2370 = vmatpush1.msra.mxu0 0.0
          %2371 = vmatprep.subr.mxu0 0.0
          %2372 = vmatpush1.msra.mxu0 0.0
          %2373 = vmatprep.subr.mxu0 0.0
          %2374 = vmatpush1.msra.mxu0 0.0
          %2375 = vmatprep.subr.mxu0 0.0
          %2376 = vmatpush1.msra.mxu0 0.0
          %2377 = vmatprep.subr.mxu0 0.0
          %2378 = vmatpush1.msra.mxu0 0.0
          %2379 = vmatprep.subr.mxu0 0.0
          %2380 = vmatpush1.msra.mxu0 0.0
          %2381 = vmatprep.subr.mxu0 0.0
          %2382 = vmatpush1.msra.mxu0 0.0
          %2383 = vmatprep.subr.mxu0 0.0
          %2384 = vmatpush1.msra.mxu0 0.0
          %2385 = vmatprep.mubr.f32.mxu0 0.0
          %2386 = vmatmul.mubr.f32.gmra.mrb[0].mxu0 %v2316
          %v2387 = vpop.f32.mrb[0].mxu0
          %v2388 = vadd.f32 %v2313, %v2387
          %v2389 = vpop.f32.mrb[0].mxu0
          %2390 = vmatprep.mubr.f32.mxu0 0.0
          %2391 = vmatmul.mubr.f32.gmra.mrb[0].mxu0 %v2319
          %v2392 = vpop.f32.mrb[0].mxu0
          %v2393 = vadd.f32 %v2313, %v2392
          %v2394 = vpop.f32.mrb[0].mxu0
          %2395 = vdwg.mxu0
          %2396 = vst.msk [vmem:[%s419] sm:$0xff] %vm560, %v2388
          %2397 = vst.msk [vmem:[%s419 + $0x8] sm:$0xff] %vm560, %v2393
        $region88: #{tpu_custom_call.1} parent=51 // pred_fallthru
          _
        %s2398 = sand.u32 %s229, 1
        %s2399 = scalar_lea.sflag [#allocation8], %s2398
        %s2400 = sand.u32 %s229, 1
        %s2401 = smul.addr %s2400, 16
        %s2402 = scalar_lea.vmem [#allocation15], %s2401
        // Predicated region
        $region89: #{tpu_custom_call.1} parent=51 // pred_check
          %p2403 = pneg %p239
        $region90: #{tpu_custom_call.1} parent=51 // pred_check_branch
          %2405 = sbr.rel (%p2403) target = $region92
        $region91: #{tpu_custom_call.1} parent=51 // pred_region
          %s2407 = ssub.s32 256, 256
          %2408 = vsyncadd %s2399, %s2407
          %s2409 = smul.addr %s33, 2
          %s2410 = smul.addr %s2409, 128
          %s2411 = scalar_lea.hbm %s8, %s2410
          %s2412 = sshll.u32 %s2402, 4
          %s2413 = int_to_ptr.vmem [resolvable:$true] %s2412
          %2418 = dma.vmem_to_hbm [thread:$0]  %s2413, 256, %s2411, %s2399, 128, 128, 8
        $region92: #{tpu_custom_call.1} parent=51 // pred_fallthru
          _
      $region52: #{tpu_custom_call.1} parent=5 // pred_fallthru
        _
      %p2419 = scmp.le.s32.totalorder 2, %s24
      // Predicated region
      $region93: #{tpu_custom_call.1} parent=5 // pred_check
        %p2420 = pneg %p2419
      $region94: #{tpu_custom_call.1} parent=5 // pred_check_branch
        %2422 = sbr.rel (%p2420) target = $region96
      $region95: #{tpu_custom_call.1} parent=5 // pred_region
        %s2423 = ssub.s32 %s24, 2
        // Predicated region
        $region97: #{tpu_custom_call.1} parent=95 // pred_check
          %p2424 = pneg %p245
        $region98: #{tpu_custom_call.1} parent=95 // pred_check_branch
          %2426 = sbr.rel (%p2424) target = $region100
        $region99: #{tpu_custom_call.1} parent=95 // pred_region
          %s2427 = sand.u32 %s230, 1
          %s2428 = scalar_lea.sflag [#allocation8], %s2427
          %s2429 = sand.u32 %s230, 1
          %s2430 = smul.addr %s2429, 16
          %s2431 = scalar_lea.vmem [#allocation15], %s2430
          %2432 = dma.done %s2428, 256
        $region100: #{tpu_custom_call.1} parent=95 // pred_fallthru
          _
      $region96: #{tpu_custom_call.1} parent=5 // pred_fallthru
        _
    $region6: #{tpu_custom_call.1} parent=1 // loop_footer
      %s28 = sadd.s32 1, %s24
    $region7: #{tpu_custom_call.1} parent=1 // loop_footer_branch
      %23 = sbr.rel target = $region3
    $region8: #{tpu_custom_call.1} parent=1 // loop_exit
      _
    %2433 = vsyncpa [#allocation7], 1
    %s2434 = scalar_lea.sflag [#allocation7], 1
    %2435 = vsyncpa %s2434, 1
    %2436 = vsyncpa [#allocation10], 1
    %s2437 = scalar_lea.sflag [#allocation10], 1
    %2438 = vsyncpa %s2437, 1
    %2439 = vsyncpa [#allocation13], 1
    %2440 = vsyncpa [#allocation8], 1
    %s2441 = scalar_lea.sflag [#allocation8], 1
    %2442 = vsyncpa %s2441, 1

</llo_original>
